<compile_context>
chip_gen: v7x
topology: tpu7x:2x2x1
jax: 0.10.0
libtpu: 0.0.40
codegen_flags: <defaults>
</compile_context>

<pallas_src>
import functools

import jax
import jax.numpy as jnp
from jax.experimental import pallas as pl
from jax.experimental.pallas import tpu as pltpu

LANE = 128  # TPU lane width; output channels are padded to a multiple of this.


def _round_up(x, m):
    return ((x + m - 1) // m) * m


# ---------------------------------------------------------------------------
# Pallas kernel: fused NN-upsample-by-2 + 3x3 conv + bias.
# One (image, row-tile, output-channel-tile) block per grid step.
# ---------------------------------------------------------------------------
def _upsample_conv_kernel(xp_ref, wc_ref, b_ref, o_ref, *, h_axis, h_tile):
    # xp_ref: (1, H+2, W+2, C)    bf16  zero-padded input image (ORIGINAL resolution)
    # wc_ref: (4, 4C, OT)         bf16  folded weights, index = parity (rho*2+sig)
    # b_ref : (1, OT)             f32   bias slab
    # o_ref : (1, 4, h_tile*W, OT)       four parity planes for this row tile
    W = xp_ref.shape[2] - 2
    C = xp_ref.shape[3]

    h = pl.program_id(h_axis)
    row0 = pl.multiple_of(h * h_tile, h_tile)

    bias = b_ref[...]  # (1, OT) f32 -- broadcasts over rows in the epilogue

    # Each output parity (rho, sig) is an exact 2x2 conv over the padded
    # original image.  Fold the 4 taps into the contraction dim -> 1 matmul.
    for rho in range(2):
        for sig in range(2):
            parts = []
            for ta in range(2):
                for tb in range(2):
                    dc = sig + tb
                    t = xp_ref[0, pl.ds(row0 + rho + ta, h_tile), dc:dc + W, :]
                    parts.append(t.reshape(h_tile * W, C))      # (hT*W, C) bf16
            lhs = jnp.concatenate(parts, axis=-1)               # (hT*W, 4C) bf16
            acc = jnp.dot(lhs, wc_ref[rho * 2 + sig],
                          preferred_element_type=jnp.float32)   # (hT*W, OT) f32
            o_ref[0, rho * 2 + sig] = (acc + bias).astype(o_ref.dtype)


# ---------------------------------------------------------------------------
# Weight folding: 3x3 kernel -> four parity-specific 2x2 kernels.
# ---------------------------------------------------------------------------
def _fold_taps(w3):
    """(3, ...) -> (2, 2, ...): out[parity, tap] sums the 3x3 taps that the
    nearest-neighbour 2x upsample collapses onto that 2x2 tap."""
    return jnp.stack([
        jnp.stack([w3[0], w3[1] + w3[2]], axis=0),   # even parity: taps {0}, {1,2}
        jnp.stack([w3[0] + w3[1], w3[2]], axis=0),   # odd  parity: taps {0,1}, {2}
    ], axis=0)


# ---------------------------------------------------------------------------
# Trace-time tiling heuristics (generation aware, all plain Python).
# ---------------------------------------------------------------------------
def _device_kind():
    try:
        return jax.devices()[0].device_kind.lower()
    except Exception:
        return ""


def _pick_o_tile(opad128):
    kind = _device_kind()
    wide_mxu = ("v6" in kind) or ("v7" in kind)          # 256-wide MXU
    if wide_mxu and opad128 >= 256 and opad128 % 256 == 0:
        return 256
    return 128                                           # v5e (4x128x128) & default


def _vmem_limit_bytes():
    try:
        cap = pltpu.get_tpu_info().vmem_capacity_bytes
    except Exception:
        cap = 64 * 1024 * 1024                           # conservative fallback
    return int(cap * 0.7)


def _vmem_estimate(H, W, C, h_tile, o_tile, store_bytes):
    img = 2 * (H + 2) * (W + 2) * C * 2                  # bf16 image, double-buffered
    wts = 2 * 4 * 4 * C * o_tile * 2                     # bf16 folded weights, double-buffered
    outb = 2 * 4 * h_tile * W * o_tile * store_bytes     # output block, double-buffered
    lhs = 2 * h_tile * W * 4 * C * 2                     # concatenated LHS (+ slack)
    acc = 2 * h_tile * W * o_tile * 4                    # f32 accumulator (+ slack)
    return img + wts + outb + lhs + acc


def _pick_h_tile(H, W, C, N, n_o, o_tile, store_bytes, budget):
    cands = sorted(d for d in range(1, H + 1)
                   if H % d == 0 and ((d * W) % 8 == 0 or d == H))
    valid = [d for d in cands
             if d * W <= 4096
             and _vmem_estimate(H, W, C, d, o_tile, store_bytes) <= budget]
    if not valid:
        valid = [min(cands)]
    h_tile = max(valid)
    # Enough grid steps for the 2-TC megacore / DMA pipelining when cheap.
    while N * (H // h_tile) * n_o < 8:
        smaller = [d for d in valid if d < h_tile and d * W >= 128]
        if not smaller:
            break
        h_tile = max(smaller)
    return h_tile


# ---------------------------------------------------------------------------
# Wrapper
# ---------------------------------------------------------------------------
def upsample_conv2d(x_nchw, weight_oihw, bias, *,
                    store_dtype=jnp.bfloat16, out_dtype=None):
    """Upsample_Conv2d forward: (N, C, H, W) -> (N, O, 2H, 2W)."""
    N, C, H, W = x_nchw.shape
    O = weight_oihw.shape[0]
    out_dtype = x_nchw.dtype if out_dtype is None else out_dtype

    Opad = _round_up(O, LANE)
    o_tile = _pick_o_tile(Opad)
    Opad = _round_up(Opad, o_tile)
    n_o = Opad // o_tile

    vmem_limit = _vmem_limit_bytes()
    store_bytes = jnp.dtype(store_dtype).itemsize
    h_tile = _pick_h_tile(H, W, C, N, n_o, o_tile, store_bytes,
                          budget=int(vmem_limit * 0.85))
    n_h = H // h_tile

    # ---- input: NCHW -> NHWC, 1-pixel zero halo, bf16 for the MXU ----
    xh = jnp.transpose(x_nchw, (0, 2, 3, 1)).astype(jnp.bfloat16)
    xp = jnp.pad(xh, ((0, 0), (1, 1), (1, 1), (0, 0)))             # (N, H+2, W+2, C)

    # ---- weights: fold 3x3 -> 4 parities x (2x2), K-fold taps into 4C ----
    w = jnp.transpose(weight_oihw, (2, 3, 1, 0))                   # (3, 3, C, O) [kh, kw, c, o]
    wr = _fold_taps(w)                                             # (2, 2, 3, C, O)    [rho, a, kw, c, o]
    wc = _fold_taps(jnp.moveaxis(wr, 2, 0))                        # (2, 2, 2, 2, C, O) [sig, b, rho, a, c, o]
    wc = jnp.transpose(wc, (2, 0, 3, 1, 4, 5))                     # [rho, sig, a, b, c, o]
    wc = wc.reshape(4, 4 * C, O)                                   # parity x (4C) x O
    wc = jnp.pad(wc, ((0, 0), (0, 0), (0, Opad - O))).astype(jnp.bfloat16)

    b2 = jnp.pad(bias.astype(jnp.float32), (0, Opad - O)).reshape(1, Opad)

    # ---- grid order: keep the larger operand resident across the inner axes
    # (Pallas skips the DMA when an input block index is unchanged) ----
    img_bytes = N * (H + 2) * (W + 2) * C * 2
    w_bytes = 4 * 4 * C * Opad * 2
    traffic_img_outer = img_bytes + N * n_h * w_bytes              # grid (N, n_h, n_o)
    traffic_wgt_outer = n_o * img_bytes + w_bytes                  # grid (n_o, N, n_h)
    weights_outer = traffic_wgt_outer < traffic_img_outer

    if weights_outer:
        grid = (n_o, N, n_h)
        h_axis = 2
        xp_map = lambda j, n, h: (n, 0, 0, 0)
        wc_map = lambda j, n, h: (0, 0, j)
        b_map = lambda j, n, h: (0, j)
        o_map = lambda j, n, h: (n, 0, h, j)
    else:
        grid = (N, n_h, n_o)
        h_axis = 1
        xp_map = lambda n, h, j: (n, 0, 0, 0)
        wc_map = lambda n, h, j: (0, 0, j)
        b_map = lambda n, h, j: (0, j)
        o_map = lambda n, h, j: (n, 0, h, j)

    kernel = functools.partial(_upsample_conv_kernel,
                               h_axis=h_axis, h_tile=h_tile)

    out = pl.pallas_call(
        kernel,
        out_shape=jax.ShapeDtypeStruct((N, 4, H * W, Opad), store_dtype),
        grid_spec=pltpu.PrefetchScalarGridSpec(
            num_scalar_prefetch=0,
            grid=grid,
            in_specs=[
                pl.BlockSpec((1, H + 2, W + 2, C), xp_map),
                pl.BlockSpec((4, 4 * C, o_tile), wc_map),
                pl.BlockSpec((1, o_tile), b_map),
            ],
            out_specs=pl.BlockSpec((1, 4, h_tile * W, o_tile), o_map),
        ),
        compiler_params=pltpu.CompilerParams(
            dimension_semantics=("parallel", "parallel", "parallel"),
            vmem_limit_bytes=vmem_limit),
    )(xp, wc, b2)

    # ---- de-interleave the 4 parities & drop channel padding.  This single
    # XLA transpose replaces the NHWC->NCHW transpose needed anyway; its read
    # side is bf16 thanks to the bf16 store. ----
    out = out[..., :O].reshape(N, 2, 2, H, W, O)                   # (n, rho, sig, p, q, o)
    out = jnp.transpose(out, (0, 5, 3, 1, 4, 2))                   # (n, o, p, rho, q, sig)
    return out.reshape(N, O, 2 * H, 2 * W).astype(out_dtype)


# ---------------------------------------------------------------------------
# Pure-JAX reference: literal cat + DepthToSpace + conv (matches PyTorch).
# ---------------------------------------------------------------------------
def _depth_to_space_nchw(x, block=2):
    n, d, h, w = x.shape
    s = d // (block * block)
    t = jnp.transpose(x, (0, 2, 3, 1)).reshape(n, h, w, block, block, s)
    t = jnp.transpose(t, (0, 1, 3, 2, 4, 5)).reshape(n, h * block, w * block, s)
    return jnp.transpose(t, (0, 3, 1, 2))


def _reference(x, weight, bias):
    xc = jnp.concatenate([x, x, x, x], axis=1)
    up = _depth_to_space_nchw(xc, 2)
    y = jax.lax.conv_general_dilated(
        up, weight, window_strides=(1, 1), padding=((1, 1), (1, 1)),
        dimension_numbers=("NCHW", "OIHW", "NCHW"))
    return y + bias.reshape(1, -1, 1, 1)


# ---------------------------------------------------------------------------
if __name__ == "__main__":
    N, in_dim, out_dim, H, W = 2, 4, 8, 16, 16

    key = jax.random.PRNGKey(0)
    kx, kw, kb = jax.random.split(key, 3)
    x = jax.random.normal(kx, (N, in_dim, H, W), dtype=jnp.float32)
    # synthetic nn.Conv2d(in_dim, out_dim, 3, stride=1, padding=1, bias=True) params
    weight = jax.random.normal(kw, (out_dim, in_dim, 3, 3), dtype=jnp.float32) * 0.1
    bias = jax.random.normal(kb, (out_dim,), dtype=jnp.float32) * 0.1

    out = jax.block_until_ready(upsample_conv2d(x, weight, bias))
    assert out.shape == (N, out_dim, 2 * H, 2 * W), out.shape

    ref = jax.block_until_ready(_reference(x, weight, bias))
    err = float(jnp.max(jnp.abs(out - ref)))
    # tolerance covers bf16 inputs/weights + bf16 store (f32 accumulation).
    assert jnp.allclose(out, ref, atol=5e-2, rtol=5e-2), err

    print("KERNEL_OK")
</pallas_src>

<mosaic_0001>
module attributes {stable_mosaic.version = 11 : i64} {
  func.func @_upsample_conv_kernel(%arg0: i32, %arg1: i32, %arg2: i32, %arg3: memref<1x18x18x4xbf16, #tpu.memory_space<vmem>>, %arg4: memref<4x16x128xbf16, #tpu.memory_space<vmem>>, %arg5: memref<1x128xf32, #tpu.memory_space<vmem>>, %arg6: memref<1x4x128x128xbf16, #tpu.memory_space<vmem>>) attributes {dimension_semantics = [#tpu.dimension_semantics<parallel>, #tpu.dimension_semantics<parallel>, #tpu.dimension_semantics<parallel>], iteration_bounds = array<i64: 1, 2, 2>, scalar_prefetch = 0 : i64, scratch_operands = 0 : i64, tpu.core_type = #tpu.core_type<tc>, window_params = [{transform_indices = @transform_0, window_bounds = array<i64: 1, 18, 18, 4>}, {transform_indices = @transform_1, window_bounds = array<i64: 4, 16, 128>}, {transform_indices = @transform_2, window_bounds = array<i64: 1, 128>}, {transform_indices = @transform_3, window_bounds = array<i64: 1, 4, 128, 128>}]} {
    %c8_i32 = arith.constant 8 : i32
    %0 = arith.muli %arg2, %c8_i32 : i32
    %1 = tpu.assume_multiple %0, 8 : i32
    %c0 = arith.constant 0 : index
    %c0_0 = arith.constant 0 : index
    %2 = vector.load %arg5[%c0, %c0_0] : memref<1x128xf32, #tpu.memory_space<vmem>>, vector<1x128xf32>
    %c0_i32 = arith.constant 0 : i32
    %3 = arith.addi %1, %c0_i32 : i32
    %c0_i32_1 = arith.constant 0 : i32
    %4 = arith.addi %3, %c0_i32_1 : i32
    %c0_2 = arith.constant 0 : index
    %5 = arith.index_cast %4 : i32 to index
    %c0_3 = arith.constant 0 : index
    %c0_4 = arith.constant 0 : index
    %6 = vector.load %arg3[%c0_2, %5, %c0_3, %c0_4] : memref<1x18x18x4xbf16, #tpu.memory_space<vmem>>, vector<1x8x16x4xbf16>
    %7 = vector.shape_cast %6 : vector<1x8x16x4xbf16> to vector<8x16x4xbf16>
    %8 = vector.shape_cast %7 : vector<8x16x4xbf16> to vector<128x4xbf16>
    %c0_i32_5 = arith.constant 0 : i32
    %9 = arith.addi %1, %c0_i32_5 : i32
    %c0_i32_6 = arith.constant 0 : i32
    %10 = arith.addi %9, %c0_i32_6 : i32
    %c0_7 = arith.constant 0 : index
    %11 = arith.index_cast %10 : i32 to index
    %c1 = arith.constant 1 : index
    %c0_8 = arith.constant 0 : index
    %12 = vector.load %arg3[%c0_7, %11, %c1, %c0_8] : memref<1x18x18x4xbf16, #tpu.memory_space<vmem>>, vector<1x8x16x4xbf16>
    %13 = vector.shape_cast %12 : vector<1x8x16x4xbf16> to vector<8x16x4xbf16>
    %14 = vector.shape_cast %13 : vector<8x16x4xbf16> to vector<128x4xbf16>
    %c0_i32_9 = arith.constant 0 : i32
    %15 = arith.addi %1, %c0_i32_9 : i32
    %c1_i32 = arith.constant 1 : i32
    %16 = arith.addi %15, %c1_i32 : i32
    %c0_10 = arith.constant 0 : index
    %17 = arith.index_cast %16 : i32 to index
    %c0_11 = arith.constant 0 : index
    %c0_12 = arith.constant 0 : index
    %18 = vector.load %arg3[%c0_10, %17, %c0_11, %c0_12] : memref<1x18x18x4xbf16, #tpu.memory_space<vmem>>, vector<1x8x16x4xbf16>
    %19 = vector.shape_cast %18 : vector<1x8x16x4xbf16> to vector<8x16x4xbf16>
    %20 = vector.shape_cast %19 : vector<8x16x4xbf16> to vector<128x4xbf16>
    %c0_i32_13 = arith.constant 0 : i32
    %21 = arith.addi %1, %c0_i32_13 : i32
    %c1_i32_14 = arith.constant 1 : i32
    %22 = arith.addi %21, %c1_i32_14 : i32
    %c0_15 = arith.constant 0 : index
    %23 = arith.index_cast %22 : i32 to index
    %c1_16 = arith.constant 1 : index
    %c0_17 = arith.constant 0 : index
    %24 = vector.load %arg3[%c0_15, %23, %c1_16, %c0_17] : memref<1x18x18x4xbf16, #tpu.memory_space<vmem>>, vector<1x8x16x4xbf16>
    %25 = vector.shape_cast %24 : vector<1x8x16x4xbf16> to vector<8x16x4xbf16>
    %26 = vector.shape_cast %25 : vector<8x16x4xbf16> to vector<128x4xbf16>
    %27 = tpu.concatenate %8, %14, %20, %26 in 1 : vector<128x4xbf16>, vector<128x4xbf16>, vector<128x4xbf16>, vector<128x4xbf16> -> vector<128x16xbf16>
    %c0_18 = arith.constant 0 : index
    %c0_19 = arith.constant 0 : index
    %c0_20 = arith.constant 0 : index
    %28 = vector.load %arg4[%c0_18, %c0_19, %c0_20] : memref<4x16x128xbf16, #tpu.memory_space<vmem>>, vector<1x16x128xbf16>
    %29 = vector.shape_cast %28 : vector<1x16x128xbf16> to vector<16x128xbf16>
    %cst = arith.constant dense<0.000000e+00> : vector<128x128xf32>
    %30 = tpu.matmul %27, %29, %cst {dimension_numbers = #tpu.dot_dimension_numbers<[1], [0], [0], [1], [0, 0, 1, 1], [], []>} : vector<128x16xbf16>, vector<16x128xbf16>, vector<128x128xf32> -> vector<128x128xf32>
    %31 = vector.broadcast %2 : vector<1x128xf32> to vector<128x128xf32>
    %32 = arith.addf %30, %31 : vector<128x128xf32>
    %33 = arith.truncf %32 : vector<128x128xf32> to vector<128x128xbf16>
    %c0_21 = arith.constant 0 : index
    %c0_22 = arith.constant 0 : index
    %c0_23 = arith.constant 0 : index
    %c0_24 = arith.constant 0 : index
    %34 = vector.load %arg6[%c0_21, %c0_22, %c0_23, %c0_24] : memref<1x4x128x128xbf16, #tpu.memory_space<vmem>>, vector<1x1x128x128xbf16>
    %35 = vector.shape_cast %34 : vector<1x1x128x128xbf16> to vector<128x128xbf16>
    %36 = vector.shape_cast %33 : vector<128x128xbf16> to vector<1x1x128x128xbf16>
    tpu.vector_store %arg6[%c0_21, %c0_22, %c0_23, %c0_24], %36 {strides = array<i32>} : memref<1x4x128x128xbf16, #tpu.memory_space<vmem>>, vector<1x1x128x128xbf16>,
    %c0_i32_25 = arith.constant 0 : i32
    %37 = arith.addi %1, %c0_i32_25 : i32
    %c0_i32_26 = arith.constant 0 : i32
    %38 = arith.addi %37, %c0_i32_26 : i32
    %c0_27 = arith.constant 0 : index
    %39 = arith.index_cast %38 : i32 to index
    %c1_28 = arith.constant 1 : index
    %c0_29 = arith.constant 0 : index
    %40 = vector.load %arg3[%c0_27, %39, %c1_28, %c0_29] : memref<1x18x18x4xbf16, #tpu.memory_space<vmem>>, vector<1x8x16x4xbf16>
    %41 = vector.shape_cast %40 : vector<1x8x16x4xbf16> to vector<8x16x4xbf16>
    %42 = vector.shape_cast %41 : vector<8x16x4xbf16> to vector<128x4xbf16>
    %c0_i32_30 = arith.constant 0 : i32
    %43 = arith.addi %1, %c0_i32_30 : i32
    %c0_i32_31 = arith.constant 0 : i32
    %44 = arith.addi %43, %c0_i32_31 : i32
    %c0_32 = arith.constant 0 : index
    %45 = arith.index_cast %44 : i32 to index
    %c2 = arith.constant 2 : index
    %c0_33 = arith.constant 0 : index
    %46 = vector.load %arg3[%c0_32, %45, %c2, %c0_33] : memref<1x18x18x4xbf16, #tpu.memory_space<vmem>>, vector<1x8x16x4xbf16>
    %47 = vector.shape_cast %46 : vector<1x8x16x4xbf16> to vector<8x16x4xbf16>
    %48 = vector.shape_cast %47 : vector<8x16x4xbf16> to vector<128x4xbf16>
    %c0_i32_34 = arith.constant 0 : i32
    %49 = arith.addi %1, %c0_i32_34 : i32
    %c1_i32_35 = arith.constant 1 : i32
    %50 = arith.addi %49, %c1_i32_35 : i32
    %c0_36 = arith.constant 0 : index
    %51 = arith.index_cast %50 : i32 to index
    %c1_37 = arith.constant 1 : index
    %c0_38 = arith.constant 0 : index
    %52 = vector.load %arg3[%c0_36, %51, %c1_37, %c0_38] : memref<1x18x18x4xbf16, #tpu.memory_space<vmem>>, vector<1x8x16x4xbf16>
    %53 = vector.shape_cast %52 : vector<1x8x16x4xbf16> to vector<8x16x4xbf16>
    %54 = vector.shape_cast %53 : vector<8x16x4xbf16> to vector<128x4xbf16>
    %c0_i32_39 = arith.constant 0 : i32
    %55 = arith.addi %1, %c0_i32_39 : i32
    %c1_i32_40 = arith.constant 1 : i32
    %56 = arith.addi %55, %c1_i32_40 : i32
    %c0_41 = arith.constant 0 : index
    %57 = arith.index_cast %56 : i32 to index
    %c2_42 = arith.constant 2 : index
    %c0_43 = arith.constant 0 : index
    %58 = vector.load %arg3[%c0_41, %57, %c2_42, %c0_43] : memref<1x18x18x4xbf16, #tpu.memory_space<vmem>>, vector<1x8x16x4xbf16>
    %59 = vector.shape_cast %58 : vector<1x8x16x4xbf16> to vector<8x16x4xbf16>
    %60 = vector.shape_cast %59 : vector<8x16x4xbf16> to vector<128x4xbf16>
    %61 = tpu.concatenate %42, %48, %54, %60 in 1 : vector<128x4xbf16>, vector<128x4xbf16>, vector<128x4xbf16>, vector<128x4xbf16> -> vector<128x16xbf16>
    %c1_44 = arith.constant 1 : index
    %c0_45 = arith.constant 0 : index
    %c0_46 = arith.constant 0 : index
    %62 = vector.load %arg4[%c1_44, %c0_45, %c0_46] : memref<4x16x128xbf16, #tpu.memory_space<vmem>>, vector<1x16x128xbf16>
    %63 = vector.shape_cast %62 : vector<1x16x128xbf16> to vector<16x128xbf16>
    %cst_47 = arith.constant dense<0.000000e+00> : vector<128x128xf32>
    %64 = tpu.matmul %61, %63, %cst_47 {dimension_numbers = #tpu.dot_dimension_numbers<[1], [0], [0], [1], [0, 0, 1, 1], [], []>} : vector<128x16xbf16>, vector<16x128xbf16>, vector<128x128xf32> -> vector<128x128xf32>
    %65 = vector.broadcast %2 : vector<1x128xf32> to vector<128x128xf32>
    %66 = arith.addf %64, %65 : vector<128x128xf32>
    %67 = arith.truncf %66 : vector<128x128xf32> to vector<128x128xbf16>
    %c0_48 = arith.constant 0 : index
    %c1_49 = arith.constant 1 : index
    %c0_50 = arith.constant 0 : index
    %c0_51 = arith.constant 0 : index
    %68 = vector.load %arg6[%c0_48, %c1_49, %c0_50, %c0_51] : memref<1x4x128x128xbf16, #tpu.memory_space<vmem>>, vector<1x1x128x128xbf16>
    %69 = vector.shape_cast %68 : vector<1x1x128x128xbf16> to vector<128x128xbf16>
    %70 = vector.shape_cast %67 : vector<128x128xbf16> to vector<1x1x128x128xbf16>
    tpu.vector_store %arg6[%c0_48, %c1_49, %c0_50, %c0_51], %70 {strides = array<i32>} : memref<1x4x128x128xbf16, #tpu.memory_space<vmem>>, vector<1x1x128x128xbf16>,
    %c1_i32_52 = arith.constant 1 : i32
    %71 = arith.addi %1, %c1_i32_52 : i32
    %c0_i32_53 = arith.constant 0 : i32
    %72 = arith.addi %71, %c0_i32_53 : i32
    %c0_54 = arith.constant 0 : index
    %73 = arith.index_cast %72 : i32 to index
    %c0_55 = arith.constant 0 : index
    %c0_56 = arith.constant 0 : index
    %74 = vector.load %arg3[%c0_54, %73, %c0_55, %c0_56] : memref<1x18x18x4xbf16, #tpu.memory_space<vmem>>, vector<1x8x16x4xbf16>
    %75 = vector.shape_cast %74 : vector<1x8x16x4xbf16> to vector<8x16x4xbf16>
    %76 = vector.shape_cast %75 : vector<8x16x4xbf16> to vector<128x4xbf16>
    %c1_i32_57 = arith.constant 1 : i32
    %77 = arith.addi %1, %c1_i32_57 : i32
    %c0_i32_58 = arith.constant 0 : i32
    %78 = arith.addi %77, %c0_i32_58 : i32
    %c0_59 = arith.constant 0 : index
    %79 = arith.index_cast %78 : i32 to index
    %c1_60 = arith.constant 1 : index
    %c0_61 = arith.constant 0 : index
    %80 = vector.load %arg3[%c0_59, %79, %c1_60, %c0_61] : memref<1x18x18x4xbf16, #tpu.memory_space<vmem>>, vector<1x8x16x4xbf16>
    %81 = vector.shape_cast %80 : vector<1x8x16x4xbf16> to vector<8x16x4xbf16>
    %82 = vector.shape_cast %81 : vector<8x16x4xbf16> to vector<128x4xbf16>
    %c1_i32_62 = arith.constant 1 : i32
    %83 = arith.addi %1, %c1_i32_62 : i32
    %c1_i32_63 = arith.constant 1 : i32
    %84 = arith.addi %83, %c1_i32_63 : i32
    %c0_64 = arith.constant 0 : index
    %85 = arith.index_cast %84 : i32 to index
    %c0_65 = arith.constant 0 : index
    %c0_66 = arith.constant 0 : index
    %86 = vector.load %arg3[%c0_64, %85, %c0_65, %c0_66] : memref<1x18x18x4xbf16, #tpu.memory_space<vmem>>, vector<1x8x16x4xbf16>
    %87 = vector.shape_cast %86 : vector<1x8x16x4xbf16> to vector<8x16x4xbf16>
    %88 = vector.shape_cast %87 : vector<8x16x4xbf16> to vector<128x4xbf16>
    %c1_i32_67 = arith.constant 1 : i32
    %89 = arith.addi %1, %c1_i32_67 : i32
    %c1_i32_68 = arith.constant 1 : i32
    %90 = arith.addi %89, %c1_i32_68 : i32
    %c0_69 = arith.constant 0 : index
    %91 = arith.index_cast %90 : i32 to index
    %c1_70 = arith.constant 1 : index
    %c0_71 = arith.constant 0 : index
    %92 = vector.load %arg3[%c0_69, %91, %c1_70, %c0_71] : memref<1x18x18x4xbf16, #tpu.memory_space<vmem>>, vector<1x8x16x4xbf16>
    %93 = vector.shape_cast %92 : vector<1x8x16x4xbf16> to vector<8x16x4xbf16>
    %94 = vector.shape_cast %93 : vector<8x16x4xbf16> to vector<128x4xbf16>
    %95 = tpu.concatenate %76, %82, %88, %94 in 1 : vector<128x4xbf16>, vector<128x4xbf16>, vector<128x4xbf16>, vector<128x4xbf16> -> vector<128x16xbf16>
    %c2_72 = arith.constant 2 : index
    %c0_73 = arith.constant 0 : index
    %c0_74 = arith.constant 0 : index
    %96 = vector.load %arg4[%c2_72, %c0_73, %c0_74] : memref<4x16x128xbf16, #tpu.memory_space<vmem>>, vector<1x16x128xbf16>
    %97 = vector.shape_cast %96 : vector<1x16x128xbf16> to vector<16x128xbf16>
    %cst_75 = arith.constant dense<0.000000e+00> : vector<128x128xf32>
    %98 = tpu.matmul %95, %97, %cst_75 {dimension_numbers = #tpu.dot_dimension_numbers<[1], [0], [0], [1], [0, 0, 1, 1], [], []>} : vector<128x16xbf16>, vector<16x128xbf16>, vector<128x128xf32> -> vector<128x128xf32>
    %99 = vector.broadcast %2 : vector<1x128xf32> to vector<128x128xf32>
    %100 = arith.addf %98, %99 : vector<128x128xf32>
    %101 = arith.truncf %100 : vector<128x128xf32> to vector<128x128xbf16>
    %c0_76 = arith.constant 0 : index
    %c2_77 = arith.constant 2 : index
    %c0_78 = arith.constant 0 : index
    %c0_79 = arith.constant 0 : index
    %102 = vector.load %arg6[%c0_76, %c2_77, %c0_78, %c0_79] : memref<1x4x128x128xbf16, #tpu.memory_space<vmem>>, vector<1x1x128x128xbf16>
    %103 = vector.shape_cast %102 : vector<1x1x128x128xbf16> to vector<128x128xbf16>
    %104 = vector.shape_cast %101 : vector<128x128xbf16> to vector<1x1x128x128xbf16>
    tpu.vector_store %arg6[%c0_76, %c2_77, %c0_78, %c0_79], %104 {strides = array<i32>} : memref<1x4x128x128xbf16, #tpu.memory_space<vmem>>, vector<1x1x128x128xbf16>,
    %c1_i32_80 = arith.constant 1 : i32
    %105 = arith.addi %1, %c1_i32_80 : i32
    %c0_i32_81 = arith.constant 0 : i32
    %106 = arith.addi %105, %c0_i32_81 : i32
    %c0_82 = arith.constant 0 : index
    %107 = arith.index_cast %106 : i32 to index
    %c1_83 = arith.constant 1 : index
    %c0_84 = arith.constant 0 : index
    %108 = vector.load %arg3[%c0_82, %107, %c1_83, %c0_84] : memref<1x18x18x4xbf16, #tpu.memory_space<vmem>>, vector<1x8x16x4xbf16>
    %109 = vector.shape_cast %108 : vector<1x8x16x4xbf16> to vector<8x16x4xbf16>
    %110 = vector.shape_cast %109 : vector<8x16x4xbf16> to vector<128x4xbf16>
    %c1_i32_85 = arith.constant 1 : i32
    %111 = arith.addi %1, %c1_i32_85 : i32
    %c0_i32_86 = arith.constant 0 : i32
    %112 = arith.addi %111, %c0_i32_86 : i32
    %c0_87 = arith.constant 0 : index
    %113 = arith.index_cast %112 : i32 to index
    %c2_88 = arith.constant 2 : index
    %c0_89 = arith.constant 0 : index
    %114 = vector.load %arg3[%c0_87, %113, %c2_88, %c0_89] : memref<1x18x18x4xbf16, #tpu.memory_space<vmem>>, vector<1x8x16x4xbf16>
    %115 = vector.shape_cast %114 : vector<1x8x16x4xbf16> to vector<8x16x4xbf16>
    %116 = vector.shape_cast %115 : vector<8x16x4xbf16> to vector<128x4xbf16>
    %c1_i32_90 = arith.constant 1 : i32
    %117 = arith.addi %1, %c1_i32_90 : i32
    %c1_i32_91 = arith.constant 1 : i32
    %118 = arith.addi %117, %c1_i32_91 : i32
    %c0_92 = arith.constant 0 : index
    %119 = arith.index_cast %118 : i32 to index
    %c1_93 = arith.constant 1 : index
    %c0_94 = arith.constant 0 : index
    %120 = vector.load %arg3[%c0_92, %119, %c1_93, %c0_94] : memref<1x18x18x4xbf16, #tpu.memory_space<vmem>>, vector<1x8x16x4xbf16>
    %121 = vector.shape_cast %120 : vector<1x8x16x4xbf16> to vector<8x16x4xbf16>
    %122 = vector.shape_cast %121 : vector<8x16x4xbf16> to vector<128x4xbf16>
    %c1_i32_95 = arith.constant 1 : i32
    %123 = arith.addi %1, %c1_i32_95 : i32
    %c1_i32_96 = arith.constant 1 : i32
    %124 = arith.addi %123, %c1_i32_96 : i32
    %c0_97 = arith.constant 0 : index
    %125 = arith.index_cast %124 : i32 to index
    %c2_98 = arith.constant 2 : index
    %c0_99 = arith.constant 0 : index
    %126 = vector.load %arg3[%c0_97, %125, %c2_98, %c0_99] : memref<1x18x18x4xbf16, #tpu.memory_space<vmem>>, vector<1x8x16x4xbf16>
    %127 = vector.shape_cast %126 : vector<1x8x16x4xbf16> to vector<8x16x4xbf16>
    %128 = vector.shape_cast %127 : vector<8x16x4xbf16> to vector<128x4xbf16>
    %129 = tpu.concatenate %110, %116, %122, %128 in 1 : vector<128x4xbf16>, vector<128x4xbf16>, vector<128x4xbf16>, vector<128x4xbf16> -> vector<128x16xbf16>
    %c3 = arith.constant 3 : index
    %c0_100 = arith.constant 0 : index
    %c0_101 = arith.constant 0 : index
    %130 = vector.load %arg4[%c3, %c0_100, %c0_101] : memref<4x16x128xbf16, #tpu.memory_space<vmem>>, vector<1x16x128xbf16>
    %131 = vector.shape_cast %130 : vector<1x16x128xbf16> to vector<16x128xbf16>
    %cst_102 = arith.constant dense<0.000000e+00> : vector<128x128xf32>
    %132 = tpu.matmul %129, %131, %cst_102 {dimension_numbers = #tpu.dot_dimension_numbers<[1], [0], [0], [1], [0, 0, 1, 1], [], []>} : vector<128x16xbf16>, vector<16x128xbf16>, vector<128x128xf32> -> vector<128x128xf32>
    %133 = vector.broadcast %2 : vector<1x128xf32> to vector<128x128xf32>
    %134 = arith.addf %132, %133 : vector<128x128xf32>
    %135 = arith.truncf %134 : vector<128x128xf32> to vector<128x128xbf16>
    %c0_103 = arith.constant 0 : index
    %c3_104 = arith.constant 3 : index
    %c0_105 = arith.constant 0 : index
    %c0_106 = arith.constant 0 : index
    %136 = vector.load %arg6[%c0_103, %c3_104, %c0_105, %c0_106] : memref<1x4x128x128xbf16, #tpu.memory_space<vmem>>, vector<1x1x128x128xbf16>
    %137 = vector.shape_cast %136 : vector<1x1x128x128xbf16> to vector<128x128xbf16>
    %138 = vector.shape_cast %135 : vector<128x128xbf16> to vector<1x1x128x128xbf16>
    tpu.vector_store %arg6[%c0_103, %c3_104, %c0_105, %c0_106], %138 {strides = array<i32>} : memref<1x4x128x128xbf16, #tpu.memory_space<vmem>>, vector<1x1x128x128xbf16>,
    return
  }
  func.func @transform_0(%arg0: i32, %arg1: i32, %arg2: i32) -> (i32, i32, i32, i32) {
    %c0_i32 = arith.constant 0 : i32
    %c0_i32_0 = arith.constant 0 : i32
    %c0_i32_1 = arith.constant 0 : i32
    %c0_i32_2 = arith.constant 0 : i32
    return %arg1, %c0_i32, %c0_i32_0, %c0_i32_1 : i32, i32, i32, i32
  }
  func.func @transform_1(%arg0: i32, %arg1: i32, %arg2: i32) -> (i32, i32, i32) {
    %c0_i32 = arith.constant 0 : i32
    %c0_i32_0 = arith.constant 0 : i32
    %c0_i32_1 = arith.constant 0 : i32
    return %c0_i32, %c0_i32_0, %arg0 : i32, i32, i32
  }
  func.func @transform_2(%arg0: i32, %arg1: i32, %arg2: i32) -> (i32, i32) {
    %c0_i32 = arith.constant 0 : i32
    %c0_i32_0 = arith.constant 0 : i32
    return %c0_i32, %arg0 : i32, i32
  }
  func.func @transform_3(%arg0: i32, %arg1: i32, %arg2: i32) -> (i32, i32, i32, i32) {
    %c0_i32 = arith.constant 0 : i32
    %c0_i32_0 = arith.constant 0 : i32
    return %arg1, %c0_i32, %arg2, %arg0 : i32, i32, i32, i32
  }
}

</mosaic_0001>

<llo_original>
// kernel: tpu_custom_call.1
$region0: #{tpu_custom_call.1}
  #allocation0 [shape = 'u32[]', space=smem, size = 0x4, offset = 0x4, fixed_abs, tag = 'smem constant byte address 0x4 - core index']
  #allocation1 [shape = 'u32[144,128]{1,0:T(1,128)}', space=vmem, size = 0x12000, scoped, tag = 'internal scratch']
  #allocation4 [shape = 's32[]', space=sflag, size = 0x4, offset = 0, fixed_abs, tag = 'sflag constant byte address 0x0 - dummy sync flag']
  %s0 = inlined_call_operand.vmem [shape: bf16[2,18,18,4], index: 0, kind: input, shape index: {}]
  %s1 = inlined_call_operand.vmem [shape: bf16[4,16,128], index: 1, kind: input, shape index: {}]
  %s2 = inlined_call_operand.vmem [shape: f32[1,128], index: 2, kind: input, shape index: {}]
  %s3 = inlined_call_operand.hbm [shape: bf16[2,4,256,128], index: 3, kind: output, shape index: {}]
  %s4 = sld [smem:[#allocation0]]
  $region45: #{tpu_custom_call.1} parent=0
    _
  %s6 = ssub.s32 1, %s4
  %s7 = scalar_select 0, %s6, %s4
  $region1: #{tpu_custom_call.1} parent=0
    #allocation2 [shape = 'u8[262144]{0}', space=vmem, size = 0x40000, scoped, tag = 'output window, operand 0']
    #allocation3 [shape = 's32[2]{0}', space=sflag, size = 0x8, scoped, tag = 'scoped memory for tpu_custom_call.1']
    %8 = vsyncpa [#allocation3], 0
    %s9 = scalar_lea.sflag [#allocation3], 1
    %10 = vsyncpa %s9, 0
    loop: start=0, step=1, limit=6
    $region2: #{tpu_custom_call.1} parent=1 // loop_pre_header
      _
    $region3: #{tpu_custom_call.1} parent=1 // loop_header
      %s12 = sphi 0, %s16
      %p13 = scmp.ge.s32.totalorder %s12, 6
      %s19 = sphi 0, %s38
      %s20 = sphi 0, %s34
      %s21 = sphi 0, %s30
      %s22 = sphi 0, %s19
      %s23 = sphi 0, %s20
      %s24 = sphi 0, %s21
      %s25 = sphi 0, %s22
      %s26 = sphi 0, %s23
      %s27 = sphi 0, %s24
      %s41 = sphi 0, %s43
      %s44 = sphi 0, %s41
      %s45 = sphi 0, %s44
      %s61 = sphi 0, %s45
      %s67 = sphi 0, %s69
      %s70 = sphi 0, %s67
      %s71 = sphi 0, %s70
      %s87 = sphi 0, %s71
      %s93 = sphi 0, %s95
      %s96 = sphi 0, %s93
      %s97 = sphi 0, %s96
      %s113 = sphi 0, %s97
      %s123 = sphi 0, %s125
      %s126 = sphi 0, %s123
      %s127 = sphi 0, %s126
      %s143 = sphi 0, %s127
    $region4: #{tpu_custom_call.1} parent=1 // loop_header_branch
      %15 = sbr.rel (%p13) target = $region8
    $region5: #{tpu_custom_call.1} parent=1 // loop_body
      %s17 = ssub.s32 %s12, 1
      %s18 = ssub.s32 %s12, 2
      %s28 = sadd.s32 1, %s21
      %p29 = scmp.ge.s32.totalorder %s28, 2
      %s30 = scalar_select %p29, 0, %s28
      %s31 = sadd.s32 1, %s20
      %s32 = scalar_select %p29, %s31, %s20
      %p33 = scmp.ge.s32.totalorder %s32, 2
      %s34 = scalar_select %p33, 0, %s32
      %s35 = sadd.s32 1, %s19
      %s36 = scalar_select %p33, %s35, %s19
      %p37 = scmp.ge.s32.totalorder %s36, 1
      %s38 = scalar_select %p37, 0, %s36
      %s39 = ssub.s32 %s20, %s34
      %p40 = scmp.eq.s32.totalorder %s39, 0
      %s42 = sadd.s32 %s41, 1
      %s43 = scalar_select %p40, %s41, %s42
      %p46 = pneg %p40
      %p47 = scmp.eq.s32.totalorder %s12, 3
      %p48 = por %p46, %p47
      %p49 = scmp.ne.s32.totalorder %s41, %s44
      %p50 = scmp.eq.s32.totalorder %s12, 0
      %p51 = por %p49, %p50
      %p52 = scmp.ne.s32.totalorder %s41, %s44
      %p53 = scmp.eq.s32.totalorder %s17, 3
      %p54 = por %p52, %p53
      %p55 = scmp.ne.s32.totalorder %s44, %s45
      %p56 = scmp.eq.s32.totalorder %s17, 0
      %p57 = por %p55, %p56
      %p58 = scmp.ne.s32.totalorder %s44, %s45
      %p59 = scmp.eq.s32.totalorder %s18, 3
      %p60 = por %p58, %p59
      %p62 = scmp.ne.s32.totalorder %s45, %s61
      %p63 = scmp.eq.s32.totalorder %s18, 0
      %p64 = por %p62, %p63
      %s65 = ssub.s32 %s19, %s38
      %p66 = scmp.eq.s32.totalorder %s65, 0
      %s68 = sadd.s32 %s67, 1
      %s69 = scalar_select %p66, %s67, %s68
      %p72 = pneg %p66
      %p73 = scmp.eq.s32.totalorder %s12, 3
      %p74 = por %p72, %p73
      %p75 = scmp.ne.s32.totalorder %s67, %s70
      %p76 = scmp.eq.s32.totalorder %s12, 0
      %p77 = por %p75, %p76
      %p78 = scmp.ne.s32.totalorder %s67, %s70
      %p79 = scmp.eq.s32.totalorder %s17, 3
      %p80 = por %p78, %p79
      %p81 = scmp.ne.s32.totalorder %s70, %s71
      %p82 = scmp.eq.s32.totalorder %s17, 0
      %p83 = por %p81, %p82
      %p84 = scmp.ne.s32.totalorder %s70, %s71
      %p85 = scmp.eq.s32.totalorder %s18, 3
      %p86 = por %p84, %p85
      %p88 = scmp.ne.s32.totalorder %s71, %s87
      %p89 = scmp.eq.s32.totalorder %s18, 0
      %p90 = por %p88, %p89
      %s91 = ssub.s32 %s19, %s38
      %p92 = scmp.eq.s32.totalorder %s91, 0
      %s94 = sadd.s32 %s93, 1
      %s95 = scalar_select %p92, %s93, %s94
      %p98 = pneg %p92
      %p99 = scmp.eq.s32.totalorder %s12, 3
      %p100 = por %p98, %p99
      %p101 = scmp.ne.s32.totalorder %s93, %s96
      %p102 = scmp.eq.s32.totalorder %s12, 0
      %p103 = por %p101, %p102
      %p104 = scmp.ne.s32.totalorder %s93, %s96
      %p105 = scmp.eq.s32.totalorder %s17, 3
      %p106 = por %p104, %p105
      %p107 = scmp.ne.s32.totalorder %s96, %s97
      %p108 = scmp.eq.s32.totalorder %s17, 0
      %p109 = por %p107, %p108
      %p110 = scmp.ne.s32.totalorder %s96, %s97
      %p111 = scmp.eq.s32.totalorder %s18, 3
      %p112 = por %p110, %p111
      %p114 = scmp.ne.s32.totalorder %s97, %s113
      %p115 = scmp.eq.s32.totalorder %s18, 0
      %p116 = por %p114, %p115
      %s117 = ssub.s32 %s20, %s34
      %s118 = ssub.s32 %s21, %s30
      %s119 = sor.u32 %s117, %s118
      %s120 = ssub.s32 %s19, %s38
      %s121 = sor.u32 %s119, %s120
      %p122 = scmp.eq.s32.totalorder %s121, 0
      %s124 = sadd.s32 %s123, 1
      %s125 = scalar_select %p122, %s123, %s124
      %p128 = pneg %p122
      %p129 = scmp.eq.s32.totalorder %s12, 3
      %p130 = por %p128, %p129
      %p131 = scmp.ne.s32.totalorder %s123, %s126
      %p132 = scmp.eq.s32.totalorder %s12, 0
      %p133 = por %p131, %p132
      %p134 = scmp.ne.s32.totalorder %s123, %s126
      %p135 = scmp.eq.s32.totalorder %s17, 3
      %p136 = por %p134, %p135
      %p137 = scmp.ne.s32.totalorder %s126, %s127
      %p138 = scmp.eq.s32.totalorder %s17, 0
      %p139 = por %p137, %p138
      %p140 = scmp.ne.s32.totalorder %s126, %s127
      %p141 = scmp.eq.s32.totalorder %s18, 3
      %p142 = por %p140, %p141
      %p144 = scmp.ne.s32.totalorder %s127, %s143
      %p145 = scmp.eq.s32.totalorder %s18, 0
      %p146 = por %p144, %p145
      %p147 = scmp.le.s32.totalorder 1, %s12
      %p148 = scmp.lt.s32.totalorder %s12, 5
      %p149 = pnand %p147, %p148
      %p150 = pneg %p149
      // Predicated region
      $region9: #{tpu_custom_call.1} parent=5 // pred_check
        _
      $region10: #{tpu_custom_call.1} parent=5 // pred_check_branch
        %152 = sbr.rel (%p149) target = $region12
      $region11: #{tpu_custom_call.1} parent=5 // pred_region
        %s153 = ssub.s32 %s12, 1
        // Predicated region
        $region13: #{tpu_custom_call.1} parent=11 // pred_check
          %p154 = pneg %p83
        $region14: #{tpu_custom_call.1} parent=11 // pred_check_branch
          %156 = sbr.rel (%p154) target = $region16
        $region15: #{tpu_custom_call.1} parent=11 // pred_region
          %p157 = scmp.lt.s32.totalorder %s22, 0
          %s158 = scalar_select %p157, %s22, 0
          %s159 = smul.addr %s158, 4
          %s160 = scalar_lea.vmem %s1, %s159
        $region16: #{tpu_custom_call.1} parent=11 // pred_fallthru
          _
        // Predicated region
        $region17: #{tpu_custom_call.1} parent=11 // pred_check
          %p161 = pneg %p109
        $region18: #{tpu_custom_call.1} parent=11 // pred_check_branch
          %163 = sbr.rel (%p161) target = $region20
        $region19: #{tpu_custom_call.1} parent=11 // pred_region
          %p164 = scmp.lt.s32.totalorder %s22, 0
          %s165 = scalar_select %p164, %s22, 0
          %s166 = scalar_lea.vmem %s2, %s165
        $region20: #{tpu_custom_call.1} parent=11 // pred_fallthru
          _
      $region12: #{tpu_custom_call.1} parent=5 // pred_fallthru
        _
      %p167 = scmp.lt.s32.totalorder %s12, 4
      // Predicated region
      $region21: #{tpu_custom_call.1} parent=5 // pred_check
        %p168 = pneg %p167
      $region22: #{tpu_custom_call.1} parent=5 // pred_check_branch
        %170 = sbr.rel (%p168) target = $region24
      $region23: #{tpu_custom_call.1} parent=5 // pred_region
        // Predicated region
        $region25: #{tpu_custom_call.1} parent=23 // pred_check
          %p171 = pneg %p51
        $region26: #{tpu_custom_call.1} parent=23 // pred_check_branch
          %173 = sbr.rel (%p171) target = $region28
        $region27: #{tpu_custom_call.1} parent=23 // pred_region
          %p174 = scmp.lt.s32.totalorder %s20, 1
          %s175 = scalar_select %p174, %s20, 1
          %s176 = smul.addr %s175, 54
          %s177 = smul.addr %s176, 4
          %s178 = scalar_lea.vmem %s0, %s177
        $region28: #{tpu_custom_call.1} parent=23 // pred_fallthru
          _
      $region24: #{tpu_custom_call.1} parent=5 // pred_fallthru
        _
      %p179 = scmp.le.s32.totalorder 1, %s12
      %p180 = scmp.lt.s32.totalorder %s12, 5
      %p181 = pnand %p179, %p180
      %p182 = pneg %p181
      // Predicated region
      $region29: #{tpu_custom_call.1} parent=5 // pred_check
        _
      $region30: #{tpu_custom_call.1} parent=5 // pred_check_branch
        %184 = sbr.rel (%p181) target = $region32
      $region31: #{tpu_custom_call.1} parent=5 // pred_region
        %s185 = ssub.s32 %s12, 1
        %p186 = scmp.lt.s32.totalorder %s23, 1
        %s187 = scalar_select %p186, %s23, 1
        %s188 = smul.addr %s187, 54
        %s189 = smul.addr %s188, 4
        %s190 = scalar_lea.vmem %s0, %s189
        %p191 = pneg %p57
        %p192 = pneg %p54
        %p193 = scmp.lt.s32.totalorder %s22, 0
        %s194 = scalar_select %p193, %s22, 0
        %s195 = smul.addr %s194, 4
        %s196 = scalar_lea.vmem %s1, %s195
        %p197 = pneg %p83
        %p198 = pneg %p80
        %p199 = scmp.lt.s32.totalorder %s22, 0
        %s200 = scalar_select %p199, %s22, 0
        %s201 = scalar_lea.vmem %s2, %s200
        %p202 = pneg %p109
        %p203 = pneg %p106
        %p204 = pneg %p139
        %p205 = pneg %p136
        %s206 = sand.u32 %s126, 1
        %s207 = scalar_lea.sflag [#allocation3], %s206
        %s208 = sand.u32 %s126, 1
        %s209 = smul.addr %s208, 256
        %s210 = scalar_lea.vmem [#allocation2], %s209
        %p211 = scmp.lt.s32.totalorder %s23, 1
        %s212 = scalar_select %p211, %s23, 1
        %s213 = smul.addr %s212, 54
        %s214 = smul.addr %s213, 4
        %s215 = scalar_lea.vmem %s0, %s214
        %p216 = scmp.lt.s32.totalorder %s22, 0
        %s217 = scalar_select %p216, %s22, 0
        %s218 = smul.addr %s217, 4
        %s219 = scalar_lea.vmem %s1, %s218
        %p220 = scmp.lt.s32.totalorder %s22, 0
        %s221 = scalar_select %p220, %s22, 0
        %s222 = scalar_lea.vmem %s2, %s221
        %s223 = smul.u32 16, %s24
        %s225 = smul.u32 %s24, 8
        %v226 = vld [vmem:[%s222] sm:$0x1]
        %s227 = smul.u32 %s225, 3
        %s228 = smul.addr %s227, 4
        %s229 = scalar_lea.vmem %s215, %s228
        %v230 = vld [vmem:[%s229] sm:$0xf]
        %v231 = vld [vmem:[%s229 + $0x4] sm:$0xf]
        %v232 = vld [vmem:[%s229 + $0xc] sm:$0xf]
        %v233 = vld [vmem:[%s229 + $0x10] sm:$0xf]
        %v234 = vld [vmem:[%s229 + $0x18] sm:$0xf]
        %v235 = vld [vmem:[%s229 + $0x1c] sm:$0xf]
        %v236 = vld [vmem:[%s229 + $0x24] sm:$0xf]
        %v237 = vld [vmem:[%s229 + $0x28] sm:$0xf]
        %v238 = vld [vmem:[%s229 + $0x30] sm:$0xf]
        %v239 = vld [vmem:[%s229 + $0x34] sm:$0xf]
        %v240 = vld [vmem:[%s229 + $0x3c] sm:$0xf]
        %v241 = vld [vmem:[%s229 + $0x40] sm:$0xf]
        %v242 = vld [vmem:[%s229 + $0x48] sm:$0xf]
        %v243 = vld [vmem:[%s229 + $0x4c] sm:$0xf]
        %v244 = vld [vmem:[%s229 + $0x54] sm:$0xf]
        %v245 = vld [vmem:[%s229 + $0x58] sm:$0xf]
        %v246 = vld [vmem:[%s229 + $0x8] sm:$0x1]
        %v247 = vld [vmem:[%s229 + $0x14] sm:$0x1]
        %v248 = vld [vmem:[%s229 + $0x20] sm:$0x1]
        %v249 = vld [vmem:[%s229 + $0x2c] sm:$0x1]
        %v250 = vld [vmem:[%s229 + $0x38] sm:$0x1]
        %v251 = vld [vmem:[%s229 + $0x44] sm:$0x1]
        %v252 = vld [vmem:[%s229 + $0x50] sm:$0x1]
        %v253 = vld [vmem:[%s229 + $0x5c] sm:$0x1]
        %vm254 = vsmask.f32 3328
        %vm255 = vsmask.f32 7440
        %vm256 = vmor %vm254, %vm255
        %v258 = vshrl.u32 %v230, 16
        %v260 = vrot.slane %v258, 4
        %v261 = vshll.u32 %v230, 16
        %v263 = vrot.slane %v261, 5
        %v264 = vor.u32 %v260, %v263
        %v265 = vrot.slane %v264, 4
        %v267 = vshll.u32 %v231, 16
        %v269 = vrot.slane %v267, 5
        %v270 = vsel %vm256, %v265, %v269
        %v271 = vshrl.u32 %v231, 16
        %v273 = vrot.slane %v271, 4
        %v274 = vor.u32 %v273, %v269
        %v275 = vrot.slane %v274, 4
        %v277 = vshll.u32 %v246, 16
        %v279 = vrot.slane %v277, 5
        %v280 = vsel %vm256, %v275, %v279
        %v282 = vshrl.u32 %v232, 16
        %v284 = vrot.slane %v282, 4
        %v285 = vshll.u32 %v232, 16
        %v287 = vrot.slane %v285, 5
        %v288 = vor.u32 %v284, %v287
        %v289 = vrot.slane %v288, 4
        %v291 = vshll.u32 %v233, 16
        %v293 = vrot.slane %v291, 5
        %v294 = vsel %vm256, %v289, %v293
        %v295 = vshrl.u32 %v233, 16
        %v297 = vrot.slane %v295, 4
        %v298 = vor.u32 %v297, %v293
        %v299 = vrot.slane %v298, 4
        %v301 = vshll.u32 %v247, 16
        %v303 = vrot.slane %v301, 5
        %v304 = vsel %vm256, %v299, %v303
        %v306 = vshrl.u32 %v234, 16
        %v308 = vrot.slane %v306, 4
        %v309 = vshll.u32 %v234, 16
        %v311 = vrot.slane %v309, 5
        %v312 = vor.u32 %v308, %v311
        %v313 = vrot.slane %v312, 4
        %v315 = vshll.u32 %v235, 16
        %v317 = vrot.slane %v315, 5
        %v318 = vsel %vm256, %v313, %v317
        %v319 = vshrl.u32 %v235, 16
        %v321 = vrot.slane %v319, 4
        %v322 = vor.u32 %v321, %v317
        %v323 = vrot.slane %v322, 4
        %v325 = vshll.u32 %v248, 16
        %v327 = vrot.slane %v325, 5
        %v328 = vsel %vm256, %v323, %v327
        %v330 = vshrl.u32 %v236, 16
        %v332 = vrot.slane %v330, 4
        %v333 = vshll.u32 %v236, 16
        %v335 = vrot.slane %v333, 5
        %v336 = vor.u32 %v332, %v335
        %v337 = vrot.slane %v336, 4
        %v339 = vshll.u32 %v237, 16
        %v341 = vrot.slane %v339, 5
        %v342 = vsel %vm256, %v337, %v341
        %v343 = vshrl.u32 %v237, 16
        %v345 = vrot.slane %v343, 4
        %v346 = vor.u32 %v345, %v341
        %v347 = vrot.slane %v346, 4
        %v349 = vshll.u32 %v249, 16
        %v351 = vrot.slane %v349, 5
        %v352 = vsel %vm256, %v347, %v351
        %v354 = vshrl.u32 %v238, 16
        %v356 = vrot.slane %v354, 4
        %v357 = vshll.u32 %v238, 16
        %v359 = vrot.slane %v357, 5
        %v360 = vor.u32 %v356, %v359
        %v361 = vrot.slane %v360, 4
        %v363 = vshll.u32 %v239, 16
        %v365 = vrot.slane %v363, 5
        %v366 = vsel %vm256, %v361, %v365
        %v367 = vshrl.u32 %v239, 16
        %v369 = vrot.slane %v367, 4
        %v370 = vor.u32 %v369, %v365
        %v371 = vrot.slane %v370, 4
        %v373 = vshll.u32 %v250, 16
        %v375 = vrot.slane %v373, 5
        %v376 = vsel %vm256, %v371, %v375
        %v378 = vshrl.u32 %v240, 16
        %v380 = vrot.slane %v378, 4
        %v381 = vshll.u32 %v240, 16
        %v383 = vrot.slane %v381, 5
        %v384 = vor.u32 %v380, %v383
        %v385 = vrot.slane %v384, 4
        %v387 = vshll.u32 %v241, 16
        %v389 = vrot.slane %v387, 5
        %v390 = vsel %vm256, %v385, %v389
        %v391 = vshrl.u32 %v241, 16
        %v393 = vrot.slane %v391, 4
        %v394 = vor.u32 %v393, %v389
        %v395 = vrot.slane %v394, 4
        %v397 = vshll.u32 %v251, 16
        %v399 = vrot.slane %v397, 5
        %v400 = vsel %vm256, %v395, %v399
        %v402 = vshrl.u32 %v242, 16
        %v404 = vrot.slane %v402, 4
        %v405 = vshll.u32 %v242, 16
        %v407 = vrot.slane %v405, 5
        %v408 = vor.u32 %v404, %v407
        %v409 = vrot.slane %v408, 4
        %v411 = vshll.u32 %v243, 16
        %v413 = vrot.slane %v411, 5
        %v414 = vsel %vm256, %v409, %v413
        %v415 = vshrl.u32 %v243, 16
        %v417 = vrot.slane %v415, 4
        %v418 = vor.u32 %v417, %v413
        %v419 = vrot.slane %v418, 4
        %v421 = vshll.u32 %v252, 16
        %v423 = vrot.slane %v421, 5
        %v424 = vsel %vm256, %v419, %v423
        %v426 = vshrl.u32 %v244, 16
        %v428 = vrot.slane %v426, 4
        %v429 = vshll.u32 %v244, 16
        %v431 = vrot.slane %v429, 5
        %v432 = vor.u32 %v428, %v431
        %v433 = vrot.slane %v432, 4
        %v435 = vshll.u32 %v245, 16
        %v437 = vrot.slane %v435, 5
        %v438 = vsel %vm256, %v433, %v437
        %v439 = vshrl.u32 %v245, 16
        %v441 = vrot.slane %v439, 4
        %v442 = vor.u32 %v441, %v437
        %v443 = vrot.slane %v442, 4
        %v445 = vshll.u32 %v253, 16
        %v447 = vrot.slane %v445, 5
        %v448 = vsel %vm256, %v443, %v447
        %s449 = sadd.s32 %s225, 1
        %s450 = smul.u32 %s449, 3
        %s451 = smul.addr %s450, 4
        %s452 = scalar_lea.vmem %s215, %s451
        %v453 = vld [vmem:[%s452] sm:$0xf]
        %v454 = vld [vmem:[%s452 + $0x4] sm:$0xf]
        %v455 = vld [vmem:[%s452 + $0xc] sm:$0xf]
        %v456 = vld [vmem:[%s452 + $0x10] sm:$0xf]
        %v457 = vld [vmem:[%s452 + $0x18] sm:$0xf]
        %v458 = vld [vmem:[%s452 + $0x1c] sm:$0xf]
        %v459 = vld [vmem:[%s452 + $0x24] sm:$0xf]
        %v460 = vld [vmem:[%s452 + $0x28] sm:$0xf]
        %v461 = vld [vmem:[%s452 + $0x30] sm:$0xf]
        %v462 = vld [vmem:[%s452 + $0x34] sm:$0xf]
        %v463 = vld [vmem:[%s452 + $0x3c] sm:$0xf]
        %v464 = vld [vmem:[%s452 + $0x40] sm:$0xf]
        %v465 = vld [vmem:[%s452 + $0x48] sm:$0xf]
        %v466 = vld [vmem:[%s452 + $0x4c] sm:$0xf]
        %v467 = vld [vmem:[%s452 + $0x54] sm:$0xf]
        %v468 = vld [vmem:[%s452 + $0x58] sm:$0xf]
        %v469 = vld [vmem:[%s452 + $0x8] sm:$0x1]
        %v470 = vld [vmem:[%s452 + $0x14] sm:$0x1]
        %v471 = vld [vmem:[%s452 + $0x20] sm:$0x1]
        %v472 = vld [vmem:[%s452 + $0x2c] sm:$0x1]
        %v473 = vld [vmem:[%s452 + $0x38] sm:$0x1]
        %v474 = vld [vmem:[%s452 + $0x44] sm:$0x1]
        %v475 = vld [vmem:[%s452 + $0x50] sm:$0x1]
        %v476 = vld [vmem:[%s452 + $0x5c] sm:$0x1]
        %v478 = vshrl.u32 %v453, 16
        %v480 = vrot.slane %v478, 4
        %v481 = vshll.u32 %v453, 16
        %v483 = vrot.slane %v481, 5
        %v484 = vor.u32 %v480, %v483
        %v485 = vrot.slane %v484, 4
        %v487 = vshll.u32 %v454, 16
        %v489 = vrot.slane %v487, 5
        %v490 = vsel %vm256, %v485, %v489
        %v491 = vshrl.u32 %v454, 16
        %v493 = vrot.slane %v491, 4
        %v494 = vor.u32 %v493, %v489
        %v495 = vrot.slane %v494, 4
        %v497 = vshll.u32 %v469, 16
        %v499 = vrot.slane %v497, 5
        %v500 = vsel %vm256, %v495, %v499
        %v502 = vshrl.u32 %v455, 16
        %v504 = vrot.slane %v502, 4
        %v505 = vshll.u32 %v455, 16
        %v507 = vrot.slane %v505, 5
        %v508 = vor.u32 %v504, %v507
        %v509 = vrot.slane %v508, 4
        %v511 = vshll.u32 %v456, 16
        %v513 = vrot.slane %v511, 5
        %v514 = vsel %vm256, %v509, %v513
        %v515 = vshrl.u32 %v456, 16
        %v517 = vrot.slane %v515, 4
        %v518 = vor.u32 %v517, %v513
        %v519 = vrot.slane %v518, 4
        %v521 = vshll.u32 %v470, 16
        %v523 = vrot.slane %v521, 5
        %v524 = vsel %vm256, %v519, %v523
        %v526 = vshrl.u32 %v457, 16
        %v528 = vrot.slane %v526, 4
        %v529 = vshll.u32 %v457, 16
        %v531 = vrot.slane %v529, 5
        %v532 = vor.u32 %v528, %v531
        %v533 = vrot.slane %v532, 4
        %v535 = vshll.u32 %v458, 16
        %v537 = vrot.slane %v535, 5
        %v538 = vsel %vm256, %v533, %v537
        %v539 = vshrl.u32 %v458, 16
        %v541 = vrot.slane %v539, 4
        %v542 = vor.u32 %v541, %v537
        %v543 = vrot.slane %v542, 4
        %v545 = vshll.u32 %v471, 16
        %v547 = vrot.slane %v545, 5
        %v548 = vsel %vm256, %v543, %v547
        %v550 = vshrl.u32 %v459, 16
        %v552 = vrot.slane %v550, 4
        %v553 = vshll.u32 %v459, 16
        %v555 = vrot.slane %v553, 5
        %v556 = vor.u32 %v552, %v555
        %v557 = vrot.slane %v556, 4
        %v559 = vshll.u32 %v460, 16
        %v561 = vrot.slane %v559, 5
        %v562 = vsel %vm256, %v557, %v561
        %v563 = vshrl.u32 %v460, 16
        %v565 = vrot.slane %v563, 4
        %v566 = vor.u32 %v565, %v561
        %v567 = vrot.slane %v566, 4
        %v569 = vshll.u32 %v472, 16
        %v571 = vrot.slane %v569, 5
        %v572 = vsel %vm256, %v567, %v571
        %v574 = vshrl.u32 %v461, 16
        %v576 = vrot.slane %v574, 4
        %v577 = vshll.u32 %v461, 16
        %v579 = vrot.slane %v577, 5
        %v580 = vor.u32 %v576, %v579
        %v581 = vrot.slane %v580, 4
        %v583 = vshll.u32 %v462, 16
        %v585 = vrot.slane %v583, 5
        %v586 = vsel %vm256, %v581, %v585
        %v587 = vshrl.u32 %v462, 16
        %v589 = vrot.slane %v587, 4
        %v590 = vor.u32 %v589, %v585
        %v591 = vrot.slane %v590, 4
        %v593 = vshll.u32 %v473, 16
        %v595 = vrot.slane %v593, 5
        %v596 = vsel %vm256, %v591, %v595
        %v598 = vshrl.u32 %v463, 16
        %v600 = vrot.slane %v598, 4
        %v601 = vshll.u32 %v463, 16
        %v603 = vrot.slane %v601, 5
        %v604 = vor.u32 %v600, %v603
        %v605 = vrot.slane %v604, 4
        %v607 = vshll.u32 %v464, 16
        %v609 = vrot.slane %v607, 5
        %v610 = vsel %vm256, %v605, %v609
        %v611 = vshrl.u32 %v464, 16
        %v613 = vrot.slane %v611, 4
        %v614 = vor.u32 %v613, %v609
        %v615 = vrot.slane %v614, 4
        %v617 = vshll.u32 %v474, 16
        %v619 = vrot.slane %v617, 5
        %v620 = vsel %vm256, %v615, %v619
        %v622 = vshrl.u32 %v465, 16
        %v624 = vrot.slane %v622, 4
        %v625 = vshll.u32 %v465, 16
        %v627 = vrot.slane %v625, 5
        %v628 = vor.u32 %v624, %v627
        %v629 = vrot.slane %v628, 4
        %v631 = vshll.u32 %v466, 16
        %v633 = vrot.slane %v631, 5
        %v634 = vsel %vm256, %v629, %v633
        %v635 = vshrl.u32 %v466, 16
        %v637 = vrot.slane %v635, 4
        %v638 = vor.u32 %v637, %v633
        %v639 = vrot.slane %v638, 4
        %v641 = vshll.u32 %v475, 16
        %v643 = vrot.slane %v641, 5
        %v644 = vsel %vm256, %v639, %v643
        %v646 = vshrl.u32 %v467, 16
        %v648 = vrot.slane %v646, 4
        %v649 = vshll.u32 %v467, 16
        %v651 = vrot.slane %v649, 5
        %v652 = vor.u32 %v648, %v651
        %v653 = vrot.slane %v652, 4
        %v655 = vshll.u32 %v468, 16
        %v657 = vrot.slane %v655, 5
        %v658 = vsel %vm256, %v653, %v657
        %v659 = vshrl.u32 %v468, 16
        %v661 = vrot.slane %v659, 4
        %v662 = vor.u32 %v661, %v657
        %v663 = vrot.slane %v662, 4
        %v665 = vshll.u32 %v476, 16
        %v667 = vrot.slane %v665, 5
        %v668 = vsel %vm256, %v663, %v667
        %v685 = vunpack.c.l.b16 %v230
        %v686 = vunpack.c.l.b16 %v231
        %v687 = vunpack.c.l.b16 %v232
        %v688 = vunpack.c.l.b16 %v233
        %v689 = vunpack.c.l.b16 %v234
        %v690 = vunpack.c.l.b16 %v235
        %v691 = vunpack.c.l.b16 %v236
        %v692 = vunpack.c.l.b16 %v237
        %v693 = vunpack.c.l.b16 %v238
        %v694 = vunpack.c.l.b16 %v239
        %v695 = vunpack.c.l.b16 %v240
        %v696 = vunpack.c.l.b16 %v241
        %v697 = vunpack.c.l.b16 %v242
        %v698 = vunpack.c.l.b16 %v243
        %v699 = vunpack.c.l.b16 %v244
        %v700 = vunpack.c.l.b16 %v245
        %v701 = vpack.c.b16 %v686, %v685
        %v702 = vpack.c.b16 %v688, %v687
        %v703 = vpack.c.b16 %v690, %v689
        %v704 = vpack.c.b16 %v692, %v691
        %v705 = vpack.c.b16 %v694, %v693
        %v706 = vpack.c.b16 %v696, %v695
        %v707 = vpack.c.b16 %v698, %v697
        %v708 = vpack.c.b16 %v700, %v699
        %v709 = vunpack.c.l.b16 %v270
        %v710 = vunpack.c.l.b16 %v280
        %v711 = vunpack.c.l.b16 %v294
        %v712 = vunpack.c.l.b16 %v304
        %v713 = vunpack.c.l.b16 %v318
        %v714 = vunpack.c.l.b16 %v328
        %v715 = vunpack.c.l.b16 %v342
        %v716 = vunpack.c.l.b16 %v352
        %v717 = vunpack.c.l.b16 %v366
        %v718 = vunpack.c.l.b16 %v376
        %v719 = vunpack.c.l.b16 %v390
        %v720 = vunpack.c.l.b16 %v400
        %v721 = vunpack.c.l.b16 %v414
        %v722 = vunpack.c.l.b16 %v424
        %v723 = vunpack.c.l.b16 %v438
        %v724 = vunpack.c.l.b16 %v448
        %v725 = vpack.c.b16 %v710, %v709
        %v726 = vpack.c.b16 %v712, %v711
        %v727 = vpack.c.b16 %v714, %v713
        %v728 = vpack.c.b16 %v716, %v715
        %v729 = vpack.c.b16 %v718, %v717
        %v730 = vpack.c.b16 %v720, %v719
        %v731 = vpack.c.b16 %v722, %v721
        %v732 = vpack.c.b16 %v724, %v723
        %733 = vrot.lane.b32.xlu0 %v725, 4
        %v734 = vpop.permute.xlu0 %733
        %735 = vrot.lane.b32.xlu0 %v726, 4
        %v736 = vpop.permute.xlu0 %735
        %737 = vrot.lane.b32.xlu0 %v727, 4
        %v738 = vpop.permute.xlu0 %737
        %739 = vrot.lane.b32.xlu0 %v728, 4
        %v740 = vpop.permute.xlu0 %739
        %741 = vrot.lane.b32.xlu0 %v729, 4
        %v742 = vpop.permute.xlu0 %741
        %743 = vrot.lane.b32.xlu0 %v730, 4
        %v744 = vpop.permute.xlu0 %743
        %745 = vrot.lane.b32.xlu0 %v731, 4
        %v746 = vpop.permute.xlu0 %745
        %747 = vrot.lane.b32.xlu0 %v732, 4
        %v748 = vpop.permute.xlu0 %747
        %v765 = vunpack.c.l.b16 %v453
        %v766 = vunpack.c.l.b16 %v454
        %v767 = vunpack.c.l.b16 %v455
        %v768 = vunpack.c.l.b16 %v456
        %v769 = vunpack.c.l.b16 %v457
        %v770 = vunpack.c.l.b16 %v458
        %v771 = vunpack.c.l.b16 %v459
        %v772 = vunpack.c.l.b16 %v460
        %v773 = vunpack.c.l.b16 %v461
        %v774 = vunpack.c.l.b16 %v462
        %v775 = vunpack.c.l.b16 %v463
        %v776 = vunpack.c.l.b16 %v464
        %v777 = vunpack.c.l.b16 %v465
        %v778 = vunpack.c.l.b16 %v466
        %v779 = vunpack.c.l.b16 %v467
        %v780 = vunpack.c.l.b16 %v468
        %v781 = vpack.c.b16 %v766, %v765
        %v782 = vpack.c.b16 %v768, %v767
        %v783 = vpack.c.b16 %v770, %v769
        %v784 = vpack.c.b16 %v772, %v771
        %v785 = vpack.c.b16 %v774, %v773
        %v786 = vpack.c.b16 %v776, %v775
        %v787 = vpack.c.b16 %v778, %v777
        %v788 = vpack.c.b16 %v780, %v779
        %789 = vrot.lane.b32.xlu0 %v781, 8
        %v790 = vpop.permute.xlu0 %789
        %791 = vrot.lane.b32.xlu0 %v782, 8
        %v792 = vpop.permute.xlu0 %791
        %793 = vrot.lane.b32.xlu0 %v783, 8
        %v794 = vpop.permute.xlu0 %793
        %795 = vrot.lane.b32.xlu0 %v784, 8
        %v796 = vpop.permute.xlu0 %795
        %797 = vrot.lane.b32.xlu0 %v785, 8
        %v798 = vpop.permute.xlu0 %797
        %799 = vrot.lane.b32.xlu0 %v786, 8
        %v800 = vpop.permute.xlu0 %799
        %801 = vrot.lane.b32.xlu0 %v787, 8
        %v802 = vpop.permute.xlu0 %801
        %803 = vrot.lane.b32.xlu0 %v788, 8
        %v804 = vpop.permute.xlu0 %803
        %v805 = vunpack.c.l.b16 %v490
        %v806 = vunpack.c.l.b16 %v500
        %v807 = vunpack.c.l.b16 %v514
        %v808 = vunpack.c.l.b16 %v524
        %v809 = vunpack.c.l.b16 %v538
        %v810 = vunpack.c.l.b16 %v548
        %v811 = vunpack.c.l.b16 %v562
        %v812 = vunpack.c.l.b16 %v572
        %v813 = vunpack.c.l.b16 %v586
        %v814 = vunpack.c.l.b16 %v596
        %v815 = vunpack.c.l.b16 %v610
        %v816 = vunpack.c.l.b16 %v620
        %v817 = vunpack.c.l.b16 %v634
        %v818 = vunpack.c.l.b16 %v644
        %v819 = vunpack.c.l.b16 %v658
        %v820 = vunpack.c.l.b16 %v668
        %v821 = vpack.c.b16 %v806, %v805
        %v822 = vpack.c.b16 %v808, %v807
        %v823 = vpack.c.b16 %v810, %v809
        %v824 = vpack.c.b16 %v812, %v811
        %v825 = vpack.c.b16 %v814, %v813
        %v826 = vpack.c.b16 %v816, %v815
        %v827 = vpack.c.b16 %v818, %v817
        %v828 = vpack.c.b16 %v820, %v819
        %829 = vrot.lane.b32.xlu0 %v821, 12
        %v830 = vpop.permute.xlu0 %829
        %831 = vrot.lane.b32.xlu0 %v822, 12
        %v832 = vpop.permute.xlu0 %831
        %833 = vrot.lane.b32.xlu0 %v823, 12
        %v834 = vpop.permute.xlu0 %833
        %835 = vrot.lane.b32.xlu0 %v824, 12
        %v836 = vpop.permute.xlu0 %835
        %837 = vrot.lane.b32.xlu0 %v825, 12
        %v838 = vpop.permute.xlu0 %837
        %839 = vrot.lane.b32.xlu0 %v826, 12
        %v840 = vpop.permute.xlu0 %839
        %841 = vrot.lane.b32.xlu0 %v827, 12
        %v842 = vpop.permute.xlu0 %841
        %843 = vrot.lane.b32.xlu0 %v828, 12
        %v844 = vpop.permute.xlu0 %843
        %vm845 = vcmask 31744
        %v848 = vsel %vm845, %v701, %v734
        %v851 = vsel %vm845, %v702, %v736
        %v854 = vsel %vm845, %v703, %v738
        %v857 = vsel %vm845, %v704, %v740
        %v860 = vsel %vm845, %v705, %v742
        %v863 = vsel %vm845, %v706, %v744
        %v866 = vsel %vm845, %v707, %v746
        %v869 = vsel %vm845, %v708, %v748
        %vm870 = vcmask 64512
        %v872 = vsel %vm870, %v848, %v790
        %v874 = vsel %vm870, %v851, %v792
        %v876 = vsel %vm870, %v854, %v794
        %v878 = vsel %vm870, %v857, %v796
        %v880 = vsel %vm870, %v860, %v798
        %v882 = vsel %vm870, %v863, %v800
        %v884 = vsel %vm870, %v866, %v802
        %v886 = vsel %vm870, %v869, %v804
        %vm887 = vcmask 97280
        %v889 = vsel %vm887, %v872, %v830
        %v891 = vsel %vm887, %v874, %v832
        %v893 = vsel %vm887, %v876, %v834
        %v895 = vsel %vm887, %v878, %v836
        %v897 = vsel %vm887, %v880, %v838
        %v899 = vsel %vm887, %v882, %v840
        %v901 = vsel %vm887, %v884, %v842
        %v903 = vsel %vm887, %v886, %v844
        %v904 = vld [vmem:[%s219] sm:$0xf]
        %v905 = vld [vmem:[%s219 + $0x4] sm:$0xf]
        %v907 = vlaneseq
        %v908 = vshrl.u32 %v907, 7
        %v909 = vsub.s32 0, %v908
        %v910 = vrot.slane %v226, %v909
        %v914 = vunpack.c.l.b16 %v904
        %v915 = vunpack.c.l.b16 %v905
        %v916 = vpack.c.b16 %v915, %v914
        %vm918 = vcmask 130048
        %v919 = vsel %vm918, %v889, 0
        %v921 = vsel %vm918, %v891, 0
        %v923 = vsel %vm918, %v893, 0
        %v925 = vsel %vm918, %v895, 0
        %v927 = vsel %vm918, %v897, 0
        %v929 = vsel %vm918, %v899, 0
        %v931 = vsel %vm918, %v901, 0
        %v933 = vsel %vm918, %v903, 0
        %935 = vmatprep.subr.bf16.mxu0 0
        %936 = vmatpush1.bf16.msra.mxu0 %v916
        %937 = vmatprep.subr.bf16.mxu0 0
        %938 = vmatpush1.bf16.msra.mxu0 0
        %939 = vmatprep.subr.bf16.mxu0 0
        %940 = vmatpush1.bf16.msra.mxu0 0
        %941 = vmatprep.subr.bf16.mxu0 0
        %942 = vmatpush1.bf16.msra.mxu0 0
        %943 = vmatprep.subr.bf16.mxu0 0
        %944 = vmatpush1.bf16.msra.mxu0 0
        %945 = vmatprep.subr.bf16.mxu0 0
        %946 = vmatpush1.bf16.msra.mxu0 0
        %947 = vmatprep.subr.bf16.mxu0 0
        %948 = vmatpush1.bf16.msra.mxu0 0
        %949 = vmatprep.subr.bf16.mxu0 0
        %950 = vmatpush1.bf16.msra.mxu0 0
        %951 = vmatprep.subr.bf16.mxu0 0
        %952 = vmatpush1.bf16.msra.mxu0 0
        %953 = vmatprep.subr.bf16.mxu0 0
        %954 = vmatpush1.bf16.msra.mxu0 0
        %955 = vmatprep.subr.bf16.mxu0 0
        %956 = vmatpush1.bf16.msra.mxu0 0
        %957 = vmatprep.subr.bf16.mxu0 0
        %958 = vmatpush1.bf16.msra.mxu0 0
        %959 = vmatprep.subr.bf16.mxu0 0
        %960 = vmatpush1.bf16.msra.mxu0 0
        %961 = vmatprep.subr.bf16.mxu0 0
        %962 = vmatpush1.bf16.msra.mxu0 0
        %963 = vmatprep.subr.bf16.mxu0 0
        %964 = vmatpush1.bf16.msra.mxu0 0
        %965 = vmatprep.subr.bf16.mxu0 0
        %966 = vmatpush1.bf16.msra.mxu0 0
        %967 = vmatprep.mubr.bf16.mxu0 0
        %968 = vmatmul.mubr.bf16.gmra.mrb[0].mxu0 %v919
        %v969 = vpop.f32.mrb[0].mxu0
        %v970 = vadd.f32 %v910, %v969
        %v971 = vpop.f32.mrb[0].mxu0
        %v972 = vpop.f32.mrb[0].mxu0
        %v973 = vadd.f32 %v910, %v972
        %v974 = vpop.f32.mrb[0].mxu0
        %975 = vmatprep.mubr.bf16.mxu0 0
        %976 = vmatmul.mubr.bf16.gmra.mrb[0].mxu0 %v921
        %v977 = vpop.f32.mrb[0].mxu0
        %v978 = vadd.f32 %v910, %v977
        %v979 = vpop.f32.mrb[0].mxu0
        %v980 = vpop.f32.mrb[0].mxu0
        %v981 = vadd.f32 %v910, %v980
        %v982 = vpop.f32.mrb[0].mxu0
        %983 = vmatprep.mubr.bf16.mxu0 0
        %984 = vmatmul.mubr.bf16.gmra.mrb[0].mxu0 %v923
        %v985 = vpop.f32.mrb[0].mxu0
        %v986 = vadd.f32 %v910, %v985
        %v987 = vpop.f32.mrb[0].mxu0
        %v988 = vpop.f32.mrb[0].mxu0
        %v989 = vadd.f32 %v910, %v988
        %v990 = vpop.f32.mrb[0].mxu0
        %991 = vmatprep.mubr.bf16.mxu0 0
        %992 = vmatmul.mubr.bf16.gmra.mrb[0].mxu0 %v925
        %v993 = vpop.f32.mrb[0].mxu0
        %v994 = vadd.f32 %v910, %v993
        %v995 = vpop.f32.mrb[0].mxu0
        %v996 = vpop.f32.mrb[0].mxu0
        %v997 = vadd.f32 %v910, %v996
        %v998 = vpop.f32.mrb[0].mxu0
        %999 = vmatprep.mubr.bf16.mxu0 0
        %1000 = vmatmul.mubr.bf16.gmra.mrb[0].mxu0 %v927
        %v1001 = vpop.f32.mrb[0].mxu0
        %v1002 = vadd.f32 %v910, %v1001
        %v1003 = vpop.f32.mrb[0].mxu0
        %v1004 = vpop.f32.mrb[0].mxu0
        %v1005 = vadd.f32 %v910, %v1004
        %v1006 = vpop.f32.mrb[0].mxu0
        %1007 = vmatprep.mubr.bf16.mxu0 0
        %1008 = vmatmul.mubr.bf16.gmra.mrb[0].mxu0 %v929
        %v1009 = vpop.f32.mrb[0].mxu0
        %v1010 = vadd.f32 %v910, %v1009
        %v1011 = vpop.f32.mrb[0].mxu0
        %v1012 = vpop.f32.mrb[0].mxu0
        %v1013 = vadd.f32 %v910, %v1012
        %v1014 = vpop.f32.mrb[0].mxu0
        %1015 = vmatprep.mubr.bf16.mxu0 0
        %1016 = vmatmul.mubr.bf16.gmra.mrb[0].mxu0 %v931
        %v1017 = vpop.f32.mrb[0].mxu0
        %v1018 = vadd.f32 %v910, %v1017
        %v1019 = vpop.f32.mrb[0].mxu0
        %v1020 = vpop.f32.mrb[0].mxu0
        %v1021 = vadd.f32 %v910, %v1020
        %v1022 = vpop.f32.mrb[0].mxu0
        %1023 = vmatprep.mubr.bf16.mxu0 0
        %1024 = vmatmul.mubr.bf16.gmra.mrb[0].mxu0 %v933
        %v1025 = vpop.f32.mrb[0].mxu0
        %v1026 = vadd.f32 %v910, %v1025
        %v1027 = vpop.f32.mrb[0].mxu0
        %v1028 = vpop.f32.mrb[0].mxu0
        %v1029 = vadd.f32 %v910, %v1028
        %v1030 = vpop.f32.mrb[0].mxu0
        %1031 = vdwg.mxu0
        %v1032 = vpack.c.bf16 %v973, %v970
        %v1033 = vpack.c.bf16 %v981, %v978
        %v1034 = vpack.c.bf16 %v989, %v986
        %v1035 = vpack.c.bf16 %v997, %v994
        %v1036 = vpack.c.bf16 %v1005, %v1002
        %v1037 = vpack.c.bf16 %v1013, %v1010
        %v1038 = vpack.c.bf16 %v1021, %v1018
        %v1039 = vpack.c.bf16 %v1029, %v1026
        %v1048 = vunpack.c.l.b16 %v1032
        %v1049 = vunpack.c.h.b16 %v1032
        %v1050 = vunpack.c.l.b16 %v1033
        %v1051 = vunpack.c.h.b16 %v1033
        %v1052 = vunpack.c.l.b16 %v1034
        %v1053 = vunpack.c.h.b16 %v1034
        %v1054 = vunpack.c.l.b16 %v1035
        %v1055 = vunpack.c.h.b16 %v1035
        %v1056 = vunpack.c.l.b16 %v1036
        %v1057 = vunpack.c.h.b16 %v1036
        %v1058 = vunpack.c.l.b16 %v1037
        %v1059 = vunpack.c.h.b16 %v1037
        %v1060 = vunpack.c.l.b16 %v1038
        %v1061 = vunpack.c.h.b16 %v1038
        %v1062 = vunpack.c.l.b16 %v1039
        %v1063 = vunpack.c.h.b16 %v1039
        %v1064 = vpack.c.b16 %v1048, %v1048
        %v1065 = vpack.c.b16 %v1049, %v1049
        %v1066 = vpack.c.b16 %v1050, %v1050
        %v1067 = vpack.c.b16 %v1051, %v1051
        %v1068 = vpack.c.b16 %v1052, %v1052
        %v1069 = vpack.c.b16 %v1053, %v1053
        %v1070 = vpack.c.b16 %v1054, %v1054
        %v1071 = vpack.c.b16 %v1055, %v1055
        %v1072 = vpack.c.b16 %v1056, %v1056
        %v1073 = vpack.c.b16 %v1057, %v1057
        %v1074 = vpack.c.b16 %v1058, %v1058
        %v1075 = vpack.c.b16 %v1059, %v1059
        %v1076 = vpack.c.b16 %v1060, %v1060
        %v1077 = vpack.c.b16 %v1061, %v1061
        %v1078 = vpack.c.b16 %v1062, %v1062
        %v1079 = vpack.c.b16 %v1063, %v1063
        %1096 = vst [vmem:[%s210] sm:$0xf] %v1064
        %1097 = vst [vmem:[%s210 + $0x4] sm:$0xf] %v1065
        %1098 = vst [vmem:[%s210 + $0x8] sm:$0xf] %v1066
        %1099 = vst [vmem:[%s210 + $0xc] sm:$0xf] %v1067
        %1100 = vst [vmem:[%s210 + $0x10] sm:$0xf] %v1068
        %1101 = vst [vmem:[%s210 + $0x14] sm:$0xf] %v1069
        %1102 = vst [vmem:[%s210 + $0x18] sm:$0xf] %v1070
        %1103 = vst [vmem:[%s210 + $0x1c] sm:$0xf] %v1071
        %1104 = vst [vmem:[%s210 + $0x20] sm:$0xf] %v1072
        %1105 = vst [vmem:[%s210 + $0x24] sm:$0xf] %v1073
        %1106 = vst [vmem:[%s210 + $0x28] sm:$0xf] %v1074
        %1107 = vst [vmem:[%s210 + $0x2c] sm:$0xf] %v1075
        %1108 = vst [vmem:[%s210 + $0x30] sm:$0xf] %v1076
        %1109 = vst [vmem:[%s210 + $0x34] sm:$0xf] %v1077
        %1110 = vst [vmem:[%s210 + $0x38] sm:$0xf] %v1078
        %1111 = vst [vmem:[%s210 + $0x3c] sm:$0xf] %v1079
        %v1112 = vld [vmem:[%s229] sm:$0xf]
        %v1113 = vld [vmem:[%s229 + $0x4] sm:$0xf]
        %v1114 = vld [vmem:[%s229 + $0x8] sm:$0x1]
        %v1115 = vld [vmem:[%s229 + $0xc] sm:$0xf]
        %v1116 = vld [vmem:[%s229 + $0x10] sm:$0xf]
        %v1117 = vld [vmem:[%s229 + $0x14] sm:$0x1]
        %v1118 = vld [vmem:[%s229 + $0x18] sm:$0xf]
        %v1119 = vld [vmem:[%s229 + $0x1c] sm:$0xf]
        %v1120 = vld [vmem:[%s229 + $0x20] sm:$0x1]
        %v1121 = vld [vmem:[%s229 + $0x24] sm:$0xf]
        %v1122 = vld [vmem:[%s229 + $0x28] sm:$0xf]
        %v1123 = vld [vmem:[%s229 + $0x2c] sm:$0x1]
        %v1124 = vld [vmem:[%s229 + $0x30] sm:$0xf]
        %v1125 = vld [vmem:[%s229 + $0x34] sm:$0xf]
        %v1126 = vld [vmem:[%s229 + $0x38] sm:$0x1]
        %v1127 = vld [vmem:[%s229 + $0x3c] sm:$0xf]
        %v1128 = vld [vmem:[%s229 + $0x40] sm:$0xf]
        %v1129 = vld [vmem:[%s229 + $0x44] sm:$0x1]
        %v1130 = vld [vmem:[%s229 + $0x48] sm:$0xf]
        %v1131 = vld [vmem:[%s229 + $0x4c] sm:$0xf]
        %v1132 = vld [vmem:[%s229 + $0x50] sm:$0x1]
        %v1133 = vld [vmem:[%s229 + $0x54] sm:$0xf]
        %v1134 = vld [vmem:[%s229 + $0x58] sm:$0xf]
        %v1135 = vld [vmem:[%s229 + $0x5c] sm:$0x1]
        %v1137 = vshrl.u32 %v1112, 16
        %v1139 = vrot.slane %v1137, 4
        %v1140 = vshll.u32 %v1112, 16
        %v1142 = vrot.slane %v1140, 5
        %v1143 = vor.u32 %v1139, %v1142
        %v1144 = vrot.slane %v1143, 4
        %v1146 = vshll.u32 %v1113, 16
        %v1148 = vrot.slane %v1146, 5
        %v1149 = vsel %vm256, %v1144, %v1148
        %v1150 = vshrl.u32 %v1113, 16
        %v1152 = vrot.slane %v1150, 4
        %v1153 = vor.u32 %v1152, %v1148
        %v1154 = vrot.slane %v1153, 4
        %v1156 = vshll.u32 %v1114, 16
        %v1158 = vrot.slane %v1156, 5
        %v1159 = vsel %vm256, %v1154, %v1158
        %v1161 = vshrl.u32 %v1115, 16
        %v1163 = vrot.slane %v1161, 4
        %v1164 = vshll.u32 %v1115, 16
        %v1166 = vrot.slane %v1164, 5
        %v1167 = vor.u32 %v1163, %v1166
        %v1168 = vrot.slane %v1167, 4
        %v1170 = vshll.u32 %v1116, 16
        %v1172 = vrot.slane %v1170, 5
        %v1173 = vsel %vm256, %v1168, %v1172
        %v1174 = vshrl.u32 %v1116, 16
        %v1176 = vrot.slane %v1174, 4
        %v1177 = vor.u32 %v1176, %v1172
        %v1178 = vrot.slane %v1177, 4
        %v1180 = vshll.u32 %v1117, 16
        %v1182 = vrot.slane %v1180, 5
        %v1183 = vsel %vm256, %v1178, %v1182
        %v1185 = vshrl.u32 %v1118, 16
        %v1187 = vrot.slane %v1185, 4
        %v1188 = vshll.u32 %v1118, 16
        %v1190 = vrot.slane %v1188, 5
        %v1191 = vor.u32 %v1187, %v1190
        %v1192 = vrot.slane %v1191, 4
        %v1194 = vshll.u32 %v1119, 16
        %v1196 = vrot.slane %v1194, 5
        %v1197 = vsel %vm256, %v1192, %v1196
        %v1198 = vshrl.u32 %v1119, 16
        %v1200 = vrot.slane %v1198, 4
        %v1201 = vor.u32 %v1200, %v1196
        %v1202 = vrot.slane %v1201, 4
        %v1204 = vshll.u32 %v1120, 16
        %v1206 = vrot.slane %v1204, 5
        %v1207 = vsel %vm256, %v1202, %v1206
        %v1209 = vshrl.u32 %v1121, 16
        %v1211 = vrot.slane %v1209, 4
        %v1212 = vshll.u32 %v1121, 16
        %v1214 = vrot.slane %v1212, 5
        %v1215 = vor.u32 %v1211, %v1214
        %v1216 = vrot.slane %v1215, 4
        %v1218 = vshll.u32 %v1122, 16
        %v1220 = vrot.slane %v1218, 5
        %v1221 = vsel %vm256, %v1216, %v1220
        %v1222 = vshrl.u32 %v1122, 16
        %v1224 = vrot.slane %v1222, 4
        %v1225 = vor.u32 %v1224, %v1220
        %v1226 = vrot.slane %v1225, 4
        %v1228 = vshll.u32 %v1123, 16
        %v1230 = vrot.slane %v1228, 5
        %v1231 = vsel %vm256, %v1226, %v1230
        %v1233 = vshrl.u32 %v1124, 16
        %v1235 = vrot.slane %v1233, 4
        %v1236 = vshll.u32 %v1124, 16
        %v1238 = vrot.slane %v1236, 5
        %v1239 = vor.u32 %v1235, %v1238
        %v1240 = vrot.slane %v1239, 4
        %v1242 = vshll.u32 %v1125, 16
        %v1244 = vrot.slane %v1242, 5
        %v1245 = vsel %vm256, %v1240, %v1244
        %v1246 = vshrl.u32 %v1125, 16
        %v1248 = vrot.slane %v1246, 4
        %v1249 = vor.u32 %v1248, %v1244
        %v1250 = vrot.slane %v1249, 4
        %v1252 = vshll.u32 %v1126, 16
        %v1254 = vrot.slane %v1252, 5
        %v1255 = vsel %vm256, %v1250, %v1254
        %v1257 = vshrl.u32 %v1127, 16
        %v1259 = vrot.slane %v1257, 4
        %v1260 = vshll.u32 %v1127, 16
        %v1262 = vrot.slane %v1260, 5
        %v1263 = vor.u32 %v1259, %v1262
        %v1264 = vrot.slane %v1263, 4
        %v1266 = vshll.u32 %v1128, 16
        %v1268 = vrot.slane %v1266, 5
        %v1269 = vsel %vm256, %v1264, %v1268
        %v1270 = vshrl.u32 %v1128, 16
        %v1272 = vrot.slane %v1270, 4
        %v1273 = vor.u32 %v1272, %v1268
        %v1274 = vrot.slane %v1273, 4
        %v1276 = vshll.u32 %v1129, 16
        %v1278 = vrot.slane %v1276, 5
        %v1279 = vsel %vm256, %v1274, %v1278
        %v1281 = vshrl.u32 %v1130, 16
        %v1283 = vrot.slane %v1281, 4
        %v1284 = vshll.u32 %v1130, 16
        %v1286 = vrot.slane %v1284, 5
        %v1287 = vor.u32 %v1283, %v1286
        %v1288 = vrot.slane %v1287, 4
        %v1290 = vshll.u32 %v1131, 16
        %v1292 = vrot.slane %v1290, 5
        %v1293 = vsel %vm256, %v1288, %v1292
        %v1294 = vshrl.u32 %v1131, 16
        %v1296 = vrot.slane %v1294, 4
        %v1297 = vor.u32 %v1296, %v1292
        %v1298 = vrot.slane %v1297, 4
        %v1300 = vshll.u32 %v1132, 16
        %v1302 = vrot.slane %v1300, 5
        %v1303 = vsel %vm256, %v1298, %v1302
        %v1305 = vshrl.u32 %v1133, 16
        %v1307 = vrot.slane %v1305, 4
        %v1308 = vshll.u32 %v1133, 16
        %v1310 = vrot.slane %v1308, 5
        %v1311 = vor.u32 %v1307, %v1310
        %v1312 = vrot.slane %v1311, 4
        %v1314 = vshll.u32 %v1134, 16
        %v1316 = vrot.slane %v1314, 5
        %v1317 = vsel %vm256, %v1312, %v1316
        %v1318 = vshrl.u32 %v1134, 16
        %v1320 = vrot.slane %v1318, 4
        %v1321 = vor.u32 %v1320, %v1316
        %v1322 = vrot.slane %v1321, 4
        %v1324 = vshll.u32 %v1135, 16
        %v1326 = vrot.slane %v1324, 5
        %v1327 = vsel %vm256, %v1322, %v1326
        %v1328 = vld [vmem:[%s229] sm:$0xe]
        %v1329 = vld [vmem:[%s229 + $0xc] sm:$0xe]
        %v1330 = vld [vmem:[%s229 + $0x18] sm:$0xe]
        %v1331 = vld [vmem:[%s229 + $0x24] sm:$0xe]
        %v1332 = vld [vmem:[%s229 + $0x30] sm:$0xe]
        %v1333 = vld [vmem:[%s229 + $0x3c] sm:$0xe]
        %v1334 = vld [vmem:[%s229 + $0x48] sm:$0xe]
        %v1335 = vld [vmem:[%s229 + $0x54] sm:$0xe]
        %vm1360 = vcmask 1042432
        %vm1361 = vcmask 1046532
        %vm1362 = vmor %vm1360, %vm1361
        %v1363 = vrot.slane %v1328, 5
        %v1364 = vrot.slane %v1363, 4
        %v1365 = vrot.slane %v1113, 5
        %v1366 = vsel %vm1362, %v1364, %v1365
        %v1367 = vrot.slane %v1365, 4
        %v1368 = vrot.slane %v1114, 5
        %v1369 = vsel %vm1362, %v1367, %v1368
        %v1370 = vrot.slane %v1329, 5
        %v1371 = vrot.slane %v1370, 4
        %v1372 = vrot.slane %v1116, 5
        %v1373 = vsel %vm1362, %v1371, %v1372
        %v1374 = vrot.slane %v1372, 4
        %v1375 = vrot.slane %v1117, 5
        %v1376 = vsel %vm1362, %v1374, %v1375
        %v1377 = vrot.slane %v1330, 5
        %v1378 = vrot.slane %v1377, 4
        %v1379 = vrot.slane %v1119, 5
        %v1380 = vsel %vm1362, %v1378, %v1379
        %v1381 = vrot.slane %v1379, 4
        %v1382 = vrot.slane %v1120, 5
        %v1383 = vsel %vm1362, %v1381, %v1382
        %v1384 = vrot.slane %v1331, 5
        %v1385 = vrot.slane %v1384, 4
        %v1386 = vrot.slane %v1122, 5
        %v1387 = vsel %vm1362, %v1385, %v1386
        %v1388 = vrot.slane %v1386, 4
        %v1389 = vrot.slane %v1123, 5
        %v1390 = vsel %vm1362, %v1388, %v1389
        %v1391 = vrot.slane %v1332, 5
        %v1392 = vrot.slane %v1391, 4
        %v1393 = vrot.slane %v1125, 5
        %v1394 = vsel %vm1362, %v1392, %v1393
        %v1395 = vrot.slane %v1393, 4
        %v1396 = vrot.slane %v1126, 5
        %v1397 = vsel %vm1362, %v1395, %v1396
        %v1398 = vrot.slane %v1333, 5
        %v1399 = vrot.slane %v1398, 4
        %v1400 = vrot.slane %v1128, 5
        %v1401 = vsel %vm1362, %v1399, %v1400
        %v1402 = vrot.slane %v1400, 4
        %v1403 = vrot.slane %v1129, 5
        %v1404 = vsel %vm1362, %v1402, %v1403
        %v1405 = vrot.slane %v1334, 5
        %v1406 = vrot.slane %v1405, 4
        %v1407 = vrot.slane %v1131, 5
        %v1408 = vsel %vm1362, %v1406, %v1407
        %v1409 = vrot.slane %v1407, 4
        %v1410 = vrot.slane %v1132, 5
        %v1411 = vsel %vm1362, %v1409, %v1410
        %v1412 = vrot.slane %v1335, 5
        %v1413 = vrot.slane %v1412, 4
        %v1414 = vrot.slane %v1134, 5
        %v1415 = vsel %vm1362, %v1413, %v1414
        %v1416 = vrot.slane %v1414, 4
        %v1417 = vrot.slane %v1135, 5
        %v1418 = vsel %vm1362, %v1416, %v1417
        %v1419 = vld [vmem:[%s452] sm:$0xf]
        %v1420 = vld [vmem:[%s452 + $0x4] sm:$0xf]
        %v1421 = vld [vmem:[%s452 + $0x8] sm:$0x1]
        %v1422 = vld [vmem:[%s452 + $0xc] sm:$0xf]
        %v1423 = vld [vmem:[%s452 + $0x10] sm:$0xf]
        %v1424 = vld [vmem:[%s452 + $0x14] sm:$0x1]
        %v1425 = vld [vmem:[%s452 + $0x18] sm:$0xf]
        %v1426 = vld [vmem:[%s452 + $0x1c] sm:$0xf]
        %v1427 = vld [vmem:[%s452 + $0x20] sm:$0x1]
        %v1428 = vld [vmem:[%s452 + $0x24] sm:$0xf]
        %v1429 = vld [vmem:[%s452 + $0x28] sm:$0xf]
        %v1430 = vld [vmem:[%s452 + $0x2c] sm:$0x1]
        %v1431 = vld [vmem:[%s452 + $0x30] sm:$0xf]
        %v1432 = vld [vmem:[%s452 + $0x34] sm:$0xf]
        %v1433 = vld [vmem:[%s452 + $0x38] sm:$0x1]
        %v1434 = vld [vmem:[%s452 + $0x3c] sm:$0xf]
        %v1435 = vld [vmem:[%s452 + $0x40] sm:$0xf]
        %v1436 = vld [vmem:[%s452 + $0x44] sm:$0x1]
        %v1437 = vld [vmem:[%s452 + $0x48] sm:$0xf]
        %v1438 = vld [vmem:[%s452 + $0x4c] sm:$0xf]
        %v1439 = vld [vmem:[%s452 + $0x50] sm:$0x1]
        %v1440 = vld [vmem:[%s452 + $0x54] sm:$0xf]
        %v1441 = vld [vmem:[%s452 + $0x58] sm:$0xf]
        %v1442 = vld [vmem:[%s452 + $0x5c] sm:$0x1]
        %v1444 = vshrl.u32 %v1419, 16
        %v1446 = vrot.slane %v1444, 4
        %v1447 = vshll.u32 %v1419, 16
        %v1449 = vrot.slane %v1447, 5
        %v1450 = vor.u32 %v1446, %v1449
        %v1451 = vrot.slane %v1450, 4
        %v1453 = vshll.u32 %v1420, 16
        %v1455 = vrot.slane %v1453, 5
        %v1456 = vsel %vm256, %v1451, %v1455
        %v1457 = vshrl.u32 %v1420, 16
        %v1459 = vrot.slane %v1457, 4
        %v1460 = vor.u32 %v1459, %v1455
        %v1461 = vrot.slane %v1460, 4
        %v1463 = vshll.u32 %v1421, 16
        %v1465 = vrot.slane %v1463, 5
        %v1466 = vsel %vm256, %v1461, %v1465
        %v1468 = vshrl.u32 %v1422, 16
        %v1470 = vrot.slane %v1468, 4
        %v1471 = vshll.u32 %v1422, 16
        %v1473 = vrot.slane %v1471, 5
        %v1474 = vor.u32 %v1470, %v1473
        %v1475 = vrot.slane %v1474, 4
        %v1477 = vshll.u32 %v1423, 16
        %v1479 = vrot.slane %v1477, 5
        %v1480 = vsel %vm256, %v1475, %v1479
        %v1481 = vshrl.u32 %v1423, 16
        %v1483 = vrot.slane %v1481, 4
        %v1484 = vor.u32 %v1483, %v1479
        %v1485 = vrot.slane %v1484, 4
        %v1487 = vshll.u32 %v1424, 16
        %v1489 = vrot.slane %v1487, 5
        %v1490 = vsel %vm256, %v1485, %v1489
        %v1492 = vshrl.u32 %v1425, 16
        %v1494 = vrot.slane %v1492, 4
        %v1495 = vshll.u32 %v1425, 16
        %v1497 = vrot.slane %v1495, 5
        %v1498 = vor.u32 %v1494, %v1497
        %v1499 = vrot.slane %v1498, 4
        %v1501 = vshll.u32 %v1426, 16
        %v1503 = vrot.slane %v1501, 5
        %v1504 = vsel %vm256, %v1499, %v1503
        %v1505 = vshrl.u32 %v1426, 16
        %v1507 = vrot.slane %v1505, 4
        %v1508 = vor.u32 %v1507, %v1503
        %v1509 = vrot.slane %v1508, 4
        %v1511 = vshll.u32 %v1427, 16
        %v1513 = vrot.slane %v1511, 5
        %v1514 = vsel %vm256, %v1509, %v1513
        %v1516 = vshrl.u32 %v1428, 16
        %v1518 = vrot.slane %v1516, 4
        %v1519 = vshll.u32 %v1428, 16
        %v1521 = vrot.slane %v1519, 5
        %v1522 = vor.u32 %v1518, %v1521
        %v1523 = vrot.slane %v1522, 4
        %v1525 = vshll.u32 %v1429, 16
        %v1527 = vrot.slane %v1525, 5
        %v1528 = vsel %vm256, %v1523, %v1527
        %v1529 = vshrl.u32 %v1429, 16
        %v1531 = vrot.slane %v1529, 4
        %v1532 = vor.u32 %v1531, %v1527
        %v1533 = vrot.slane %v1532, 4
        %v1535 = vshll.u32 %v1430, 16
        %v1537 = vrot.slane %v1535, 5
        %v1538 = vsel %vm256, %v1533, %v1537
        %v1540 = vshrl.u32 %v1431, 16
        %v1542 = vrot.slane %v1540, 4
        %v1543 = vshll.u32 %v1431, 16
        %v1545 = vrot.slane %v1543, 5
        %v1546 = vor.u32 %v1542, %v1545
        %v1547 = vrot.slane %v1546, 4
        %v1549 = vshll.u32 %v1432, 16
        %v1551 = vrot.slane %v1549, 5
        %v1552 = vsel %vm256, %v1547, %v1551
        %v1553 = vshrl.u32 %v1432, 16
        %v1555 = vrot.slane %v1553, 4
        %v1556 = vor.u32 %v1555, %v1551
        %v1557 = vrot.slane %v1556, 4
        %v1559 = vshll.u32 %v1433, 16
        %v1561 = vrot.slane %v1559, 5
        %v1562 = vsel %vm256, %v1557, %v1561
        %v1564 = vshrl.u32 %v1434, 16
        %v1566 = vrot.slane %v1564, 4
        %v1567 = vshll.u32 %v1434, 16
        %v1569 = vrot.slane %v1567, 5
        %v1570 = vor.u32 %v1566, %v1569
        %v1571 = vrot.slane %v1570, 4
        %v1573 = vshll.u32 %v1435, 16
        %v1575 = vrot.slane %v1573, 5
        %v1576 = vsel %vm256, %v1571, %v1575
        %v1577 = vshrl.u32 %v1435, 16
        %v1579 = vrot.slane %v1577, 4
        %v1580 = vor.u32 %v1579, %v1575
        %v1581 = vrot.slane %v1580, 4
        %v1583 = vshll.u32 %v1436, 16
        %v1585 = vrot.slane %v1583, 5
        %v1586 = vsel %vm256, %v1581, %v1585
        %v1588 = vshrl.u32 %v1437, 16
        %v1590 = vrot.slane %v1588, 4
        %v1591 = vshll.u32 %v1437, 16
        %v1593 = vrot.slane %v1591, 5
        %v1594 = vor.u32 %v1590, %v1593
        %v1595 = vrot.slane %v1594, 4
        %v1597 = vshll.u32 %v1438, 16
        %v1599 = vrot.slane %v1597, 5
        %v1600 = vsel %vm256, %v1595, %v1599
        %v1601 = vshrl.u32 %v1438, 16
        %v1603 = vrot.slane %v1601, 4
        %v1604 = vor.u32 %v1603, %v1599
        %v1605 = vrot.slane %v1604, 4
        %v1607 = vshll.u32 %v1439, 16
        %v1609 = vrot.slane %v1607, 5
        %v1610 = vsel %vm256, %v1605, %v1609
        %v1612 = vshrl.u32 %v1440, 16
        %v1614 = vrot.slane %v1612, 4
        %v1615 = vshll.u32 %v1440, 16
        %v1617 = vrot.slane %v1615, 5
        %v1618 = vor.u32 %v1614, %v1617
        %v1619 = vrot.slane %v1618, 4
        %v1621 = vshll.u32 %v1441, 16
        %v1623 = vrot.slane %v1621, 5
        %v1624 = vsel %vm256, %v1619, %v1623
        %v1625 = vshrl.u32 %v1441, 16
        %v1627 = vrot.slane %v1625, 4
        %v1628 = vor.u32 %v1627, %v1623
        %v1629 = vrot.slane %v1628, 4
        %v1631 = vshll.u32 %v1442, 16
        %v1633 = vrot.slane %v1631, 5
        %v1634 = vsel %vm256, %v1629, %v1633
        %v1635 = vld [vmem:[%s452] sm:$0xe]
        %v1636 = vld [vmem:[%s452 + $0xc] sm:$0xe]
        %v1637 = vld [vmem:[%s452 + $0x18] sm:$0xe]
        %v1638 = vld [vmem:[%s452 + $0x24] sm:$0xe]
        %v1639 = vld [vmem:[%s452 + $0x30] sm:$0xe]
        %v1640 = vld [vmem:[%s452 + $0x3c] sm:$0xe]
        %v1641 = vld [vmem:[%s452 + $0x48] sm:$0xe]
        %v1642 = vld [vmem:[%s452 + $0x54] sm:$0xe]
        %v1667 = vrot.slane %v1635, 5
        %v1668 = vrot.slane %v1667, 4
        %v1669 = vrot.slane %v1420, 5
        %v1670 = vsel %vm1362, %v1668, %v1669
        %v1671 = vrot.slane %v1669, 4
        %v1672 = vrot.slane %v1421, 5
        %v1673 = vsel %vm1362, %v1671, %v1672
        %v1674 = vrot.slane %v1636, 5
        %v1675 = vrot.slane %v1674, 4
        %v1676 = vrot.slane %v1423, 5
        %v1677 = vsel %vm1362, %v1675, %v1676
        %v1678 = vrot.slane %v1676, 4
        %v1679 = vrot.slane %v1424, 5
        %v1680 = vsel %vm1362, %v1678, %v1679
        %v1681 = vrot.slane %v1637, 5
        %v1682 = vrot.slane %v1681, 4
        %v1683 = vrot.slane %v1426, 5
        %v1684 = vsel %vm1362, %v1682, %v1683
        %v1685 = vrot.slane %v1683, 4
        %v1686 = vrot.slane %v1427, 5
        %v1687 = vsel %vm1362, %v1685, %v1686
        %v1688 = vrot.slane %v1638, 5
        %v1689 = vrot.slane %v1688, 4
        %v1690 = vrot.slane %v1429, 5
        %v1691 = vsel %vm1362, %v1689, %v1690
        %v1692 = vrot.slane %v1690, 4
        %v1693 = vrot.slane %v1430, 5
        %v1694 = vsel %vm1362, %v1692, %v1693
        %v1695 = vrot.slane %v1639, 5
        %v1696 = vrot.slane %v1695, 4
        %v1697 = vrot.slane %v1432, 5
        %v1698 = vsel %vm1362, %v1696, %v1697
        %v1699 = vrot.slane %v1697, 4
        %v1700 = vrot.slane %v1433, 5
        %v1701 = vsel %vm1362, %v1699, %v1700
        %v1702 = vrot.slane %v1640, 5
        %v1703 = vrot.slane %v1702, 4
        %v1704 = vrot.slane %v1435, 5
        %v1705 = vsel %vm1362, %v1703, %v1704
        %v1706 = vrot.slane %v1704, 4
        %v1707 = vrot.slane %v1436, 5
        %v1708 = vsel %vm1362, %v1706, %v1707
        %v1709 = vrot.slane %v1641, 5
        %v1710 = vrot.slane %v1709, 4
        %v1711 = vrot.slane %v1438, 5
        %v1712 = vsel %vm1362, %v1710, %v1711
        %v1713 = vrot.slane %v1711, 4
        %v1714 = vrot.slane %v1439, 5
        %v1715 = vsel %vm1362, %v1713, %v1714
        %v1716 = vrot.slane %v1642, 5
        %v1717 = vrot.slane %v1716, 4
        %v1718 = vrot.slane %v1441, 5
        %v1719 = vsel %vm1362, %v1717, %v1718
        %v1720 = vrot.slane %v1718, 4
        %v1721 = vrot.slane %v1442, 5
        %v1722 = vsel %vm1362, %v1720, %v1721
        %v1723 = vunpack.c.l.b16 %v1149
        %v1724 = vunpack.c.l.b16 %v1159
        %v1725 = vunpack.c.l.b16 %v1173
        %v1726 = vunpack.c.l.b16 %v1183
        %v1727 = vunpack.c.l.b16 %v1197
        %v1728 = vunpack.c.l.b16 %v1207
        %v1729 = vunpack.c.l.b16 %v1221
        %v1730 = vunpack.c.l.b16 %v1231
        %v1731 = vunpack.c.l.b16 %v1245
        %v1732 = vunpack.c.l.b16 %v1255
        %v1733 = vunpack.c.l.b16 %v1269
        %v1734 = vunpack.c.l.b16 %v1279
        %v1735 = vunpack.c.l.b16 %v1293
        %v1736 = vunpack.c.l.b16 %v1303
        %v1737 = vunpack.c.l.b16 %v1317
        %v1738 = vunpack.c.l.b16 %v1327
        %v1739 = vpack.c.b16 %v1724, %v1723
        %v1740 = vpack.c.b16 %v1726, %v1725
        %v1741 = vpack.c.b16 %v1728, %v1727
        %v1742 = vpack.c.b16 %v1730, %v1729
        %v1743 = vpack.c.b16 %v1732, %v1731
        %v1744 = vpack.c.b16 %v1734, %v1733
        %v1745 = vpack.c.b16 %v1736, %v1735
        %v1746 = vpack.c.b16 %v1738, %v1737
        %v1747 = vunpack.c.l.b16 %v1366
        %v1748 = vunpack.c.l.b16 %v1369
        %v1749 = vunpack.c.l.b16 %v1373
        %v1750 = vunpack.c.l.b16 %v1376
        %v1751 = vunpack.c.l.b16 %v1380
        %v1752 = vunpack.c.l.b16 %v1383
        %v1753 = vunpack.c.l.b16 %v1387
        %v1754 = vunpack.c.l.b16 %v1390
        %v1755 = vunpack.c.l.b16 %v1394
        %v1756 = vunpack.c.l.b16 %v1397
        %v1757 = vunpack.c.l.b16 %v1401
        %v1758 = vunpack.c.l.b16 %v1404
        %v1759 = vunpack.c.l.b16 %v1408
        %v1760 = vunpack.c.l.b16 %v1411
        %v1761 = vunpack.c.l.b16 %v1415
        %v1762 = vunpack.c.l.b16 %v1418
        %v1763 = vpack.c.b16 %v1748, %v1747
        %v1764 = vpack.c.b16 %v1750, %v1749
        %v1765 = vpack.c.b16 %v1752, %v1751
        %v1766 = vpack.c.b16 %v1754, %v1753
        %v1767 = vpack.c.b16 %v1756, %v1755
        %v1768 = vpack.c.b16 %v1758, %v1757
        %v1769 = vpack.c.b16 %v1760, %v1759
        %v1770 = vpack.c.b16 %v1762, %v1761
        %1771 = vrot.lane.b32.xlu0 %v1763, 4
        %v1772 = vpop.permute.xlu0 %1771
        %1773 = vrot.lane.b32.xlu0 %v1764, 4
        %v1774 = vpop.permute.xlu0 %1773
        %1775 = vrot.lane.b32.xlu0 %v1765, 4
        %v1776 = vpop.permute.xlu0 %1775
        %1777 = vrot.lane.b32.xlu0 %v1766, 4
        %v1778 = vpop.permute.xlu0 %1777
        %1779 = vrot.lane.b32.xlu0 %v1767, 4
        %v1780 = vpop.permute.xlu0 %1779
        %1781 = vrot.lane.b32.xlu0 %v1768, 4
        %v1782 = vpop.permute.xlu0 %1781
        %1783 = vrot.lane.b32.xlu0 %v1769, 4
        %v1784 = vpop.permute.xlu0 %1783
        %1785 = vrot.lane.b32.xlu0 %v1770, 4
        %v1786 = vpop.permute.xlu0 %1785
        %v1787 = vunpack.c.l.b16 %v1456
        %v1788 = vunpack.c.l.b16 %v1466
        %v1789 = vunpack.c.l.b16 %v1480
        %v1790 = vunpack.c.l.b16 %v1490
        %v1791 = vunpack.c.l.b16 %v1504
        %v1792 = vunpack.c.l.b16 %v1514
        %v1793 = vunpack.c.l.b16 %v1528
        %v1794 = vunpack.c.l.b16 %v1538
        %v1795 = vunpack.c.l.b16 %v1552
        %v1796 = vunpack.c.l.b16 %v1562
        %v1797 = vunpack.c.l.b16 %v1576
        %v1798 = vunpack.c.l.b16 %v1586
        %v1799 = vunpack.c.l.b16 %v1600
        %v1800 = vunpack.c.l.b16 %v1610
        %v1801 = vunpack.c.l.b16 %v1624
        %v1802 = vunpack.c.l.b16 %v1634
        %v1803 = vpack.c.b16 %v1788, %v1787
        %v1804 = vpack.c.b16 %v1790, %v1789
        %v1805 = vpack.c.b16 %v1792, %v1791
        %v1806 = vpack.c.b16 %v1794, %v1793
        %v1807 = vpack.c.b16 %v1796, %v1795
        %v1808 = vpack.c.b16 %v1798, %v1797
        %v1809 = vpack.c.b16 %v1800, %v1799
        %v1810 = vpack.c.b16 %v1802, %v1801
        %1811 = vrot.lane.b32.xlu0 %v1803, 8
        %v1812 = vpop.permute.xlu0 %1811
        %1813 = vrot.lane.b32.xlu0 %v1804, 8
        %v1814 = vpop.permute.xlu0 %1813
        %1815 = vrot.lane.b32.xlu0 %v1805, 8
        %v1816 = vpop.permute.xlu0 %1815
        %1817 = vrot.lane.b32.xlu0 %v1806, 8
        %v1818 = vpop.permute.xlu0 %1817
        %1819 = vrot.lane.b32.xlu0 %v1807, 8
        %v1820 = vpop.permute.xlu0 %1819
        %1821 = vrot.lane.b32.xlu0 %v1808, 8
        %v1822 = vpop.permute.xlu0 %1821
        %1823 = vrot.lane.b32.xlu0 %v1809, 8
        %v1824 = vpop.permute.xlu0 %1823
        %1825 = vrot.lane.b32.xlu0 %v1810, 8
        %v1826 = vpop.permute.xlu0 %1825
        %v1827 = vunpack.c.l.b16 %v1670
        %v1828 = vunpack.c.l.b16 %v1673
        %v1829 = vunpack.c.l.b16 %v1677
        %v1830 = vunpack.c.l.b16 %v1680
        %v1831 = vunpack.c.l.b16 %v1684
        %v1832 = vunpack.c.l.b16 %v1687
        %v1833 = vunpack.c.l.b16 %v1691
        %v1834 = vunpack.c.l.b16 %v1694
        %v1835 = vunpack.c.l.b16 %v1698
        %v1836 = vunpack.c.l.b16 %v1701
        %v1837 = vunpack.c.l.b16 %v1705
        %v1838 = vunpack.c.l.b16 %v1708
        %v1839 = vunpack.c.l.b16 %v1712
        %v1840 = vunpack.c.l.b16 %v1715
        %v1841 = vunpack.c.l.b16 %v1719
        %v1842 = vunpack.c.l.b16 %v1722
        %v1843 = vpack.c.b16 %v1828, %v1827
        %v1844 = vpack.c.b16 %v1830, %v1829
        %v1845 = vpack.c.b16 %v1832, %v1831
        %v1846 = vpack.c.b16 %v1834, %v1833
        %v1847 = vpack.c.b16 %v1836, %v1835
        %v1848 = vpack.c.b16 %v1838, %v1837
        %v1849 = vpack.c.b16 %v1840, %v1839
        %v1850 = vpack.c.b16 %v1842, %v1841
        %1851 = vrot.lane.b32.xlu0 %v1843, 12
        %v1852 = vpop.permute.xlu0 %1851
        %1853 = vrot.lane.b32.xlu0 %v1844, 12
        %v1854 = vpop.permute.xlu0 %1853
        %1855 = vrot.lane.b32.xlu0 %v1845, 12
        %v1856 = vpop.permute.xlu0 %1855
        %1857 = vrot.lane.b32.xlu0 %v1846, 12
        %v1858 = vpop.permute.xlu0 %1857
        %1859 = vrot.lane.b32.xlu0 %v1847, 12
        %v1860 = vpop.permute.xlu0 %1859
        %1861 = vrot.lane.b32.xlu0 %v1848, 12
        %v1862 = vpop.permute.xlu0 %1861
        %1863 = vrot.lane.b32.xlu0 %v1849, 12
        %v1864 = vpop.permute.xlu0 %1863
        %1865 = vrot.lane.b32.xlu0 %v1850, 12
        %v1866 = vpop.permute.xlu0 %1865
        %v1869 = vsel %vm845, %v1739, %v1772
        %v1872 = vsel %vm845, %v1740, %v1774
        %v1875 = vsel %vm845, %v1741, %v1776
        %v1878 = vsel %vm845, %v1742, %v1778
        %v1881 = vsel %vm845, %v1743, %v1780
        %v1884 = vsel %vm845, %v1744, %v1782
        %v1887 = vsel %vm845, %v1745, %v1784
        %v1890 = vsel %vm845, %v1746, %v1786
        %v1892 = vsel %vm870, %v1869, %v1812
        %v1894 = vsel %vm870, %v1872, %v1814
        %v1896 = vsel %vm870, %v1875, %v1816
        %v1898 = vsel %vm870, %v1878, %v1818
        %v1900 = vsel %vm870, %v1881, %v1820
        %v1902 = vsel %vm870, %v1884, %v1822
        %v1904 = vsel %vm870, %v1887, %v1824
        %v1906 = vsel %vm870, %v1890, %v1826
        %v1908 = vsel %vm887, %v1892, %v1852
        %v1910 = vsel %vm887, %v1894, %v1854
        %v1912 = vsel %vm887, %v1896, %v1856
        %v1914 = vsel %vm887, %v1898, %v1858
        %v1916 = vsel %vm887, %v1900, %v1860
        %v1918 = vsel %vm887, %v1902, %v1862
        %v1920 = vsel %vm887, %v1904, %v1864
        %v1922 = vsel %vm887, %v1906, %v1866
        %s1923 = scalar_lea.vmem %s219, 8
        %v1924 = vld [vmem:[%s1923] sm:$0xf]
        %v1925 = vld [vmem:[%s1923 + $0x4] sm:$0xf]
        %v1928 = vunpack.c.l.b16 %v1924
        %v1929 = vunpack.c.l.b16 %v1925
        %v1930 = vpack.c.b16 %v1929, %v1928
        %v1932 = vsel %vm918, %v1908, 0
        %v1934 = vsel %vm918, %v1910, 0
        %v1936 = vsel %vm918, %v1912, 0
        %v1938 = vsel %vm918, %v1914, 0
        %v1940 = vsel %vm918, %v1916, 0
        %v1942 = vsel %vm918, %v1918, 0
        %v1944 = vsel %vm918, %v1920, 0
        %v1946 = vsel %vm918, %v1922, 0
        %1948 = vmatprep.subr.bf16.mxu0 0
        %1949 = vmatpush1.bf16.msra.mxu0 %v1930
        %1950 = vmatprep.subr.bf16.mxu0 0
        %1951 = vmatpush1.bf16.msra.mxu0 0
        %1952 = vmatprep.subr.bf16.mxu0 0
        %1953 = vmatpush1.bf16.msra.mxu0 0
        %1954 = vmatprep.subr.bf16.mxu0 0
        %1955 = vmatpush1.bf16.msra.mxu0 0
        %1956 = vmatprep.subr.bf16.mxu0 0
        %1957 = vmatpush1.bf16.msra.mxu0 0
        %1958 = vmatprep.subr.bf16.mxu0 0
        %1959 = vmatpush1.bf16.msra.mxu0 0
        %1960 = vmatprep.subr.bf16.mxu0 0
        %1961 = vmatpush1.bf16.msra.mxu0 0
        %1962 = vmatprep.subr.bf16.mxu0 0
        %1963 = vmatpush1.bf16.msra.mxu0 0
        %1964 = vmatprep.subr.bf16.mxu0 0
        %1965 = vmatpush1.bf16.msra.mxu0 0
        %1966 = vmatprep.subr.bf16.mxu0 0
        %1967 = vmatpush1.bf16.msra.mxu0 0
        %1968 = vmatprep.subr.bf16.mxu0 0
        %1969 = vmatpush1.bf16.msra.mxu0 0
        %1970 = vmatprep.subr.bf16.mxu0 0
        %1971 = vmatpush1.bf16.msra.mxu0 0
        %1972 = vmatprep.subr.bf16.mxu0 0
        %1973 = vmatpush1.bf16.msra.mxu0 0
        %1974 = vmatprep.subr.bf16.mxu0 0
        %1975 = vmatpush1.bf16.msra.mxu0 0
        %1976 = vmatprep.subr.bf16.mxu0 0
        %1977 = vmatpush1.bf16.msra.mxu0 0
        %1978 = vmatprep.subr.bf16.mxu0 0
        %1979 = vmatpush1.bf16.msra.mxu0 0
        %1980 = vmatprep.mubr.bf16.mxu0 0
        %1981 = vmatmul.mubr.bf16.gmra.mrb[0].mxu0 %v1932
        %v1982 = vpop.f32.mrb[0].mxu0
        %v1983 = vadd.f32 %v910, %v1982
        %v1984 = vpop.f32.mrb[0].mxu0
        %v1985 = vpop.f32.mrb[0].mxu0
        %v1986 = vadd.f32 %v910, %v1985
        %v1987 = vpop.f32.mrb[0].mxu0
        %1988 = vmatprep.mubr.bf16.mxu0 0
        %1989 = vmatmul.mubr.bf16.gmra.mrb[0].mxu0 %v1934
        %v1990 = vpop.f32.mrb[0].mxu0
        %v1991 = vadd.f32 %v910, %v1990
        %v1992 = vpop.f32.mrb[0].mxu0
        %v1993 = vpop.f32.mrb[0].mxu0
        %v1994 = vadd.f32 %v910, %v1993
        %v1995 = vpop.f32.mrb[0].mxu0
        %1996 = vmatprep.mubr.bf16.mxu0 0
        %1997 = vmatmul.mubr.bf16.gmra.mrb[0].mxu0 %v1936
        %v1998 = vpop.f32.mrb[0].mxu0
        %v1999 = vadd.f32 %v910, %v1998
        %v2000 = vpop.f32.mrb[0].mxu0
        %v2001 = vpop.f32.mrb[0].mxu0
        %v2002 = vadd.f32 %v910, %v2001
        %v2003 = vpop.f32.mrb[0].mxu0
        %2004 = vmatprep.mubr.bf16.mxu0 0
        %2005 = vmatmul.mubr.bf16.gmra.mrb[0].mxu0 %v1938
        %v2006 = vpop.f32.mrb[0].mxu0
        %v2007 = vadd.f32 %v910, %v2006
        %v2008 = vpop.f32.mrb[0].mxu0
        %v2009 = vpop.f32.mrb[0].mxu0
        %v2010 = vadd.f32 %v910, %v2009
        %v2011 = vpop.f32.mrb[0].mxu0
        %2012 = vmatprep.mubr.bf16.mxu0 0
        %2013 = vmatmul.mubr.bf16.gmra.mrb[0].mxu0 %v1940
        %v2014 = vpop.f32.mrb[0].mxu0
        %v2015 = vadd.f32 %v910, %v2014
        %v2016 = vpop.f32.mrb[0].mxu0
        %v2017 = vpop.f32.mrb[0].mxu0
        %v2018 = vadd.f32 %v910, %v2017
        %v2019 = vpop.f32.mrb[0].mxu0
        %2020 = vmatprep.mubr.bf16.mxu0 0
        %2021 = vmatmul.mubr.bf16.gmra.mrb[0].mxu0 %v1942
        %v2022 = vpop.f32.mrb[0].mxu0
        %v2023 = vadd.f32 %v910, %v2022
        %v2024 = vpop.f32.mrb[0].mxu0
        %v2025 = vpop.f32.mrb[0].mxu0
        %v2026 = vadd.f32 %v910, %v2025
        %v2027 = vpop.f32.mrb[0].mxu0
        %2028 = vmatprep.mubr.bf16.mxu0 0
        %2029 = vmatmul.mubr.bf16.gmra.mrb[0].mxu0 %v1944
        %v2030 = vpop.f32.mrb[0].mxu0
        %v2031 = vadd.f32 %v910, %v2030
        %v2032 = vpop.f32.mrb[0].mxu0
        %v2033 = vpop.f32.mrb[0].mxu0
        %v2034 = vadd.f32 %v910, %v2033
        %v2035 = vpop.f32.mrb[0].mxu0
        %2036 = vmatprep.mubr.bf16.mxu0 0
        %2037 = vmatmul.mubr.bf16.gmra.mrb[0].mxu0 %v1946
        %v2038 = vpop.f32.mrb[0].mxu0
        %v2039 = vadd.f32 %v910, %v2038
        %v2040 = vpop.f32.mrb[0].mxu0
        %v2041 = vpop.f32.mrb[0].mxu0
        %v2042 = vadd.f32 %v910, %v2041
        %v2043 = vpop.f32.mrb[0].mxu0
        %2044 = vdwg.mxu0
        %v2045 = vpack.c.bf16 %v1986, %v1983
        %v2046 = vpack.c.bf16 %v1994, %v1991
        %v2047 = vpack.c.bf16 %v2002, %v1999
        %v2048 = vpack.c.bf16 %v2010, %v2007
        %v2049 = vpack.c.bf16 %v2018, %v2015
        %v2050 = vpack.c.bf16 %v2026, %v2023
        %v2051 = vpack.c.bf16 %v2034, %v2031
        %v2052 = vpack.c.bf16 %v2042, %v2039
        %v2061 = vunpack.c.l.b16 %v2045
        %v2062 = vunpack.c.h.b16 %v2045
        %v2063 = vunpack.c.l.b16 %v2046
        %v2064 = vunpack.c.h.b16 %v2046
        %v2065 = vunpack.c.l.b16 %v2047
        %v2066 = vunpack.c.h.b16 %v2047
        %v2067 = vunpack.c.l.b16 %v2048
        %v2068 = vunpack.c.h.b16 %v2048
        %v2069 = vunpack.c.l.b16 %v2049
        %v2070 = vunpack.c.h.b16 %v2049
        %v2071 = vunpack.c.l.b16 %v2050
        %v2072 = vunpack.c.h.b16 %v2050
        %v2073 = vunpack.c.l.b16 %v2051
        %v2074 = vunpack.c.h.b16 %v2051
        %v2075 = vunpack.c.l.b16 %v2052
        %v2076 = vunpack.c.h.b16 %v2052
        %v2077 = vpack.c.b16 %v2061, %v2061
        %v2078 = vpack.c.b16 %v2062, %v2062
        %v2079 = vpack.c.b16 %v2063, %v2063
        %v2080 = vpack.c.b16 %v2064, %v2064
        %v2081 = vpack.c.b16 %v2065, %v2065
        %v2082 = vpack.c.b16 %v2066, %v2066
        %v2083 = vpack.c.b16 %v2067, %v2067
        %v2084 = vpack.c.b16 %v2068, %v2068
        %v2085 = vpack.c.b16 %v2069, %v2069
        %v2086 = vpack.c.b16 %v2070, %v2070
        %v2087 = vpack.c.b16 %v2071, %v2071
        %v2088 = vpack.c.b16 %v2072, %v2072
        %v2089 = vpack.c.b16 %v2073, %v2073
        %v2090 = vpack.c.b16 %v2074, %v2074
        %v2091 = vpack.c.b16 %v2075, %v2075
        %v2092 = vpack.c.b16 %v2076, %v2076
        %s2109 = scalar_lea.vmem %s210, 64 [#allocation2]
        %2110 = vst [vmem:[%s2109] sm:$0xf] %v2077
        %2111 = vst [vmem:[%s2109 + $0x4] sm:$0xf] %v2078
        %2112 = vst [vmem:[%s2109 + $0x8] sm:$0xf] %v2079
        %2113 = vst [vmem:[%s2109 + $0xc] sm:$0xf] %v2080
        %2114 = vst [vmem:[%s2109 + $0x10] sm:$0xf] %v2081
        %2115 = vst [vmem:[%s2109 + $0x14] sm:$0xf] %v2082
        %2116 = vst [vmem:[%s2109 + $0x18] sm:$0xf] %v2083
        %2117 = vst [vmem:[%s2109 + $0x1c] sm:$0xf] %v2084
        %2118 = vst [vmem:[%s2109 + $0x20] sm:$0xf] %v2085
        %2119 = vst [vmem:[%s2109 + $0x24] sm:$0xf] %v2086
        %2120 = vst [vmem:[%s2109 + $0x28] sm:$0xf] %v2087
        %2121 = vst [vmem:[%s2109 + $0x2c] sm:$0xf] %v2088
        %2122 = vst [vmem:[%s2109 + $0x30] sm:$0xf] %v2089
        %2123 = vst [vmem:[%s2109 + $0x34] sm:$0xf] %v2090
        %2124 = vst [vmem:[%s2109 + $0x38] sm:$0xf] %v2091
        %2125 = vst [vmem:[%s2109 + $0x3c] sm:$0xf] %v2092
        %v2126 = vld [vmem:[%s452] sm:$0xf]
        %v2127 = vld [vmem:[%s452 + $0x4] sm:$0xf]
        %v2128 = vld [vmem:[%s452 + $0xc] sm:$0xf]
        %v2129 = vld [vmem:[%s452 + $0x10] sm:$0xf]
        %v2130 = vld [vmem:[%s452 + $0x18] sm:$0xf]
        %v2131 = vld [vmem:[%s452 + $0x1c] sm:$0xf]
        %v2132 = vld [vmem:[%s452 + $0x24] sm:$0xf]
        %v2133 = vld [vmem:[%s452 + $0x28] sm:$0xf]
        %v2134 = vld [vmem:[%s452 + $0x30] sm:$0xf]
        %v2135 = vld [vmem:[%s452 + $0x34] sm:$0xf]
        %v2136 = vld [vmem:[%s452 + $0x3c] sm:$0xf]
        %v2137 = vld [vmem:[%s452 + $0x40] sm:$0xf]
        %v2138 = vld [vmem:[%s452 + $0x48] sm:$0xf]
        %v2139 = vld [vmem:[%s452 + $0x4c] sm:$0xf]
        %v2140 = vld [vmem:[%s452 + $0x54] sm:$0xf]
        %v2141 = vld [vmem:[%s452 + $0x58] sm:$0xf]
        %v2142 = vld [vmem:[%s452 + $0x8] sm:$0x1]
        %v2143 = vld [vmem:[%s452 + $0x14] sm:$0x1]
        %v2144 = vld [vmem:[%s452 + $0x20] sm:$0x1]
        %v2145 = vld [vmem:[%s452 + $0x2c] sm:$0x1]
        %v2146 = vld [vmem:[%s452 + $0x38] sm:$0x1]
        %v2147 = vld [vmem:[%s452 + $0x44] sm:$0x1]
        %v2148 = vld [vmem:[%s452 + $0x50] sm:$0x1]
        %v2149 = vld [vmem:[%s452 + $0x5c] sm:$0x1]
        %v2151 = vshrl.u32 %v2126, 16
        %v2153 = vrot.slane %v2151, 4
        %v2154 = vshll.u32 %v2126, 16
        %v2156 = vrot.slane %v2154, 5
        %v2157 = vor.u32 %v2153, %v2156
        %v2158 = vrot.slane %v2157, 4
        %v2160 = vshll.u32 %v2127, 16
        %v2162 = vrot.slane %v2160, 5
        %v2163 = vsel %vm256, %v2158, %v2162
        %v2164 = vshrl.u32 %v2127, 16
        %v2166 = vrot.slane %v2164, 4
        %v2167 = vor.u32 %v2166, %v2162
        %v2168 = vrot.slane %v2167, 4
        %v2170 = vshll.u32 %v2142, 16
        %v2172 = vrot.slane %v2170, 5
        %v2173 = vsel %vm256, %v2168, %v2172
        %v2175 = vshrl.u32 %v2128, 16
        %v2177 = vrot.slane %v2175, 4
        %v2178 = vshll.u32 %v2128, 16
        %v2180 = vrot.slane %v2178, 5
        %v2181 = vor.u32 %v2177, %v2180
        %v2182 = vrot.slane %v2181, 4
        %v2184 = vshll.u32 %v2129, 16
        %v2186 = vrot.slane %v2184, 5
        %v2187 = vsel %vm256, %v2182, %v2186
        %v2188 = vshrl.u32 %v2129, 16
        %v2190 = vrot.slane %v2188, 4
        %v2191 = vor.u32 %v2190, %v2186
        %v2192 = vrot.slane %v2191, 4
        %v2194 = vshll.u32 %v2143, 16
        %v2196 = vrot.slane %v2194, 5
        %v2197 = vsel %vm256, %v2192, %v2196
        %v2199 = vshrl.u32 %v2130, 16
        %v2201 = vrot.slane %v2199, 4
        %v2202 = vshll.u32 %v2130, 16
        %v2204 = vrot.slane %v2202, 5
        %v2205 = vor.u32 %v2201, %v2204
        %v2206 = vrot.slane %v2205, 4
        %v2208 = vshll.u32 %v2131, 16
        %v2210 = vrot.slane %v2208, 5
        %v2211 = vsel %vm256, %v2206, %v2210
        %v2212 = vshrl.u32 %v2131, 16
        %v2214 = vrot.slane %v2212, 4
        %v2215 = vor.u32 %v2214, %v2210
        %v2216 = vrot.slane %v2215, 4
        %v2218 = vshll.u32 %v2144, 16
        %v2220 = vrot.slane %v2218, 5
        %v2221 = vsel %vm256, %v2216, %v2220
        %v2223 = vshrl.u32 %v2132, 16
        %v2225 = vrot.slane %v2223, 4
        %v2226 = vshll.u32 %v2132, 16
        %v2228 = vrot.slane %v2226, 5
        %v2229 = vor.u32 %v2225, %v2228
        %v2230 = vrot.slane %v2229, 4
        %v2232 = vshll.u32 %v2133, 16
        %v2234 = vrot.slane %v2232, 5
        %v2235 = vsel %vm256, %v2230, %v2234
        %v2236 = vshrl.u32 %v2133, 16
        %v2238 = vrot.slane %v2236, 4
        %v2239 = vor.u32 %v2238, %v2234
        %v2240 = vrot.slane %v2239, 4
        %v2242 = vshll.u32 %v2145, 16
        %v2244 = vrot.slane %v2242, 5
        %v2245 = vsel %vm256, %v2240, %v2244
        %v2247 = vshrl.u32 %v2134, 16
        %v2249 = vrot.slane %v2247, 4
        %v2250 = vshll.u32 %v2134, 16
        %v2252 = vrot.slane %v2250, 5
        %v2253 = vor.u32 %v2249, %v2252
        %v2254 = vrot.slane %v2253, 4
        %v2256 = vshll.u32 %v2135, 16
        %v2258 = vrot.slane %v2256, 5
        %v2259 = vsel %vm256, %v2254, %v2258
        %v2260 = vshrl.u32 %v2135, 16
        %v2262 = vrot.slane %v2260, 4
        %v2263 = vor.u32 %v2262, %v2258
        %v2264 = vrot.slane %v2263, 4
        %v2266 = vshll.u32 %v2146, 16
        %v2268 = vrot.slane %v2266, 5
        %v2269 = vsel %vm256, %v2264, %v2268
        %v2271 = vshrl.u32 %v2136, 16
        %v2273 = vrot.slane %v2271, 4
        %v2274 = vshll.u32 %v2136, 16
        %v2276 = vrot.slane %v2274, 5
        %v2277 = vor.u32 %v2273, %v2276
        %v2278 = vrot.slane %v2277, 4
        %v2280 = vshll.u32 %v2137, 16
        %v2282 = vrot.slane %v2280, 5
        %v2283 = vsel %vm256, %v2278, %v2282
        %v2284 = vshrl.u32 %v2137, 16
        %v2286 = vrot.slane %v2284, 4
        %v2287 = vor.u32 %v2286, %v2282
        %v2288 = vrot.slane %v2287, 4
        %v2290 = vshll.u32 %v2147, 16
        %v2292 = vrot.slane %v2290, 5
        %v2293 = vsel %vm256, %v2288, %v2292
        %v2295 = vshrl.u32 %v2138, 16
        %v2297 = vrot.slane %v2295, 4
        %v2298 = vshll.u32 %v2138, 16
        %v2300 = vrot.slane %v2298, 5
        %v2301 = vor.u32 %v2297, %v2300
        %v2302 = vrot.slane %v2301, 4
        %v2304 = vshll.u32 %v2139, 16
        %v2306 = vrot.slane %v2304, 5
        %v2307 = vsel %vm256, %v2302, %v2306
        %v2308 = vshrl.u32 %v2139, 16
        %v2310 = vrot.slane %v2308, 4
        %v2311 = vor.u32 %v2310, %v2306
        %v2312 = vrot.slane %v2311, 4
        %v2314 = vshll.u32 %v2148, 16
        %v2316 = vrot.slane %v2314, 5
        %v2317 = vsel %vm256, %v2312, %v2316
        %v2319 = vshrl.u32 %v2140, 16
        %v2321 = vrot.slane %v2319, 4
        %v2322 = vshll.u32 %v2140, 16
        %v2324 = vrot.slane %v2322, 5
        %v2325 = vor.u32 %v2321, %v2324
        %v2326 = vrot.slane %v2325, 4
        %v2328 = vshll.u32 %v2141, 16
        %v2330 = vrot.slane %v2328, 5
        %v2331 = vsel %vm256, %v2326, %v2330
        %v2332 = vshrl.u32 %v2141, 16
        %v2334 = vrot.slane %v2332, 4
        %v2335 = vor.u32 %v2334, %v2330
        %v2336 = vrot.slane %v2335, 4
        %v2338 = vshll.u32 %v2149, 16
        %v2340 = vrot.slane %v2338, 5
        %v2341 = vsel %vm256, %v2336, %v2340
        %s2342 = sadd.s32 %s225, 2
        %s2343 = smul.u32 %s2342, 3
        %s2344 = smul.addr %s2343, 4
        %s2345 = scalar_lea.vmem %s215, %s2344
        %v2346 = vld [vmem:[%s2345] sm:$0xf]
        %v2347 = vld [vmem:[%s2345 + $0x4] sm:$0xf]
        %v2348 = vld [vmem:[%s2345 + $0xc] sm:$0xf]
        %v2349 = vld [vmem:[%s2345 + $0x10] sm:$0xf]
        %v2350 = vld [vmem:[%s2345 + $0x18] sm:$0xf]
        %v2351 = vld [vmem:[%s2345 + $0x1c] sm:$0xf]
        %v2352 = vld [vmem:[%s2345 + $0x24] sm:$0xf]
        %v2353 = vld [vmem:[%s2345 + $0x28] sm:$0xf]
        %v2354 = vld [vmem:[%s2345 + $0x30] sm:$0xf]
        %v2355 = vld [vmem:[%s2345 + $0x34] sm:$0xf]
        %v2356 = vld [vmem:[%s2345 + $0x3c] sm:$0xf]
        %v2357 = vld [vmem:[%s2345 + $0x40] sm:$0xf]
        %v2358 = vld [vmem:[%s2345 + $0x48] sm:$0xf]
        %v2359 = vld [vmem:[%s2345 + $0x4c] sm:$0xf]
        %v2360 = vld [vmem:[%s2345 + $0x54] sm:$0xf]
        %v2361 = vld [vmem:[%s2345 + $0x58] sm:$0xf]
        %v2362 = vld [vmem:[%s2345 + $0x8] sm:$0x1]
        %v2363 = vld [vmem:[%s2345 + $0x14] sm:$0x1]
        %v2364 = vld [vmem:[%s2345 + $0x20] sm:$0x1]
        %v2365 = vld [vmem:[%s2345 + $0x2c] sm:$0x1]
        %v2366 = vld [vmem:[%s2345 + $0x38] sm:$0x1]
        %v2367 = vld [vmem:[%s2345 + $0x44] sm:$0x1]
        %v2368 = vld [vmem:[%s2345 + $0x50] sm:$0x1]
        %v2369 = vld [vmem:[%s2345 + $0x5c] sm:$0x1]
        %v2371 = vshrl.u32 %v2346, 16
        %v2373 = vrot.slane %v2371, 4
        %v2374 = vshll.u32 %v2346, 16
        %v2376 = vrot.slane %v2374, 5
        %v2377 = vor.u32 %v2373, %v2376
        %v2378 = vrot.slane %v2377, 4
        %v2380 = vshll.u32 %v2347, 16
        %v2382 = vrot.slane %v2380, 5
        %v2383 = vsel %vm256, %v2378, %v2382
        %v2384 = vshrl.u32 %v2347, 16
        %v2386 = vrot.slane %v2384, 4
        %v2387 = vor.u32 %v2386, %v2382
        %v2388 = vrot.slane %v2387, 4
        %v2390 = vshll.u32 %v2362, 16
        %v2392 = vrot.slane %v2390, 5
        %v2393 = vsel %vm256, %v2388, %v2392
        %v2395 = vshrl.u32 %v2348, 16
        %v2397 = vrot.slane %v2395, 4
        %v2398 = vshll.u32 %v2348, 16
        %v2400 = vrot.slane %v2398, 5
        %v2401 = vor.u32 %v2397, %v2400
        %v2402 = vrot.slane %v2401, 4
        %v2404 = vshll.u32 %v2349, 16
        %v2406 = vrot.slane %v2404, 5
        %v2407 = vsel %vm256, %v2402, %v2406
        %v2408 = vshrl.u32 %v2349, 16
        %v2410 = vrot.slane %v2408, 4
        %v2411 = vor.u32 %v2410, %v2406
        %v2412 = vrot.slane %v2411, 4
        %v2414 = vshll.u32 %v2363, 16
        %v2416 = vrot.slane %v2414, 5
        %v2417 = vsel %vm256, %v2412, %v2416
        %v2419 = vshrl.u32 %v2350, 16
        %v2421 = vrot.slane %v2419, 4
        %v2422 = vshll.u32 %v2350, 16
        %v2424 = vrot.slane %v2422, 5
        %v2425 = vor.u32 %v2421, %v2424
        %v2426 = vrot.slane %v2425, 4
        %v2428 = vshll.u32 %v2351, 16
        %v2430 = vrot.slane %v2428, 5
        %v2431 = vsel %vm256, %v2426, %v2430
        %v2432 = vshrl.u32 %v2351, 16
        %v2434 = vrot.slane %v2432, 4
        %v2435 = vor.u32 %v2434, %v2430
        %v2436 = vrot.slane %v2435, 4
        %v2438 = vshll.u32 %v2364, 16
        %v2440 = vrot.slane %v2438, 5
        %v2441 = vsel %vm256, %v2436, %v2440
        %v2443 = vshrl.u32 %v2352, 16
        %v2445 = vrot.slane %v2443, 4
        %v2446 = vshll.u32 %v2352, 16
        %v2448 = vrot.slane %v2446, 5
        %v2449 = vor.u32 %v2445, %v2448
        %v2450 = vrot.slane %v2449, 4
        %v2452 = vshll.u32 %v2353, 16
        %v2454 = vrot.slane %v2452, 5
        %v2455 = vsel %vm256, %v2450, %v2454
        %v2456 = vshrl.u32 %v2353, 16
        %v2458 = vrot.slane %v2456, 4
        %v2459 = vor.u32 %v2458, %v2454
        %v2460 = vrot.slane %v2459, 4
        %v2462 = vshll.u32 %v2365, 16
        %v2464 = vrot.slane %v2462, 5
        %v2465 = vsel %vm256, %v2460, %v2464
        %v2467 = vshrl.u32 %v2354, 16
        %v2469 = vrot.slane %v2467, 4
        %v2470 = vshll.u32 %v2354, 16
        %v2472 = vrot.slane %v2470, 5
        %v2473 = vor.u32 %v2469, %v2472
        %v2474 = vrot.slane %v2473, 4
        %v2476 = vshll.u32 %v2355, 16
        %v2478 = vrot.slane %v2476, 5
        %v2479 = vsel %vm256, %v2474, %v2478
        %v2480 = vshrl.u32 %v2355, 16
        %v2482 = vrot.slane %v2480, 4
        %v2483 = vor.u32 %v2482, %v2478
        %v2484 = vrot.slane %v2483, 4
        %v2486 = vshll.u32 %v2366, 16
        %v2488 = vrot.slane %v2486, 5
        %v2489 = vsel %vm256, %v2484, %v2488
        %v2491 = vshrl.u32 %v2356, 16
        %v2493 = vrot.slane %v2491, 4
        %v2494 = vshll.u32 %v2356, 16
        %v2496 = vrot.slane %v2494, 5
        %v2497 = vor.u32 %v2493, %v2496
        %v2498 = vrot.slane %v2497, 4
        %v2500 = vshll.u32 %v2357, 16
        %v2502 = vrot.slane %v2500, 5
        %v2503 = vsel %vm256, %v2498, %v2502
        %v2504 = vshrl.u32 %v2357, 16
        %v2506 = vrot.slane %v2504, 4
        %v2507 = vor.u32 %v2506, %v2502
        %v2508 = vrot.slane %v2507, 4
        %v2510 = vshll.u32 %v2367, 16
        %v2512 = vrot.slane %v2510, 5
        %v2513 = vsel %vm256, %v2508, %v2512
        %v2515 = vshrl.u32 %v2358, 16
        %v2517 = vrot.slane %v2515, 4
        %v2518 = vshll.u32 %v2358, 16
        %v2520 = vrot.slane %v2518, 5
        %v2521 = vor.u32 %v2517, %v2520
        %v2522 = vrot.slane %v2521, 4
        %v2524 = vshll.u32 %v2359, 16
        %v2526 = vrot.slane %v2524, 5
        %v2527 = vsel %vm256, %v2522, %v2526
        %v2528 = vshrl.u32 %v2359, 16
        %v2530 = vrot.slane %v2528, 4
        %v2531 = vor.u32 %v2530, %v2526
        %v2532 = vrot.slane %v2531, 4
        %v2534 = vshll.u32 %v2368, 16
        %v2536 = vrot.slane %v2534, 5
        %v2537 = vsel %vm256, %v2532, %v2536
        %v2539 = vshrl.u32 %v2360, 16
        %v2541 = vrot.slane %v2539, 4
        %v2542 = vshll.u32 %v2360, 16
        %v2544 = vrot.slane %v2542, 5
        %v2545 = vor.u32 %v2541, %v2544
        %v2546 = vrot.slane %v2545, 4
        %v2548 = vshll.u32 %v2361, 16
        %v2550 = vrot.slane %v2548, 5
        %v2551 = vsel %vm256, %v2546, %v2550
        %v2552 = vshrl.u32 %v2361, 16
        %v2554 = vrot.slane %v2552, 4
        %v2555 = vor.u32 %v2554, %v2550
        %v2556 = vrot.slane %v2555, 4
        %v2558 = vshll.u32 %v2369, 16
        %v2560 = vrot.slane %v2558, 5
        %v2561 = vsel %vm256, %v2556, %v2560
        %v2578 = vunpack.c.l.b16 %v2126
        %v2579 = vunpack.c.l.b16 %v2127
        %v2580 = vunpack.c.l.b16 %v2128
        %v2581 = vunpack.c.l.b16 %v2129
        %v2582 = vunpack.c.l.b16 %v2130
        %v2583 = vunpack.c.l.b16 %v2131
        %v2584 = vunpack.c.l.b16 %v2132
        %v2585 = vunpack.c.l.b16 %v2133
        %v2586 = vunpack.c.l.b16 %v2134
        %v2587 = vunpack.c.l.b16 %v2135
        %v2588 = vunpack.c.l.b16 %v2136
        %v2589 = vunpack.c.l.b16 %v2137
        %v2590 = vunpack.c.l.b16 %v2138
        %v2591 = vunpack.c.l.b16 %v2139
        %v2592 = vunpack.c.l.b16 %v2140
        %v2593 = vunpack.c.l.b16 %v2141
        %v2594 = vpack.c.b16 %v2579, %v2578
        %v2595 = vpack.c.b16 %v2581, %v2580
        %v2596 = vpack.c.b16 %v2583, %v2582
        %v2597 = vpack.c.b16 %v2585, %v2584
        %v2598 = vpack.c.b16 %v2587, %v2586
        %v2599 = vpack.c.b16 %v2589, %v2588
        %v2600 = vpack.c.b16 %v2591, %v2590
        %v2601 = vpack.c.b16 %v2593, %v2592
        %v2602 = vunpack.c.l.b16 %v2163
        %v2603 = vunpack.c.l.b16 %v2173
        %v2604 = vunpack.c.l.b16 %v2187
        %v2605 = vunpack.c.l.b16 %v2197
        %v2606 = vunpack.c.l.b16 %v2211
        %v2607 = vunpack.c.l.b16 %v2221
        %v2608 = vunpack.c.l.b16 %v2235
        %v2609 = vunpack.c.l.b16 %v2245
        %v2610 = vunpack.c.l.b16 %v2259
        %v2611 = vunpack.c.l.b16 %v2269
        %v2612 = vunpack.c.l.b16 %v2283
        %v2613 = vunpack.c.l.b16 %v2293
        %v2614 = vunpack.c.l.b16 %v2307
        %v2615 = vunpack.c.l.b16 %v2317
        %v2616 = vunpack.c.l.b16 %v2331
        %v2617 = vunpack.c.l.b16 %v2341
        %v2618 = vpack.c.b16 %v2603, %v2602
        %v2619 = vpack.c.b16 %v2605, %v2604
        %v2620 = vpack.c.b16 %v2607, %v2606
        %v2621 = vpack.c.b16 %v2609, %v2608
        %v2622 = vpack.c.b16 %v2611, %v2610
        %v2623 = vpack.c.b16 %v2613, %v2612
        %v2624 = vpack.c.b16 %v2615, %v2614
        %v2625 = vpack.c.b16 %v2617, %v2616
        %2626 = vrot.lane.b32.xlu0 %v2618, 4
        %v2627 = vpop.permute.xlu0 %2626
        %2628 = vrot.lane.b32.xlu0 %v2619, 4
        %v2629 = vpop.permute.xlu0 %2628
        %2630 = vrot.lane.b32.xlu0 %v2620, 4
        %v2631 = vpop.permute.xlu0 %2630
        %2632 = vrot.lane.b32.xlu0 %v2621, 4
        %v2633 = vpop.permute.xlu0 %2632
        %2634 = vrot.lane.b32.xlu0 %v2622, 4
        %v2635 = vpop.permute.xlu0 %2634
        %2636 = vrot.lane.b32.xlu0 %v2623, 4
        %v2637 = vpop.permute.xlu0 %2636
        %2638 = vrot.lane.b32.xlu0 %v2624, 4
        %v2639 = vpop.permute.xlu0 %2638
        %2640 = vrot.lane.b32.xlu0 %v2625, 4
        %v2641 = vpop.permute.xlu0 %2640
        %v2658 = vunpack.c.l.b16 %v2346
        %v2659 = vunpack.c.l.b16 %v2347
        %v2660 = vunpack.c.l.b16 %v2348
        %v2661 = vunpack.c.l.b16 %v2349
        %v2662 = vunpack.c.l.b16 %v2350
        %v2663 = vunpack.c.l.b16 %v2351
        %v2664 = vunpack.c.l.b16 %v2352
        %v2665 = vunpack.c.l.b16 %v2353
        %v2666 = vunpack.c.l.b16 %v2354
        %v2667 = vunpack.c.l.b16 %v2355
        %v2668 = vunpack.c.l.b16 %v2356
        %v2669 = vunpack.c.l.b16 %v2357
        %v2670 = vunpack.c.l.b16 %v2358
        %v2671 = vunpack.c.l.b16 %v2359
        %v2672 = vunpack.c.l.b16 %v2360
        %v2673 = vunpack.c.l.b16 %v2361
        %v2674 = vpack.c.b16 %v2659, %v2658
        %v2675 = vpack.c.b16 %v2661, %v2660
        %v2676 = vpack.c.b16 %v2663, %v2662
        %v2677 = vpack.c.b16 %v2665, %v2664
        %v2678 = vpack.c.b16 %v2667, %v2666
        %v2679 = vpack.c.b16 %v2669, %v2668
        %v2680 = vpack.c.b16 %v2671, %v2670
        %v2681 = vpack.c.b16 %v2673, %v2672
        %2682 = vrot.lane.b32.xlu0 %v2674, 8
        %v2683 = vpop.permute.xlu0 %2682
        %2684 = vrot.lane.b32.xlu0 %v2675, 8
        %v2685 = vpop.permute.xlu0 %2684
        %2686 = vrot.lane.b32.xlu0 %v2676, 8
        %v2687 = vpop.permute.xlu0 %2686
        %2688 = vrot.lane.b32.xlu0 %v2677, 8
        %v2689 = vpop.permute.xlu0 %2688
        %2690 = vrot.lane.b32.xlu0 %v2678, 8
        %v2691 = vpop.permute.xlu0 %2690
        %2692 = vrot.lane.b32.xlu0 %v2679, 8
        %v2693 = vpop.permute.xlu0 %2692
        %2694 = vrot.lane.b32.xlu0 %v2680, 8
        %v2695 = vpop.permute.xlu0 %2694
        %2696 = vrot.lane.b32.xlu0 %v2681, 8
        %v2697 = vpop.permute.xlu0 %2696
        %v2698 = vunpack.c.l.b16 %v2383
        %v2699 = vunpack.c.l.b16 %v2393
        %v2700 = vunpack.c.l.b16 %v2407
        %v2701 = vunpack.c.l.b16 %v2417
        %v2702 = vunpack.c.l.b16 %v2431
        %v2703 = vunpack.c.l.b16 %v2441
        %v2704 = vunpack.c.l.b16 %v2455
        %v2705 = vunpack.c.l.b16 %v2465
        %v2706 = vunpack.c.l.b16 %v2479
        %v2707 = vunpack.c.l.b16 %v2489
        %v2708 = vunpack.c.l.b16 %v2503
        %v2709 = vunpack.c.l.b16 %v2513
        %v2710 = vunpack.c.l.b16 %v2527
        %v2711 = vunpack.c.l.b16 %v2537
        %v2712 = vunpack.c.l.b16 %v2551
        %v2713 = vunpack.c.l.b16 %v2561
        %v2714 = vpack.c.b16 %v2699, %v2698
        %v2715 = vpack.c.b16 %v2701, %v2700
        %v2716 = vpack.c.b16 %v2703, %v2702
        %v2717 = vpack.c.b16 %v2705, %v2704
        %v2718 = vpack.c.b16 %v2707, %v2706
        %v2719 = vpack.c.b16 %v2709, %v2708
        %v2720 = vpack.c.b16 %v2711, %v2710
        %v2721 = vpack.c.b16 %v2713, %v2712
        %2722 = vrot.lane.b32.xlu0 %v2714, 12
        %v2723 = vpop.permute.xlu0 %2722
        %2724 = vrot.lane.b32.xlu0 %v2715, 12
        %v2725 = vpop.permute.xlu0 %2724
        %2726 = vrot.lane.b32.xlu0 %v2716, 12
        %v2727 = vpop.permute.xlu0 %2726
        %2728 = vrot.lane.b32.xlu0 %v2717, 12
        %v2729 = vpop.permute.xlu0 %2728
        %2730 = vrot.lane.b32.xlu0 %v2718, 12
        %v2731 = vpop.permute.xlu0 %2730
        %2732 = vrot.lane.b32.xlu0 %v2719, 12
        %v2733 = vpop.permute.xlu0 %2732
        %2734 = vrot.lane.b32.xlu0 %v2720, 12
        %v2735 = vpop.permute.xlu0 %2734
        %2736 = vrot.lane.b32.xlu0 %v2721, 12
        %v2737 = vpop.permute.xlu0 %2736
        %v2740 = vsel %vm845, %v2594, %v2627
        %v2743 = vsel %vm845, %v2595, %v2629
        %v2746 = vsel %vm845, %v2596, %v2631
        %v2749 = vsel %vm845, %v2597, %v2633
        %v2752 = vsel %vm845, %v2598, %v2635
        %v2755 = vsel %vm845, %v2599, %v2637
        %v2758 = vsel %vm845, %v2600, %v2639
        %v2761 = vsel %vm845, %v2601, %v2641
        %v2763 = vsel %vm870, %v2740, %v2683
        %v2765 = vsel %vm870, %v2743, %v2685
        %v2767 = vsel %vm870, %v2746, %v2687
        %v2769 = vsel %vm870, %v2749, %v2689
        %v2771 = vsel %vm870, %v2752, %v2691
        %v2773 = vsel %vm870, %v2755, %v2693
        %v2775 = vsel %vm870, %v2758, %v2695
        %v2777 = vsel %vm870, %v2761, %v2697
        %v2779 = vsel %vm887, %v2763, %v2723
        %v2781 = vsel %vm887, %v2765, %v2725
        %v2783 = vsel %vm887, %v2767, %v2727
        %v2785 = vsel %vm887, %v2769, %v2729
        %v2787 = vsel %vm887, %v2771, %v2731
        %v2789 = vsel %vm887, %v2773, %v2733
        %v2791 = vsel %vm887, %v2775, %v2735
        %v2793 = vsel %vm887, %v2777, %v2737
        %s2794 = scalar_lea.vmem %s219, 16
        %v2795 = vld [vmem:[%s2794] sm:$0xf]
        %v2796 = vld [vmem:[%s2794 + $0x4] sm:$0xf]
        %v2799 = vunpack.c.l.b16 %v2795
        %v2800 = vunpack.c.l.b16 %v2796
        %v2801 = vpack.c.b16 %v2800, %v2799
        %v2803 = vsel %vm918, %v2779, 0
        %v2805 = vsel %vm918, %v2781, 0
        %v2807 = vsel %vm918, %v2783, 0
        %v2809 = vsel %vm918, %v2785, 0
        %v2811 = vsel %vm918, %v2787, 0
        %v2813 = vsel %vm918, %v2789, 0
        %v2815 = vsel %vm918, %v2791, 0
        %v2817 = vsel %vm918, %v2793, 0
        %2819 = vmatprep.subr.bf16.mxu0 0
        %2820 = vmatpush1.bf16.msra.mxu0 %v2801
        %2821 = vmatprep.subr.bf16.mxu0 0
        %2822 = vmatpush1.bf16.msra.mxu0 0
        %2823 = vmatprep.subr.bf16.mxu0 0
        %2824 = vmatpush1.bf16.msra.mxu0 0
        %2825 = vmatprep.subr.bf16.mxu0 0
        %2826 = vmatpush1.bf16.msra.mxu0 0
        %2827 = vmatprep.subr.bf16.mxu0 0
        %2828 = vmatpush1.bf16.msra.mxu0 0
        %2829 = vmatprep.subr.bf16.mxu0 0
        %2830 = vmatpush1.bf16.msra.mxu0 0
        %2831 = vmatprep.subr.bf16.mxu0 0
        %2832 = vmatpush1.bf16.msra.mxu0 0
        %2833 = vmatprep.subr.bf16.mxu0 0
        %2834 = vmatpush1.bf16.msra.mxu0 0
        %2835 = vmatprep.subr.bf16.mxu0 0
        %2836 = vmatpush1.bf16.msra.mxu0 0
        %2837 = vmatprep.subr.bf16.mxu0 0
        %2838 = vmatpush1.bf16.msra.mxu0 0
        %2839 = vmatprep.subr.bf16.mxu0 0
        %2840 = vmatpush1.bf16.msra.mxu0 0
        %2841 = vmatprep.subr.bf16.mxu0 0
        %2842 = vmatpush1.bf16.msra.mxu0 0
        %2843 = vmatprep.subr.bf16.mxu0 0
        %2844 = vmatpush1.bf16.msra.mxu0 0
        %2845 = vmatprep.subr.bf16.mxu0 0
        %2846 = vmatpush1.bf16.msra.mxu0 0
        %2847 = vmatprep.subr.bf16.mxu0 0
        %2848 = vmatpush1.bf16.msra.mxu0 0
        %2849 = vmatprep.subr.bf16.mxu0 0
        %2850 = vmatpush1.bf16.msra.mxu0 0
        %2851 = vmatprep.mubr.bf16.mxu0 0
        %2852 = vmatmul.mubr.bf16.gmra.mrb[0].mxu0 %v2803
        %v2853 = vpop.f32.mrb[0].mxu0
        %v2854 = vadd.f32 %v910, %v2853
        %v2855 = vpop.f32.mrb[0].mxu0
        %v2856 = vpop.f32.mrb[0].mxu0
        %v2857 = vadd.f32 %v910, %v2856
        %v2858 = vpop.f32.mrb[0].mxu0
        %2859 = vmatprep.mubr.bf16.mxu0 0
        %2860 = vmatmul.mubr.bf16.gmra.mrb[0].mxu0 %v2805
        %v2861 = vpop.f32.mrb[0].mxu0
        %v2862 = vadd.f32 %v910, %v2861
        %v2863 = vpop.f32.mrb[0].mxu0
        %v2864 = vpop.f32.mrb[0].mxu0
        %v2865 = vadd.f32 %v910, %v2864
        %v2866 = vpop.f32.mrb[0].mxu0
        %2867 = vmatprep.mubr.bf16.mxu0 0
        %2868 = vmatmul.mubr.bf16.gmra.mrb[0].mxu0 %v2807
        %v2869 = vpop.f32.mrb[0].mxu0
        %v2870 = vadd.f32 %v910, %v2869
        %v2871 = vpop.f32.mrb[0].mxu0
        %v2872 = vpop.f32.mrb[0].mxu0
        %v2873 = vadd.f32 %v910, %v2872
        %v2874 = vpop.f32.mrb[0].mxu0
        %2875 = vmatprep.mubr.bf16.mxu0 0
        %2876 = vmatmul.mubr.bf16.gmra.mrb[0].mxu0 %v2809
        %v2877 = vpop.f32.mrb[0].mxu0
        %v2878 = vadd.f32 %v910, %v2877
        %v2879 = vpop.f32.mrb[0].mxu0
        %v2880 = vpop.f32.mrb[0].mxu0
        %v2881 = vadd.f32 %v910, %v2880
        %v2882 = vpop.f32.mrb[0].mxu0
        %2883 = vmatprep.mubr.bf16.mxu0 0
        %2884 = vmatmul.mubr.bf16.gmra.mrb[0].mxu0 %v2811
        %v2885 = vpop.f32.mrb[0].mxu0
        %v2886 = vadd.f32 %v910, %v2885
        %v2887 = vpop.f32.mrb[0].mxu0
        %v2888 = vpop.f32.mrb[0].mxu0
        %v2889 = vadd.f32 %v910, %v2888
        %v2890 = vpop.f32.mrb[0].mxu0
        %2891 = vmatprep.mubr.bf16.mxu0 0
        %2892 = vmatmul.mubr.bf16.gmra.mrb[0].mxu0 %v2813
        %v2893 = vpop.f32.mrb[0].mxu0
        %v2894 = vadd.f32 %v910, %v2893
        %v2895 = vpop.f32.mrb[0].mxu0
        %v2896 = vpop.f32.mrb[0].mxu0
        %v2897 = vadd.f32 %v910, %v2896
        %v2898 = vpop.f32.mrb[0].mxu0
        %2899 = vmatprep.mubr.bf16.mxu0 0
        %2900 = vmatmul.mubr.bf16.gmra.mrb[0].mxu0 %v2815
        %v2901 = vpop.f32.mrb[0].mxu0
        %v2902 = vadd.f32 %v910, %v2901
        %v2903 = vpop.f32.mrb[0].mxu0
        %v2904 = vpop.f32.mrb[0].mxu0
        %v2905 = vadd.f32 %v910, %v2904
        %v2906 = vpop.f32.mrb[0].mxu0
        %2907 = vmatprep.mubr.bf16.mxu0 0
        %2908 = vmatmul.mubr.bf16.gmra.mrb[0].mxu0 %v2817
        %v2909 = vpop.f32.mrb[0].mxu0
        %v2910 = vadd.f32 %v910, %v2909
        %v2911 = vpop.f32.mrb[0].mxu0
        %v2912 = vpop.f32.mrb[0].mxu0
        %v2913 = vadd.f32 %v910, %v2912
        %v2914 = vpop.f32.mrb[0].mxu0
        %2915 = vdwg.mxu0
        %v2916 = vpack.c.bf16 %v2857, %v2854
        %v2917 = vpack.c.bf16 %v2865, %v2862
        %v2918 = vpack.c.bf16 %v2873, %v2870
        %v2919 = vpack.c.bf16 %v2881, %v2878
        %v2920 = vpack.c.bf16 %v2889, %v2886
        %v2921 = vpack.c.bf16 %v2897, %v2894
        %v2922 = vpack.c.bf16 %v2905, %v2902
        %v2923 = vpack.c.bf16 %v2913, %v2910
        %v2932 = vunpack.c.l.b16 %v2916
        %v2933 = vunpack.c.h.b16 %v2916
        %v2934 = vunpack.c.l.b16 %v2917
        %v2935 = vunpack.c.h.b16 %v2917
        %v2936 = vunpack.c.l.b16 %v2918
        %v2937 = vunpack.c.h.b16 %v2918
        %v2938 = vunpack.c.l.b16 %v2919
        %v2939 = vunpack.c.h.b16 %v2919
        %v2940 = vunpack.c.l.b16 %v2920
        %v2941 = vunpack.c.h.b16 %v2920
        %v2942 = vunpack.c.l.b16 %v2921
        %v2943 = vunpack.c.h.b16 %v2921
        %v2944 = vunpack.c.l.b16 %v2922
        %v2945 = vunpack.c.h.b16 %v2922
        %v2946 = vunpack.c.l.b16 %v2923
        %v2947 = vunpack.c.h.b16 %v2923
        %v2948 = vpack.c.b16 %v2932, %v2932
        %v2949 = vpack.c.b16 %v2933, %v2933
        %v2950 = vpack.c.b16 %v2934, %v2934
        %v2951 = vpack.c.b16 %v2935, %v2935
        %v2952 = vpack.c.b16 %v2936, %v2936
        %v2953 = vpack.c.b16 %v2937, %v2937
        %v2954 = vpack.c.b16 %v2938, %v2938
        %v2955 = vpack.c.b16 %v2939, %v2939
        %v2956 = vpack.c.b16 %v2940, %v2940
        %v2957 = vpack.c.b16 %v2941, %v2941
        %v2958 = vpack.c.b16 %v2942, %v2942
        %v2959 = vpack.c.b16 %v2943, %v2943
        %v2960 = vpack.c.b16 %v2944, %v2944
        %v2961 = vpack.c.b16 %v2945, %v2945
        %v2962 = vpack.c.b16 %v2946, %v2946
        %v2963 = vpack.c.b16 %v2947, %v2947
        %s2980 = scalar_lea.vmem %s210, 128 [#allocation2]
        %2981 = vst [vmem:[%s2980] sm:$0xf] %v2948
        %2982 = vst [vmem:[%s2980 + $0x4] sm:$0xf] %v2949
        %2983 = vst [vmem:[%s2980 + $0x8] sm:$0xf] %v2950
        %2984 = vst [vmem:[%s2980 + $0xc] sm:$0xf] %v2951
        %2985 = vst [vmem:[%s2980 + $0x10] sm:$0xf] %v2952
        %2986 = vst [vmem:[%s2980 + $0x14] sm:$0xf] %v2953
        %2987 = vst [vmem:[%s2980 + $0x18] sm:$0xf] %v2954
        %2988 = vst [vmem:[%s2980 + $0x1c] sm:$0xf] %v2955
        %2989 = vst [vmem:[%s2980 + $0x20] sm:$0xf] %v2956
        %2990 = vst [vmem:[%s2980 + $0x24] sm:$0xf] %v2957
        %2991 = vst [vmem:[%s2980 + $0x28] sm:$0xf] %v2958
        %2992 = vst [vmem:[%s2980 + $0x2c] sm:$0xf] %v2959
        %2993 = vst [vmem:[%s2980 + $0x30] sm:$0xf] %v2960
        %2994 = vst [vmem:[%s2980 + $0x34] sm:$0xf] %v2961
        %2995 = vst [vmem:[%s2980 + $0x38] sm:$0xf] %v2962
        %2996 = vst [vmem:[%s2980 + $0x3c] sm:$0xf] %v2963
        %v2997 = vld [vmem:[%s452] sm:$0xf]
        %v2998 = vld [vmem:[%s452 + $0x4] sm:$0xf]
        %v2999 = vld [vmem:[%s452 + $0x8] sm:$0x1]
        %v3000 = vld [vmem:[%s452 + $0xc] sm:$0xf]
        %v3001 = vld [vmem:[%s452 + $0x10] sm:$0xf]
        %v3002 = vld [vmem:[%s452 + $0x14] sm:$0x1]
        %v3003 = vld [vmem:[%s452 + $0x18] sm:$0xf]
        %v3004 = vld [vmem:[%s452 + $0x1c] sm:$0xf]
        %v3005 = vld [vmem:[%s452 + $0x20] sm:$0x1]
        %v3006 = vld [vmem:[%s452 + $0x24] sm:$0xf]
        %v3007 = vld [vmem:[%s452 + $0x28] sm:$0xf]
        %v3008 = vld [vmem:[%s452 + $0x2c] sm:$0x1]
        %v3009 = vld [vmem:[%s452 + $0x30] sm:$0xf]
        %v3010 = vld [vmem:[%s452 + $0x34] sm:$0xf]
        %v3011 = vld [vmem:[%s452 + $0x38] sm:$0x1]
        %v3012 = vld [vmem:[%s452 + $0x3c] sm:$0xf]
        %v3013 = vld [vmem:[%s452 + $0x40] sm:$0xf]
        %v3014 = vld [vmem:[%s452 + $0x44] sm:$0x1]
        %v3015 = vld [vmem:[%s452 + $0x48] sm:$0xf]
        %v3016 = vld [vmem:[%s452 + $0x4c] sm:$0xf]
        %v3017 = vld [vmem:[%s452 + $0x50] sm:$0x1]
        %v3018 = vld [vmem:[%s452 + $0x54] sm:$0xf]
        %v3019 = vld [vmem:[%s452 + $0x58] sm:$0xf]
        %v3020 = vld [vmem:[%s452 + $0x5c] sm:$0x1]
        %v3022 = vshrl.u32 %v2997, 16
        %v3024 = vrot.slane %v3022, 4
        %v3025 = vshll.u32 %v2997, 16
        %v3027 = vrot.slane %v3025, 5
        %v3028 = vor.u32 %v3024, %v3027
        %v3029 = vrot.slane %v3028, 4
        %v3031 = vshll.u32 %v2998, 16
        %v3033 = vrot.slane %v3031, 5
        %v3034 = vsel %vm256, %v3029, %v3033
        %v3035 = vshrl.u32 %v2998, 16
        %v3037 = vrot.slane %v3035, 4
        %v3038 = vor.u32 %v3037, %v3033
        %v3039 = vrot.slane %v3038, 4
        %v3041 = vshll.u32 %v2999, 16
        %v3043 = vrot.slane %v3041, 5
        %v3044 = vsel %vm256, %v3039, %v3043
        %v3046 = vshrl.u32 %v3000, 16
        %v3048 = vrot.slane %v3046, 4
        %v3049 = vshll.u32 %v3000, 16
        %v3051 = vrot.slane %v3049, 5
        %v3052 = vor.u32 %v3048, %v3051
        %v3053 = vrot.slane %v3052, 4
        %v3055 = vshll.u32 %v3001, 16
        %v3057 = vrot.slane %v3055, 5
        %v3058 = vsel %vm256, %v3053, %v3057
        %v3059 = vshrl.u32 %v3001, 16
        %v3061 = vrot.slane %v3059, 4
        %v3062 = vor.u32 %v3061, %v3057
        %v3063 = vrot.slane %v3062, 4
        %v3065 = vshll.u32 %v3002, 16
        %v3067 = vrot.slane %v3065, 5
        %v3068 = vsel %vm256, %v3063, %v3067
        %v3070 = vshrl.u32 %v3003, 16
        %v3072 = vrot.slane %v3070, 4
        %v3073 = vshll.u32 %v3003, 16
        %v3075 = vrot.slane %v3073, 5
        %v3076 = vor.u32 %v3072, %v3075
        %v3077 = vrot.slane %v3076, 4
        %v3079 = vshll.u32 %v3004, 16
        %v3081 = vrot.slane %v3079, 5
        %v3082 = vsel %vm256, %v3077, %v3081
        %v3083 = vshrl.u32 %v3004, 16
        %v3085 = vrot.slane %v3083, 4
        %v3086 = vor.u32 %v3085, %v3081
        %v3087 = vrot.slane %v3086, 4
        %v3089 = vshll.u32 %v3005, 16
        %v3091 = vrot.slane %v3089, 5
        %v3092 = vsel %vm256, %v3087, %v3091
        %v3094 = vshrl.u32 %v3006, 16
        %v3096 = vrot.slane %v3094, 4
        %v3097 = vshll.u32 %v3006, 16
        %v3099 = vrot.slane %v3097, 5
        %v3100 = vor.u32 %v3096, %v3099
        %v3101 = vrot.slane %v3100, 4
        %v3103 = vshll.u32 %v3007, 16
        %v3105 = vrot.slane %v3103, 5
        %v3106 = vsel %vm256, %v3101, %v3105
        %v3107 = vshrl.u32 %v3007, 16
        %v3109 = vrot.slane %v3107, 4
        %v3110 = vor.u32 %v3109, %v3105
        %v3111 = vrot.slane %v3110, 4
        %v3113 = vshll.u32 %v3008, 16
        %v3115 = vrot.slane %v3113, 5
        %v3116 = vsel %vm256, %v3111, %v3115
        %v3118 = vshrl.u32 %v3009, 16
        %v3120 = vrot.slane %v3118, 4
        %v3121 = vshll.u32 %v3009, 16
        %v3123 = vrot.slane %v3121, 5
        %v3124 = vor.u32 %v3120, %v3123
        %v3125 = vrot.slane %v3124, 4
        %v3127 = vshll.u32 %v3010, 16
        %v3129 = vrot.slane %v3127, 5
        %v3130 = vsel %vm256, %v3125, %v3129
        %v3131 = vshrl.u32 %v3010, 16
        %v3133 = vrot.slane %v3131, 4
        %v3134 = vor.u32 %v3133, %v3129
        %v3135 = vrot.slane %v3134, 4
        %v3137 = vshll.u32 %v3011, 16
        %v3139 = vrot.slane %v3137, 5
        %v3140 = vsel %vm256, %v3135, %v3139
        %v3142 = vshrl.u32 %v3012, 16
        %v3144 = vrot.slane %v3142, 4
        %v3145 = vshll.u32 %v3012, 16
        %v3147 = vrot.slane %v3145, 5
        %v3148 = vor.u32 %v3144, %v3147
        %v3149 = vrot.slane %v3148, 4
        %v3151 = vshll.u32 %v3013, 16
        %v3153 = vrot.slane %v3151, 5
        %v3154 = vsel %vm256, %v3149, %v3153
        %v3155 = vshrl.u32 %v3013, 16
        %v3157 = vrot.slane %v3155, 4
        %v3158 = vor.u32 %v3157, %v3153
        %v3159 = vrot.slane %v3158, 4
        %v3161 = vshll.u32 %v3014, 16
        %v3163 = vrot.slane %v3161, 5
        %v3164 = vsel %vm256, %v3159, %v3163
        %v3166 = vshrl.u32 %v3015, 16
        %v3168 = vrot.slane %v3166, 4
        %v3169 = vshll.u32 %v3015, 16
        %v3171 = vrot.slane %v3169, 5
        %v3172 = vor.u32 %v3168, %v3171
        %v3173 = vrot.slane %v3172, 4
        %v3175 = vshll.u32 %v3016, 16
        %v3177 = vrot.slane %v3175, 5
        %v3178 = vsel %vm256, %v3173, %v3177
        %v3179 = vshrl.u32 %v3016, 16
        %v3181 = vrot.slane %v3179, 4
        %v3182 = vor.u32 %v3181, %v3177
        %v3183 = vrot.slane %v3182, 4
        %v3185 = vshll.u32 %v3017, 16
        %v3187 = vrot.slane %v3185, 5
        %v3188 = vsel %vm256, %v3183, %v3187
        %v3190 = vshrl.u32 %v3018, 16
        %v3192 = vrot.slane %v3190, 4
        %v3193 = vshll.u32 %v3018, 16
        %v3195 = vrot.slane %v3193, 5
        %v3196 = vor.u32 %v3192, %v3195
        %v3197 = vrot.slane %v3196, 4
        %v3199 = vshll.u32 %v3019, 16
        %v3201 = vrot.slane %v3199, 5
        %v3202 = vsel %vm256, %v3197, %v3201
        %v3203 = vshrl.u32 %v3019, 16
        %v3205 = vrot.slane %v3203, 4
        %v3206 = vor.u32 %v3205, %v3201
        %v3207 = vrot.slane %v3206, 4
        %v3209 = vshll.u32 %v3020, 16
        %v3211 = vrot.slane %v3209, 5
        %v3212 = vsel %vm256, %v3207, %v3211
        %v3213 = vld [vmem:[%s452] sm:$0xe]
        %v3214 = vld [vmem:[%s452 + $0xc] sm:$0xe]
        %v3215 = vld [vmem:[%s452 + $0x18] sm:$0xe]
        %v3216 = vld [vmem:[%s452 + $0x24] sm:$0xe]
        %v3217 = vld [vmem:[%s452 + $0x30] sm:$0xe]
        %v3218 = vld [vmem:[%s452 + $0x3c] sm:$0xe]
        %v3219 = vld [vmem:[%s452 + $0x48] sm:$0xe]
        %v3220 = vld [vmem:[%s452 + $0x54] sm:$0xe]
        %v3245 = vrot.slane %v3213, 5
        %v3246 = vrot.slane %v3245, 4
        %v3247 = vrot.slane %v2998, 5
        %v3248 = vsel %vm1362, %v3246, %v3247
        %v3249 = vrot.slane %v3247, 4
        %v3250 = vrot.slane %v2999, 5
        %v3251 = vsel %vm1362, %v3249, %v3250
        %v3252 = vrot.slane %v3214, 5
        %v3253 = vrot.slane %v3252, 4
        %v3254 = vrot.slane %v3001, 5
        %v3255 = vsel %vm1362, %v3253, %v3254
        %v3256 = vrot.slane %v3254, 4
        %v3257 = vrot.slane %v3002, 5
        %v3258 = vsel %vm1362, %v3256, %v3257
        %v3259 = vrot.slane %v3215, 5
        %v3260 = vrot.slane %v3259, 4
        %v3261 = vrot.slane %v3004, 5
        %v3262 = vsel %vm1362, %v3260, %v3261
        %v3263 = vrot.slane %v3261, 4
        %v3264 = vrot.slane %v3005, 5
        %v3265 = vsel %vm1362, %v3263, %v3264
        %v3266 = vrot.slane %v3216, 5
        %v3267 = vrot.slane %v3266, 4
        %v3268 = vrot.slane %v3007, 5
        %v3269 = vsel %vm1362, %v3267, %v3268
        %v3270 = vrot.slane %v3268, 4
        %v3271 = vrot.slane %v3008, 5
        %v3272 = vsel %vm1362, %v3270, %v3271
        %v3273 = vrot.slane %v3217, 5
        %v3274 = vrot.slane %v3273, 4
        %v3275 = vrot.slane %v3010, 5
        %v3276 = vsel %vm1362, %v3274, %v3275
        %v3277 = vrot.slane %v3275, 4
        %v3278 = vrot.slane %v3011, 5
        %v3279 = vsel %vm1362, %v3277, %v3278
        %v3280 = vrot.slane %v3218, 5
        %v3281 = vrot.slane %v3280, 4
        %v3282 = vrot.slane %v3013, 5
        %v3283 = vsel %vm1362, %v3281, %v3282
        %v3284 = vrot.slane %v3282, 4
        %v3285 = vrot.slane %v3014, 5
        %v3286 = vsel %vm1362, %v3284, %v3285
        %v3287 = vrot.slane %v3219, 5
        %v3288 = vrot.slane %v3287, 4
        %v3289 = vrot.slane %v3016, 5
        %v3290 = vsel %vm1362, %v3288, %v3289
        %v3291 = vrot.slane %v3289, 4
        %v3292 = vrot.slane %v3017, 5
        %v3293 = vsel %vm1362, %v3291, %v3292
        %v3294 = vrot.slane %v3220, 5
        %v3295 = vrot.slane %v3294, 4
        %v3296 = vrot.slane %v3019, 5
        %v3297 = vsel %vm1362, %v3295, %v3296
        %v3298 = vrot.slane %v3296, 4
        %v3299 = vrot.slane %v3020, 5
        %v3300 = vsel %vm1362, %v3298, %v3299
        %v3301 = vld [vmem:[%s2345] sm:$0xf]
        %v3302 = vld [vmem:[%s2345 + $0x4] sm:$0xf]
        %v3303 = vld [vmem:[%s2345 + $0x8] sm:$0x1]
        %v3304 = vld [vmem:[%s2345 + $0xc] sm:$0xf]
        %v3305 = vld [vmem:[%s2345 + $0x10] sm:$0xf]
        %v3306 = vld [vmem:[%s2345 + $0x14] sm:$0x1]
        %v3307 = vld [vmem:[%s2345 + $0x18] sm:$0xf]
        %v3308 = vld [vmem:[%s2345 + $0x1c] sm:$0xf]
        %v3309 = vld [vmem:[%s2345 + $0x20] sm:$0x1]
        %v3310 = vld [vmem:[%s2345 + $0x24] sm:$0xf]
        %v3311 = vld [vmem:[%s2345 + $0x28] sm:$0xf]
        %v3312 = vld [vmem:[%s2345 + $0x2c] sm:$0x1]
        %v3313 = vld [vmem:[%s2345 + $0x30] sm:$0xf]
        %v3314 = vld [vmem:[%s2345 + $0x34] sm:$0xf]
        %v3315 = vld [vmem:[%s2345 + $0x38] sm:$0x1]
        %v3316 = vld [vmem:[%s2345 + $0x3c] sm:$0xf]
        %v3317 = vld [vmem:[%s2345 + $0x40] sm:$0xf]
        %v3318 = vld [vmem:[%s2345 + $0x44] sm:$0x1]
        %v3319 = vld [vmem:[%s2345 + $0x48] sm:$0xf]
        %v3320 = vld [vmem:[%s2345 + $0x4c] sm:$0xf]
        %v3321 = vld [vmem:[%s2345 + $0x50] sm:$0x1]
        %v3322 = vld [vmem:[%s2345 + $0x54] sm:$0xf]
        %v3323 = vld [vmem:[%s2345 + $0x58] sm:$0xf]
        %v3324 = vld [vmem:[%s2345 + $0x5c] sm:$0x1]
        %v3326 = vshrl.u32 %v3301, 16
        %v3328 = vrot.slane %v3326, 4
        %v3329 = vshll.u32 %v3301, 16
        %v3331 = vrot.slane %v3329, 5
        %v3332 = vor.u32 %v3328, %v3331
        %v3333 = vrot.slane %v3332, 4
        %v3335 = vshll.u32 %v3302, 16
        %v3337 = vrot.slane %v3335, 5
        %v3338 = vsel %vm256, %v3333, %v3337
        %v3339 = vshrl.u32 %v3302, 16
        %v3341 = vrot.slane %v3339, 4
        %v3342 = vor.u32 %v3341, %v3337
        %v3343 = vrot.slane %v3342, 4
        %v3345 = vshll.u32 %v3303, 16
        %v3347 = vrot.slane %v3345, 5
        %v3348 = vsel %vm256, %v3343, %v3347
        %v3350 = vshrl.u32 %v3304, 16
        %v3352 = vrot.slane %v3350, 4
        %v3353 = vshll.u32 %v3304, 16
        %v3355 = vrot.slane %v3353, 5
        %v3356 = vor.u32 %v3352, %v3355
        %v3357 = vrot.slane %v3356, 4
        %v3359 = vshll.u32 %v3305, 16
        %v3361 = vrot.slane %v3359, 5
        %v3362 = vsel %vm256, %v3357, %v3361
        %v3363 = vshrl.u32 %v3305, 16
        %v3365 = vrot.slane %v3363, 4
        %v3366 = vor.u32 %v3365, %v3361
        %v3367 = vrot.slane %v3366, 4
        %v3369 = vshll.u32 %v3306, 16
        %v3371 = vrot.slane %v3369, 5
        %v3372 = vsel %vm256, %v3367, %v3371
        %v3374 = vshrl.u32 %v3307, 16
        %v3376 = vrot.slane %v3374, 4
        %v3377 = vshll.u32 %v3307, 16
        %v3379 = vrot.slane %v3377, 5
        %v3380 = vor.u32 %v3376, %v3379
        %v3381 = vrot.slane %v3380, 4
        %v3383 = vshll.u32 %v3308, 16
        %v3385 = vrot.slane %v3383, 5
        %v3386 = vsel %vm256, %v3381, %v3385
        %v3387 = vshrl.u32 %v3308, 16
        %v3389 = vrot.slane %v3387, 4
        %v3390 = vor.u32 %v3389, %v3385
        %v3391 = vrot.slane %v3390, 4
        %v3393 = vshll.u32 %v3309, 16
        %v3395 = vrot.slane %v3393, 5
        %v3396 = vsel %vm256, %v3391, %v3395
        %v3398 = vshrl.u32 %v3310, 16
        %v3400 = vrot.slane %v3398, 4
        %v3401 = vshll.u32 %v3310, 16
        %v3403 = vrot.slane %v3401, 5
        %v3404 = vor.u32 %v3400, %v3403
        %v3405 = vrot.slane %v3404, 4
        %v3407 = vshll.u32 %v3311, 16
        %v3409 = vrot.slane %v3407, 5
        %v3410 = vsel %vm256, %v3405, %v3409
        %v3411 = vshrl.u32 %v3311, 16
        %v3413 = vrot.slane %v3411, 4
        %v3414 = vor.u32 %v3413, %v3409
        %v3415 = vrot.slane %v3414, 4
        %v3417 = vshll.u32 %v3312, 16
        %v3419 = vrot.slane %v3417, 5
        %v3420 = vsel %vm256, %v3415, %v3419
        %v3422 = vshrl.u32 %v3313, 16
        %v3424 = vrot.slane %v3422, 4
        %v3425 = vshll.u32 %v3313, 16
        %v3427 = vrot.slane %v3425, 5
        %v3428 = vor.u32 %v3424, %v3427
        %v3429 = vrot.slane %v3428, 4
        %v3431 = vshll.u32 %v3314, 16
        %v3433 = vrot.slane %v3431, 5
        %v3434 = vsel %vm256, %v3429, %v3433
        %v3435 = vshrl.u32 %v3314, 16
        %v3437 = vrot.slane %v3435, 4
        %v3438 = vor.u32 %v3437, %v3433
        %v3439 = vrot.slane %v3438, 4
        %v3441 = vshll.u32 %v3315, 16
        %v3443 = vrot.slane %v3441, 5
        %v3444 = vsel %vm256, %v3439, %v3443
        %v3446 = vshrl.u32 %v3316, 16
        %v3448 = vrot.slane %v3446, 4
        %v3449 = vshll.u32 %v3316, 16
        %v3451 = vrot.slane %v3449, 5
        %v3452 = vor.u32 %v3448, %v3451
        %v3453 = vrot.slane %v3452, 4
        %v3455 = vshll.u32 %v3317, 16
        %v3457 = vrot.slane %v3455, 5
        %v3458 = vsel %vm256, %v3453, %v3457
        %v3459 = vshrl.u32 %v3317, 16
        %v3461 = vrot.slane %v3459, 4
        %v3462 = vor.u32 %v3461, %v3457
        %v3463 = vrot.slane %v3462, 4
        %v3465 = vshll.u32 %v3318, 16
        %v3467 = vrot.slane %v3465, 5
        %v3468 = vsel %vm256, %v3463, %v3467
        %v3470 = vshrl.u32 %v3319, 16
        %v3472 = vrot.slane %v3470, 4
        %v3473 = vshll.u32 %v3319, 16
        %v3475 = vrot.slane %v3473, 5
        %v3476 = vor.u32 %v3472, %v3475
        %v3477 = vrot.slane %v3476, 4
        %v3479 = vshll.u32 %v3320, 16
        %v3481 = vrot.slane %v3479, 5
        %v3482 = vsel %vm256, %v3477, %v3481
        %v3483 = vshrl.u32 %v3320, 16
        %v3485 = vrot.slane %v3483, 4
        %v3486 = vor.u32 %v3485, %v3481
        %v3487 = vrot.slane %v3486, 4
        %v3489 = vshll.u32 %v3321, 16
        %v3491 = vrot.slane %v3489, 5
        %v3492 = vsel %vm256, %v3487, %v3491
        %v3494 = vshrl.u32 %v3322, 16
        %v3496 = vrot.slane %v3494, 4
        %v3497 = vshll.u32 %v3322, 16
        %v3499 = vrot.slane %v3497, 5
        %v3500 = vor.u32 %v3496, %v3499
        %v3501 = vrot.slane %v3500, 4
        %v3503 = vshll.u32 %v3323, 16
        %v3505 = vrot.slane %v3503, 5
        %v3506 = vsel %vm256, %v3501, %v3505
        %v3507 = vshrl.u32 %v3323, 16
        %v3509 = vrot.slane %v3507, 4
        %v3510 = vor.u32 %v3509, %v3505
        %v3511 = vrot.slane %v3510, 4
        %v3513 = vshll.u32 %v3324, 16
        %v3515 = vrot.slane %v3513, 5
        %v3516 = vsel %vm256, %v3511, %v3515
        %v3517 = vld [vmem:[%s2345] sm:$0xe]
        %v3518 = vld [vmem:[%s2345 + $0xc] sm:$0xe]
        %v3519 = vld [vmem:[%s2345 + $0x18] sm:$0xe]
        %v3520 = vld [vmem:[%s2345 + $0x24] sm:$0xe]
        %v3521 = vld [vmem:[%s2345 + $0x30] sm:$0xe]
        %v3522 = vld [vmem:[%s2345 + $0x3c] sm:$0xe]
        %v3523 = vld [vmem:[%s2345 + $0x48] sm:$0xe]
        %v3524 = vld [vmem:[%s2345 + $0x54] sm:$0xe]
        %v3549 = vrot.slane %v3517, 5
        %v3550 = vrot.slane %v3549, 4
        %v3551 = vrot.slane %v3302, 5
        %v3552 = vsel %vm1362, %v3550, %v3551
        %v3553 = vrot.slane %v3551, 4
        %v3554 = vrot.slane %v3303, 5
        %v3555 = vsel %vm1362, %v3553, %v3554
        %v3556 = vrot.slane %v3518, 5
        %v3557 = vrot.slane %v3556, 4
        %v3558 = vrot.slane %v3305, 5
        %v3559 = vsel %vm1362, %v3557, %v3558
        %v3560 = vrot.slane %v3558, 4
        %v3561 = vrot.slane %v3306, 5
        %v3562 = vsel %vm1362, %v3560, %v3561
        %v3563 = vrot.slane %v3519, 5
        %v3564 = vrot.slane %v3563, 4
        %v3565 = vrot.slane %v3308, 5
        %v3566 = vsel %vm1362, %v3564, %v3565
        %v3567 = vrot.slane %v3565, 4
        %v3568 = vrot.slane %v3309, 5
        %v3569 = vsel %vm1362, %v3567, %v3568
        %v3570 = vrot.slane %v3520, 5
        %v3571 = vrot.slane %v3570, 4
        %v3572 = vrot.slane %v3311, 5
        %v3573 = vsel %vm1362, %v3571, %v3572
        %v3574 = vrot.slane %v3572, 4
        %v3575 = vrot.slane %v3312, 5
        %v3576 = vsel %vm1362, %v3574, %v3575
        %v3577 = vrot.slane %v3521, 5
        %v3578 = vrot.slane %v3577, 4
        %v3579 = vrot.slane %v3314, 5
        %v3580 = vsel %vm1362, %v3578, %v3579
        %v3581 = vrot.slane %v3579, 4
        %v3582 = vrot.slane %v3315, 5
        %v3583 = vsel %vm1362, %v3581, %v3582
        %v3584 = vrot.slane %v3522, 5
        %v3585 = vrot.slane %v3584, 4
        %v3586 = vrot.slane %v3317, 5
        %v3587 = vsel %vm1362, %v3585, %v3586
        %v3588 = vrot.slane %v3586, 4
        %v3589 = vrot.slane %v3318, 5
        %v3590 = vsel %vm1362, %v3588, %v3589
        %v3591 = vrot.slane %v3523, 5
        %v3592 = vrot.slane %v3591, 4
        %v3593 = vrot.slane %v3320, 5
        %v3594 = vsel %vm1362, %v3592, %v3593
        %v3595 = vrot.slane %v3593, 4
        %v3596 = vrot.slane %v3321, 5
        %v3597 = vsel %vm1362, %v3595, %v3596
        %v3598 = vrot.slane %v3524, 5
        %v3599 = vrot.slane %v3598, 4
        %v3600 = vrot.slane %v3323, 5
        %v3601 = vsel %vm1362, %v3599, %v3600
        %v3602 = vrot.slane %v3600, 4
        %v3603 = vrot.slane %v3324, 5
        %v3604 = vsel %vm1362, %v3602, %v3603
        %v3605 = vunpack.c.l.b16 %v3034
        %v3606 = vunpack.c.l.b16 %v3044
        %v3607 = vunpack.c.l.b16 %v3058
        %v3608 = vunpack.c.l.b16 %v3068
        %v3609 = vunpack.c.l.b16 %v3082
        %v3610 = vunpack.c.l.b16 %v3092
        %v3611 = vunpack.c.l.b16 %v3106
        %v3612 = vunpack.c.l.b16 %v3116
        %v3613 = vunpack.c.l.b16 %v3130
        %v3614 = vunpack.c.l.b16 %v3140
        %v3615 = vunpack.c.l.b16 %v3154
        %v3616 = vunpack.c.l.b16 %v3164
        %v3617 = vunpack.c.l.b16 %v3178
        %v3618 = vunpack.c.l.b16 %v3188
        %v3619 = vunpack.c.l.b16 %v3202
        %v3620 = vunpack.c.l.b16 %v3212
        %v3621 = vpack.c.b16 %v3606, %v3605
        %v3622 = vpack.c.b16 %v3608, %v3607
        %v3623 = vpack.c.b16 %v3610, %v3609
        %v3624 = vpack.c.b16 %v3612, %v3611
        %v3625 = vpack.c.b16 %v3614, %v3613
        %v3626 = vpack.c.b16 %v3616, %v3615
        %v3627 = vpack.c.b16 %v3618, %v3617
        %v3628 = vpack.c.b16 %v3620, %v3619
        %v3629 = vunpack.c.l.b16 %v3248
        %v3630 = vunpack.c.l.b16 %v3251
        %v3631 = vunpack.c.l.b16 %v3255
        %v3632 = vunpack.c.l.b16 %v3258
        %v3633 = vunpack.c.l.b16 %v3262
        %v3634 = vunpack.c.l.b16 %v3265
        %v3635 = vunpack.c.l.b16 %v3269
        %v3636 = vunpack.c.l.b16 %v3272
        %v3637 = vunpack.c.l.b16 %v3276
        %v3638 = vunpack.c.l.b16 %v3279
        %v3639 = vunpack.c.l.b16 %v3283
        %v3640 = vunpack.c.l.b16 %v3286
        %v3641 = vunpack.c.l.b16 %v3290
        %v3642 = vunpack.c.l.b16 %v3293
        %v3643 = vunpack.c.l.b16 %v3297
        %v3644 = vunpack.c.l.b16 %v3300
        %v3645 = vpack.c.b16 %v3630, %v3629
        %v3646 = vpack.c.b16 %v3632, %v3631
        %v3647 = vpack.c.b16 %v3634, %v3633
        %v3648 = vpack.c.b16 %v3636, %v3635
        %v3649 = vpack.c.b16 %v3638, %v3637
        %v3650 = vpack.c.b16 %v3640, %v3639
        %v3651 = vpack.c.b16 %v3642, %v3641
        %v3652 = vpack.c.b16 %v3644, %v3643
        %3653 = vrot.lane.b32.xlu0 %v3645, 4
        %v3654 = vpop.permute.xlu0 %3653
        %3655 = vrot.lane.b32.xlu0 %v3646, 4
        %v3656 = vpop.permute.xlu0 %3655
        %3657 = vrot.lane.b32.xlu0 %v3647, 4
        %v3658 = vpop.permute.xlu0 %3657
        %3659 = vrot.lane.b32.xlu0 %v3648, 4
        %v3660 = vpop.permute.xlu0 %3659
        %3661 = vrot.lane.b32.xlu0 %v3649, 4
        %v3662 = vpop.permute.xlu0 %3661
        %3663 = vrot.lane.b32.xlu0 %v3650, 4
        %v3664 = vpop.permute.xlu0 %3663
        %3665 = vrot.lane.b32.xlu0 %v3651, 4
        %v3666 = vpop.permute.xlu0 %3665
        %3667 = vrot.lane.b32.xlu0 %v3652, 4
        %v3668 = vpop.permute.xlu0 %3667
        %v3669 = vunpack.c.l.b16 %v3338
        %v3670 = vunpack.c.l.b16 %v3348
        %v3671 = vunpack.c.l.b16 %v3362
        %v3672 = vunpack.c.l.b16 %v3372
        %v3673 = vunpack.c.l.b16 %v3386
        %v3674 = vunpack.c.l.b16 %v3396
        %v3675 = vunpack.c.l.b16 %v3410
        %v3676 = vunpack.c.l.b16 %v3420
        %v3677 = vunpack.c.l.b16 %v3434
        %v3678 = vunpack.c.l.b16 %v3444
        %v3679 = vunpack.c.l.b16 %v3458
        %v3680 = vunpack.c.l.b16 %v3468
        %v3681 = vunpack.c.l.b16 %v3482
        %v3682 = vunpack.c.l.b16 %v3492
        %v3683 = vunpack.c.l.b16 %v3506
        %v3684 = vunpack.c.l.b16 %v3516
        %v3685 = vpack.c.b16 %v3670, %v3669
        %v3686 = vpack.c.b16 %v3672, %v3671
        %v3687 = vpack.c.b16 %v3674, %v3673
        %v3688 = vpack.c.b16 %v3676, %v3675
        %v3689 = vpack.c.b16 %v3678, %v3677
        %v3690 = vpack.c.b16 %v3680, %v3679
        %v3691 = vpack.c.b16 %v3682, %v3681
        %v3692 = vpack.c.b16 %v3684, %v3683
        %3693 = vrot.lane.b32.xlu0 %v3685, 8
        %v3694 = vpop.permute.xlu0 %3693
        %3695 = vrot.lane.b32.xlu0 %v3686, 8
        %v3696 = vpop.permute.xlu0 %3695
        %3697 = vrot.lane.b32.xlu0 %v3687, 8
        %v3698 = vpop.permute.xlu0 %3697
        %3699 = vrot.lane.b32.xlu0 %v3688, 8
        %v3700 = vpop.permute.xlu0 %3699
        %3701 = vrot.lane.b32.xlu0 %v3689, 8
        %v3702 = vpop.permute.xlu0 %3701
        %3703 = vrot.lane.b32.xlu0 %v3690, 8
        %v3704 = vpop.permute.xlu0 %3703
        %3705 = vrot.lane.b32.xlu0 %v3691, 8
        %v3706 = vpop.permute.xlu0 %3705
        %3707 = vrot.lane.b32.xlu0 %v3692, 8
        %v3708 = vpop.permute.xlu0 %3707
        %v3709 = vunpack.c.l.b16 %v3552
        %v3710 = vunpack.c.l.b16 %v3555
        %v3711 = vunpack.c.l.b16 %v3559
        %v3712 = vunpack.c.l.b16 %v3562
        %v3713 = vunpack.c.l.b16 %v3566
        %v3714 = vunpack.c.l.b16 %v3569
        %v3715 = vunpack.c.l.b16 %v3573
        %v3716 = vunpack.c.l.b16 %v3576
        %v3717 = vunpack.c.l.b16 %v3580
        %v3718 = vunpack.c.l.b16 %v3583
        %v3719 = vunpack.c.l.b16 %v3587
        %v3720 = vunpack.c.l.b16 %v3590
        %v3721 = vunpack.c.l.b16 %v3594
        %v3722 = vunpack.c.l.b16 %v3597
        %v3723 = vunpack.c.l.b16 %v3601
        %v3724 = vunpack.c.l.b16 %v3604
        %v3725 = vpack.c.b16 %v3710, %v3709
        %v3726 = vpack.c.b16 %v3712, %v3711
        %v3727 = vpack.c.b16 %v3714, %v3713
        %v3728 = vpack.c.b16 %v3716, %v3715
        %v3729 = vpack.c.b16 %v3718, %v3717
        %v3730 = vpack.c.b16 %v3720, %v3719
        %v3731 = vpack.c.b16 %v3722, %v3721
        %v3732 = vpack.c.b16 %v3724, %v3723
        %3733 = vrot.lane.b32.xlu0 %v3725, 12
        %v3734 = vpop.permute.xlu0 %3733
        %3735 = vrot.lane.b32.xlu0 %v3726, 12
        %v3736 = vpop.permute.xlu0 %3735
        %3737 = vrot.lane.b32.xlu0 %v3727, 12
        %v3738 = vpop.permute.xlu0 %3737
        %3739 = vrot.lane.b32.xlu0 %v3728, 12
        %v3740 = vpop.permute.xlu0 %3739
        %3741 = vrot.lane.b32.xlu0 %v3729, 12
        %v3742 = vpop.permute.xlu0 %3741
        %3743 = vrot.lane.b32.xlu0 %v3730, 12
        %v3744 = vpop.permute.xlu0 %3743
        %3745 = vrot.lane.b32.xlu0 %v3731, 12
        %v3746 = vpop.permute.xlu0 %3745
        %3747 = vrot.lane.b32.xlu0 %v3732, 12
        %v3748 = vpop.permute.xlu0 %3747
        %v3751 = vsel %vm845, %v3621, %v3654
        %v3754 = vsel %vm845, %v3622, %v3656
        %v3757 = vsel %vm845, %v3623, %v3658
        %v3760 = vsel %vm845, %v3624, %v3660
        %v3763 = vsel %vm845, %v3625, %v3662
        %v3766 = vsel %vm845, %v3626, %v3664
        %v3769 = vsel %vm845, %v3627, %v3666
        %v3772 = vsel %vm845, %v3628, %v3668
        %v3774 = vsel %vm870, %v3751, %v3694
        %v3776 = vsel %vm870, %v3754, %v3696
        %v3778 = vsel %vm870, %v3757, %v3698
        %v3780 = vsel %vm870, %v3760, %v3700
        %v3782 = vsel %vm870, %v3763, %v3702
        %v3784 = vsel %vm870, %v3766, %v3704
        %v3786 = vsel %vm870, %v3769, %v3706
        %v3788 = vsel %vm870, %v3772, %v3708
        %v3790 = vsel %vm887, %v3774, %v3734
        %v3792 = vsel %vm887, %v3776, %v3736
        %v3794 = vsel %vm887, %v3778, %v3738
        %v3796 = vsel %vm887, %v3780, %v3740
        %v3798 = vsel %vm887, %v3782, %v3742
        %v3800 = vsel %vm887, %v3784, %v3744
        %v3802 = vsel %vm887, %v3786, %v3746
        %v3804 = vsel %vm887, %v3788, %v3748
        %s3805 = scalar_lea.vmem %s219, 24
        %v3806 = vld [vmem:[%s3805] sm:$0xf]
        %v3807 = vld [vmem:[%s3805 + $0x4] sm:$0xf]
        %v3810 = vunpack.c.l.b16 %v3806
        %v3811 = vunpack.c.l.b16 %v3807
        %v3812 = vpack.c.b16 %v3811, %v3810
        %v3814 = vsel %vm918, %v3790, 0
        %v3816 = vsel %vm918, %v3792, 0
        %v3818 = vsel %vm918, %v3794, 0
        %v3820 = vsel %vm918, %v3796, 0
        %v3822 = vsel %vm918, %v3798, 0
        %v3824 = vsel %vm918, %v3800, 0
        %v3826 = vsel %vm918, %v3802, 0
        %v3828 = vsel %vm918, %v3804, 0
        %3830 = vmatprep.subr.bf16.mxu0 0
        %3831 = vmatpush1.bf16.msra.mxu0 %v3812
        %3832 = vmatprep.subr.bf16.mxu0 0
        %3833 = vmatpush1.bf16.msra.mxu0 0
        %3834 = vmatprep.subr.bf16.mxu0 0
        %3835 = vmatpush1.bf16.msra.mxu0 0
        %3836 = vmatprep.subr.bf16.mxu0 0
        %3837 = vmatpush1.bf16.msra.mxu0 0
        %3838 = vmatprep.subr.bf16.mxu0 0
        %3839 = vmatpush1.bf16.msra.mxu0 0
        %3840 = vmatprep.subr.bf16.mxu0 0
        %3841 = vmatpush1.bf16.msra.mxu0 0
        %3842 = vmatprep.subr.bf16.mxu0 0
        %3843 = vmatpush1.bf16.msra.mxu0 0
        %3844 = vmatprep.subr.bf16.mxu0 0
        %3845 = vmatpush1.bf16.msra.mxu0 0
        %3846 = vmatprep.subr.bf16.mxu0 0
        %3847 = vmatpush1.bf16.msra.mxu0 0
        %3848 = vmatprep.subr.bf16.mxu0 0
        %3849 = vmatpush1.bf16.msra.mxu0 0
        %3850 = vmatprep.subr.bf16.mxu0 0
        %3851 = vmatpush1.bf16.msra.mxu0 0
        %3852 = vmatprep.subr.bf16.mxu0 0
        %3853 = vmatpush1.bf16.msra.mxu0 0
        %3854 = vmatprep.subr.bf16.mxu0 0
        %3855 = vmatpush1.bf16.msra.mxu0 0
        %3856 = vmatprep.subr.bf16.mxu0 0
        %3857 = vmatpush1.bf16.msra.mxu0 0
        %3858 = vmatprep.subr.bf16.mxu0 0
        %3859 = vmatpush1.bf16.msra.mxu0 0
        %3860 = vmatprep.subr.bf16.mxu0 0
        %3861 = vmatpush1.bf16.msra.mxu0 0
        %3862 = vmatprep.mubr.bf16.mxu0 0
        %3863 = vmatmul.mubr.bf16.gmra.mrb[0].mxu0 %v3814
        %v3864 = vpop.f32.mrb[0].mxu0
        %v3865 = vadd.f32 %v910, %v3864
        %v3866 = vpop.f32.mrb[0].mxu0
        %v3867 = vpop.f32.mrb[0].mxu0
        %v3868 = vadd.f32 %v910, %v3867
        %v3869 = vpop.f32.mrb[0].mxu0
        %3870 = vmatprep.mubr.bf16.mxu0 0
        %3871 = vmatmul.mubr.bf16.gmra.mrb[0].mxu0 %v3816
        %v3872 = vpop.f32.mrb[0].mxu0
        %v3873 = vadd.f32 %v910, %v3872
        %v3874 = vpop.f32.mrb[0].mxu0
        %v3875 = vpop.f32.mrb[0].mxu0
        %v3876 = vadd.f32 %v910, %v3875
        %v3877 = vpop.f32.mrb[0].mxu0
        %3878 = vmatprep.mubr.bf16.mxu0 0
        %3879 = vmatmul.mubr.bf16.gmra.mrb[0].mxu0 %v3818
        %v3880 = vpop.f32.mrb[0].mxu0
        %v3881 = vadd.f32 %v910, %v3880
        %v3882 = vpop.f32.mrb[0].mxu0
        %v3883 = vpop.f32.mrb[0].mxu0
        %v3884 = vadd.f32 %v910, %v3883
        %v3885 = vpop.f32.mrb[0].mxu0
        %3886 = vmatprep.mubr.bf16.mxu0 0
        %3887 = vmatmul.mubr.bf16.gmra.mrb[0].mxu0 %v3820
        %v3888 = vpop.f32.mrb[0].mxu0
        %v3889 = vadd.f32 %v910, %v3888
        %v3890 = vpop.f32.mrb[0].mxu0
        %v3891 = vpop.f32.mrb[0].mxu0
        %v3892 = vadd.f32 %v910, %v3891
        %v3893 = vpop.f32.mrb[0].mxu0
        %3894 = vmatprep.mubr.bf16.mxu0 0
        %3895 = vmatmul.mubr.bf16.gmra.mrb[0].mxu0 %v3822
        %v3896 = vpop.f32.mrb[0].mxu0
        %v3897 = vadd.f32 %v910, %v3896
        %v3898 = vpop.f32.mrb[0].mxu0
        %v3899 = vpop.f32.mrb[0].mxu0
        %v3900 = vadd.f32 %v910, %v3899
        %v3901 = vpop.f32.mrb[0].mxu0
        %3902 = vmatprep.mubr.bf16.mxu0 0
        %3903 = vmatmul.mubr.bf16.gmra.mrb[0].mxu0 %v3824
        %v3904 = vpop.f32.mrb[0].mxu0
        %v3905 = vadd.f32 %v910, %v3904
        %v3906 = vpop.f32.mrb[0].mxu0
        %v3907 = vpop.f32.mrb[0].mxu0
        %v3908 = vadd.f32 %v910, %v3907
        %v3909 = vpop.f32.mrb[0].mxu0
        %3910 = vmatprep.mubr.bf16.mxu0 0
        %3911 = vmatmul.mubr.bf16.gmra.mrb[0].mxu0 %v3826
        %v3912 = vpop.f32.mrb[0].mxu0
        %v3913 = vadd.f32 %v910, %v3912
        %v3914 = vpop.f32.mrb[0].mxu0
        %v3915 = vpop.f32.mrb[0].mxu0
        %v3916 = vadd.f32 %v910, %v3915
        %v3917 = vpop.f32.mrb[0].mxu0
        %3918 = vmatprep.mubr.bf16.mxu0 0
        %3919 = vmatmul.mubr.bf16.gmra.mrb[0].mxu0 %v3828
        %v3920 = vpop.f32.mrb[0].mxu0
        %v3921 = vadd.f32 %v910, %v3920
        %v3922 = vpop.f32.mrb[0].mxu0
        %v3923 = vpop.f32.mrb[0].mxu0
        %v3924 = vadd.f32 %v910, %v3923
        %v3925 = vpop.f32.mrb[0].mxu0
        %3926 = vdwg.mxu0
        %v3927 = vpack.c.bf16 %v3868, %v3865
        %v3928 = vpack.c.bf16 %v3876, %v3873
        %v3929 = vpack.c.bf16 %v3884, %v3881
        %v3930 = vpack.c.bf16 %v3892, %v3889
        %v3931 = vpack.c.bf16 %v3900, %v3897
        %v3932 = vpack.c.bf16 %v3908, %v3905
        %v3933 = vpack.c.bf16 %v3916, %v3913
        %v3934 = vpack.c.bf16 %v3924, %v3921
        %v3943 = vunpack.c.l.b16 %v3927
        %v3944 = vunpack.c.h.b16 %v3927
        %v3945 = vunpack.c.l.b16 %v3928
        %v3946 = vunpack.c.h.b16 %v3928
        %v3947 = vunpack.c.l.b16 %v3929
        %v3948 = vunpack.c.h.b16 %v3929
        %v3949 = vunpack.c.l.b16 %v3930
        %v3950 = vunpack.c.h.b16 %v3930
        %v3951 = vunpack.c.l.b16 %v3931
        %v3952 = vunpack.c.h.b16 %v3931
        %v3953 = vunpack.c.l.b16 %v3932
        %v3954 = vunpack.c.h.b16 %v3932
        %v3955 = vunpack.c.l.b16 %v3933
        %v3956 = vunpack.c.h.b16 %v3933
        %v3957 = vunpack.c.l.b16 %v3934
        %v3958 = vunpack.c.h.b16 %v3934
        %v3959 = vpack.c.b16 %v3943, %v3943
        %v3960 = vpack.c.b16 %v3944, %v3944
        %v3961 = vpack.c.b16 %v3945, %v3945
        %v3962 = vpack.c.b16 %v3946, %v3946
        %v3963 = vpack.c.b16 %v3947, %v3947
        %v3964 = vpack.c.b16 %v3948, %v3948
        %v3965 = vpack.c.b16 %v3949, %v3949
        %v3966 = vpack.c.b16 %v3950, %v3950
        %v3967 = vpack.c.b16 %v3951, %v3951
        %v3968 = vpack.c.b16 %v3952, %v3952
        %v3969 = vpack.c.b16 %v3953, %v3953
        %v3970 = vpack.c.b16 %v3954, %v3954
        %v3971 = vpack.c.b16 %v3955, %v3955
        %v3972 = vpack.c.b16 %v3956, %v3956
        %v3973 = vpack.c.b16 %v3957, %v3957
        %v3974 = vpack.c.b16 %v3958, %v3958
        %s3991 = scalar_lea.vmem %s210, 192 [#allocation2]
        %3992 = vst [vmem:[%s3991] sm:$0xf] %v3959
        %3993 = vst [vmem:[%s3991 + $0x4] sm:$0xf] %v3960
        %3994 = vst [vmem:[%s3991 + $0x8] sm:$0xf] %v3961
        %3995 = vst [vmem:[%s3991 + $0xc] sm:$0xf] %v3962
        %3996 = vst [vmem:[%s3991 + $0x10] sm:$0xf] %v3963
        %3997 = vst [vmem:[%s3991 + $0x14] sm:$0xf] %v3964
        %3998 = vst [vmem:[%s3991 + $0x18] sm:$0xf] %v3965
        %3999 = vst [vmem:[%s3991 + $0x1c] sm:$0xf] %v3966
        %4000 = vst [vmem:[%s3991 + $0x20] sm:$0xf] %v3967
        %4001 = vst [vmem:[%s3991 + $0x24] sm:$0xf] %v3968
        %4002 = vst [vmem:[%s3991 + $0x28] sm:$0xf] %v3969
        %4003 = vst [vmem:[%s3991 + $0x2c] sm:$0xf] %v3970
        %4004 = vst [vmem:[%s3991 + $0x30] sm:$0xf] %v3971
        %4005 = vst [vmem:[%s3991 + $0x34] sm:$0xf] %v3972
        %4006 = vst [vmem:[%s3991 + $0x38] sm:$0xf] %v3973
        %4007 = vst [vmem:[%s3991 + $0x3c] sm:$0xf] %v3974
        %s4008 = sand.u32 %s126, 1
        %s4009 = scalar_lea.sflag [#allocation3], %s4008
        %s4010 = sand.u32 %s126, 1
        %s4011 = smul.addr %s4010, 256
        %s4012 = scalar_lea.vmem [#allocation2], %s4011
        // Predicated region
        $region33: #{tpu_custom_call.1} parent=31 // pred_check
          %p4013 = pneg %p136
        $region34: #{tpu_custom_call.1} parent=31 // pred_check_branch
          %4015 = sbr.rel (%p4013) target = $region36
        $region35: #{tpu_custom_call.1} parent=31 // pred_region
          #allocation5 [shape = 'u32[6]{0}', space=smem, size = 0x18, scoped, tag = 'DMA stride descriptor']
          %s4016 = smul.u32 16, %s24
          %s4018 = ssub.s32 4096, 4096
          %4019 = vsyncadd %s4009, %s4018
          %s4020 = sadd.s32 %s22, %s4016
          %s4021 = smul.addr %s23, 128
          %s4022 = sadd.s32 %s4020, %s4021
          %s4023 = smul.addr %s4022, 64
          %s4024 = scalar_lea.hbm %s3, %s4023
          %s4026 = sshll.u32 1, 14
          %s4027 = sxor.u32 4294967295, %s4026
          %s4030 = sshll.u32 7, 18
          %s4031 = sxor.u32 4294967295, %s4030
          %s4032 = sand.u32 0, %s4031
          %s4034 = sor.u32 %s4032, 0
          %s4036 = sshll.u32 3, 24
          %s4037 = sxor.u32 4294967295, %s4036
          %s4038 = sand.u32 %s4034, %s4037
          %s4040 = sor.u32 %s4038, 0
          %s4041 = sshll.u32 %s4012, 4
          %s4042 = int_to_ptr.vmem [resolvable:$true] %s4041
          %4048 = sst [smem:[#allocation5]] 1024
          %s4049 = scalar_lea.smem [#allocation5], 1
          %4050 = sst [smem:[%s4049]] 2048
          %s4051 = scalar_lea.smem [#allocation5], 2
          %4052 = sst [smem:[%s4051]] 16
          %s4053 = scalar_lea.smem [#allocation5], 3
          %4054 = sst [smem:[%s4053]] 64
          %s4055 = scalar_lea.smem [#allocation5], 4
          %4056 = sst [smem:[%s4055]] 64
          %s4057 = scalar_lea.smem [#allocation5], 5
          %4058 = sst [smem:[%s4057]] 4
          %4060 = dma.general %s4042, 4096, %s4024, %s4009, [#allocation4], [#allocation5], %s4040, 0
        $region36: #{tpu_custom_call.1} parent=31 // pred_fallthru
          _
      $region32: #{tpu_custom_call.1} parent=5 // pred_fallthru
        _
      %p4061 = scmp.le.s32.totalorder 2, %s12
      // Predicated region
      $region37: #{tpu_custom_call.1} parent=5 // pred_check
        %p4062 = pneg %p4061
      $region38: #{tpu_custom_call.1} parent=5 // pred_check_branch
        %4064 = sbr.rel (%p4062) target = $region40
      $region39: #{tpu_custom_call.1} parent=5 // pred_region
        %s4065 = ssub.s32 %s12, 2
        // Predicated region
        $region41: #{tpu_custom_call.1} parent=39 // pred_check
          %p4066 = pneg %p142
        $region42: #{tpu_custom_call.1} parent=39 // pred_check_branch
          %4068 = sbr.rel (%p4066) target = $region44
        $region43: #{tpu_custom_call.1} parent=39 // pred_region
          %s4069 = sand.u32 %s127, 1
          %s4070 = scalar_lea.sflag [#allocation3], %s4069
          %s4071 = sand.u32 %s127, 1
          %s4072 = smul.addr %s4071, 256
          %s4073 = scalar_lea.vmem [#allocation2], %s4072
          %4074 = dma.done %s4070, 4096
        $region44: #{tpu_custom_call.1} parent=39 // pred_fallthru
          _
      $region40: #{tpu_custom_call.1} parent=5 // pred_fallthru
        _
    $region6: #{tpu_custom_call.1} parent=1 // loop_footer
      %s16 = sadd.s32 1, %s12
    $region7: #{tpu_custom_call.1} parent=1 // loop_footer_branch
      %11 = sbr.rel target = $region3
    $region8: #{tpu_custom_call.1} parent=1 // loop_exit
      _
    %4075 = vsyncpa [#allocation3], 1
    %s4076 = scalar_lea.sflag [#allocation3], 1
    %4077 = vsyncpa %s4076, 1

</llo_original>
